<compile_context>
chip_gen: v7x
topology: tpu7x:2x2x1
jax: 0.10.0
libtpu: 0.0.40
codegen_flags: <defaults>
</compile_context>

<pallas_src>
import math

import jax
import jax.numpy as jnp
from jax.experimental import pallas as pl
from jax.experimental.pallas import tpu as pltpu

_VMEM_LIMIT = 48 * 1024 * 1024   # below v7x's 64 MiB physical VMEM, above default scoped
_STACK_MAX = 256                 # stack K taps into one contraction while K*Cin <= this
                                 # (128 may be preferable on v5e's 4x128^2 MXU)


# ----------------------------------------------------------------------------
# Helpers: tile size, halo columns, global InstanceNorm statistics
# ----------------------------------------------------------------------------
def _pick_tile(L, max_t=512):
    if L <= max_t:
        return L
    for t in range(max_t, 127, -128):           # 512, 384, 256, 128
        if L % t == 0:
            return t
    # TODO(synk): lengths > 512 not divisible by 128 fall back to one tile per batch elem.
    return L


def _make_halo(x, tL, nL):
    """Left/right conv halo columns per L-tile (zeros at the sequence boundary).
    x: (B, C, L) -> (B*nL, C, 2), same dtype.  Tiny strided slices only (no full pad copy)."""
    B, C, L = x.shape
    zero = jnp.zeros((B, C, 1), x.dtype)
    left = jnp.concatenate([zero, x[:, :, tL - 1:L - 1:tL]], axis=2)     # (B, C, nL)
    right = jnp.concatenate([x[:, :, tL::tL], zero], axis=2)             # (B, C, nL)
    halo = jnp.stack([left, right], axis=-1)                             # (B, C, nL, 2)
    return halo.transpose(0, 2, 1, 3).reshape(B * nL, C, 2)


def _inorm_stats(x, eps=1e-5):
    """Global per-(batch, channel) InstanceNorm stats -> (B, C, 2) f32 [mean, rstd]."""
    xf = x.astype(jnp.float32)
    m = jnp.mean(xf, axis=-1)
    ms = jnp.mean(xf * xf, axis=-1)
    var = jnp.maximum(ms - m * m, 0.0)
    rstd = jax.lax.rsqrt(var + eps)
    return jnp.stack([m, rstd], axis=-1)


# ----------------------------------------------------------------------------
# Fused InstanceNorm + activation + Conv1d(k=3,p=1) kernel, with optional fused
# shortcut Conv1d(k=1) second output and optional fused residual add.
# ----------------------------------------------------------------------------
def _make_conv3_kernel(*, Cin, tL, norm, act, has_sc, has_res, stacked):
    def kernel(*refs):
        it = iter(refs)
        x_ref = next(it)
        halo_ref = next(it)
        st_ref = next(it) if norm else None
        w_ref = next(it)
        b_ref = next(it)
        wsc_ref = bsc_ref = None
        if has_sc:
            wsc_ref = next(it)
            bsc_ref = next(it)
        r_ref = next(it) if has_res else None
        o_ref = next(it)
        osc_ref = next(it) if has_sc else None

        x = x_ref[0]                                  # (Cin, tL) bf16
        hl = halo_ref[0]                              # (Cin, 2)  bf16
        if norm or act is not None:
            xf = x.astype(jnp.float32)
            hf = hl.astype(jnp.float32)
            if norm:                                  # InstanceNorm1d, global stats
                mean = st_ref[0][:, 0:1]
                rstd = st_ref[0][:, 1:2]
                xf = (xf - mean) * rstd
                hf = (hf - mean) * rstd
            if act == "silu":
                xf = xf * jax.nn.sigmoid(xf)
                hf = hf * jax.nn.sigmoid(hf)
            elif act == "tanh":
                xf = jnp.tanh(xf)
                hf = jnp.tanh(hf)
            a = xf.astype(jnp.bfloat16)
            hl = hf.astype(jnp.bfloat16)
        else:
            a = x

        left = hl[:, 0:1]
        right = hl[:, 1:2]
        # padded windows x_pad[:, k:k+tL] for k = 0, 1, 2 (pad = 1 on each side)
        w_lo = jnp.concatenate([left, a[:, :tL - 1]], axis=1)
        w_hi = jnp.concatenate([a[:, 1:], right], axis=1)

        if stacked:
            z = jnp.concatenate([w_lo, a, w_hi], axis=0)            # (3*Cin, tL)
            acc = jnp.dot(w_ref[...], z, preferred_element_type=jnp.float32)
        else:
            acc = jnp.dot(w_ref[:, 0:Cin], w_lo, preferred_element_type=jnp.float32)
            acc = acc + jnp.dot(w_ref[:, Cin:2 * Cin], a, preferred_element_type=jnp.float32)
            acc = acc + jnp.dot(w_ref[:, 2 * Cin:3 * Cin], w_hi,
                                preferred_element_type=jnp.float32)
        acc = acc + b_ref[...]
        if has_res:
            acc = acc + r_ref[0].astype(jnp.float32)
        o_ref[0] = acc.astype(o_ref.dtype)

        if has_sc:
            sc = jnp.dot(wsc_ref[...], a, preferred_element_type=jnp.float32) + bsc_ref[...]
            osc_ref[0] = sc.astype(osc_ref.dtype)

    return kernel


def _conv3_block(x, w, b, *, norm, act, sc=None, res=None, out_dtype=jnp.bfloat16, eps=1e-5):
    """x: (B, Cin, L) bf16; w: (Cout, 3*Cin) bf16 (w[co, k*Cin+ci] == torch_w[co, ci, k]);
       b: (Cout, 1) f32; sc=(wsc (Csc,Cin) bf16, bsc (Csc,1) f32) adds a fused 1x1-conv
       second output; res: (B, Cout, L) bf16 added to the conv output."""
    B, Cin, L = x.shape
    Cout = w.shape[0]
    tL = _pick_tile(L)
    nL = L // tL
    stacked = (3 * Cin) <= _STACK_MAX
    has_sc = sc is not None
    has_res = res is not None

    wspec = lambda shape: pl.BlockSpec(shape, lambda bi, j: (0, 0),
                                       pipeline_mode=pl.Buffered(1))
    inputs = [x, _make_halo(x, tL, nL)]
    in_specs = [
        pl.BlockSpec((1, Cin, tL), lambda bi, j: (bi, 0, j)),
        pl.BlockSpec((1, Cin, 2), lambda bi, j: (bi * nL + j, 0, 0)),
    ]
    if norm:
        inputs.append(_inorm_stats(x, eps))
        in_specs.append(pl.BlockSpec((1, Cin, 2), lambda bi, j: (bi, 0, 0)))
    inputs += [w, b]
    in_specs += [wspec((Cout, 3 * Cin)), wspec((Cout, 1))]
    if has_sc:
        wsc, bsc = sc
        Csc = wsc.shape[0]
        inputs += [wsc, bsc]
        in_specs += [wspec((Csc, Cin)), wspec((Csc, 1))]
    if has_res:
        inputs.append(res)
        in_specs.append(pl.BlockSpec((1, Cout, tL), lambda bi, j: (bi, 0, j)))

    out_shape = jax.ShapeDtypeStruct((B, Cout, L), out_dtype)
    out_specs = pl.BlockSpec((1, Cout, tL), lambda bi, j: (bi, 0, j))
    if has_sc:
        out_shape = (out_shape, jax.ShapeDtypeStruct((B, Csc, L), jnp.bfloat16))
        out_specs = (out_specs, pl.BlockSpec((1, Csc, tL), lambda bi, j: (bi, 0, j)))

    kernel = _make_conv3_kernel(Cin=Cin, tL=tL, norm=norm, act=act,
                                has_sc=has_sc, has_res=has_res, stacked=stacked)
    return pl.pallas_call(
        kernel,
        out_shape=out_shape,
        grid=(B, nL),
        in_specs=in_specs,
        out_specs=out_specs,
        compiler_params=pltpu.CompilerParams(
            dimension_semantics=("parallel", "parallel"),
            vmem_limit_bytes=_VMEM_LIMIT),
    )(*inputs)


# ----------------------------------------------------------------------------
# ConvTranspose1d(kernel=4, stride=4): one matmul per (batch, L-tile)
# ----------------------------------------------------------------------------
def _convt_kernel(x_ref, w_ref, b_ref, o_ref):
    z = jnp.dot(w_ref[...], x_ref[0], preferred_element_type=jnp.float32)   # (Cout*K, tL)
    o_ref[0] = (z + b_ref[...]).astype(o_ref.dtype)


def _upsample(x, w, b, K=4):
    """x: (B, Cin, L) bf16; w: (Cout*K, Cin) bf16 with row co*K+k == torch_w[:, co, k];
       b: (Cout*K, 1) f32 (per-channel bias repeated per tap).  Returns (B, Cout, K*L) bf16."""
    B, Cin, L = x.shape
    CoutK = w.shape[0]
    Cout = CoutK // K
    tL = _pick_tile(L)
    nL = L // tL
    wspec = lambda shape: pl.BlockSpec(shape, lambda bi, j: (0, 0),
                                       pipeline_mode=pl.Buffered(1))
    z = pl.pallas_call(
        _convt_kernel,
        out_shape=jax.ShapeDtypeStruct((B, CoutK, L), jnp.bfloat16),
        grid=(B, nL),
        in_specs=[
            pl.BlockSpec((1, Cin, tL), lambda bi, j: (bi, 0, j)),
            wspec((CoutK, Cin)),
            wspec((CoutK, 1)),
        ],
        out_specs=pl.BlockSpec((1, CoutK, tL), lambda bi, j: (bi, 0, j)),
        compiler_params=pltpu.CompilerParams(
            dimension_semantics=("parallel", "parallel"),
            vmem_limit_bytes=_VMEM_LIMIT),
    )(x, w, b)
    # TODO(synk): stride-4 tap interleave out[b,co,4t+k] = z[b,co*4+k,t] kept as bf16 XLA
    # reshape/transpose glue; an in-kernel lane-strided store would remove this HBM pass.
    return z.reshape(B, Cout, K, L).transpose(0, 1, 3, 2).reshape(B, Cout, K * L)


# ----------------------------------------------------------------------------
# DecoderLayer (synthetic attention block), residual + transposes fused in-kernel
# ----------------------------------------------------------------------------
def _make_attn_kernel(*, L, Dk, tk, nk, eps=1e-5):
    scale = 1.0 / math.sqrt(float(Dk))

    def _ln(h):
        m = jnp.mean(h, axis=-1, keepdims=True)
        v = jnp.mean(jnp.square(h - m), axis=-1, keepdims=True)
        return (h - m) * jax.lax.rsqrt(v + eps)

    def kernel(x_ref, wq_ref, wk_ref, wv_ref, wo_ref, w1_ref, w2_ref, o_ref, *scratch):
        x_cl = x_ref[0].astype(jnp.float32)                       # (C, L)
        xt = x_cl.T                                               # (L, C)
        xb = xt.astype(jnp.bfloat16)
        q = jnp.dot(xb, wq_ref[...], preferred_element_type=jnp.float32) * scale
        k = jnp.dot(xb, wk_ref[...], preferred_element_type=jnp.float32)
        v = jnp.dot(xb, wv_ref[...], preferred_element_type=jnp.float32)
        qb = q.astype(jnp.bfloat16)

        if nk == 1:
            kb = k.astype(jnp.bfloat16)
            vb = v.astype(jnp.bfloat16)
            s = jax.lax.dot_general(qb, kb, (((1,), (1,)), ((), ())),
                                    preferred_element_type=jnp.float32)     # (L, L<=512)
            m = jnp.max(s, axis=-1, keepdims=True)
            p = jnp.exp(s - m)
            l = jnp.sum(p, axis=-1, keepdims=True)
            # NOTE: approx reciprocal deviates slightly from an exact softmax denominator.
            a = jnp.dot(p.astype(jnp.bfloat16), vb,
                        preferred_element_type=jnp.float32) * pl.reciprocal(l, approx=True)
        else:
            k_s, v_s = scratch
            pad = nk * tk - L
            if pad:
                zpad = jnp.zeros((pad, Dk), jnp.float32)
                k = jnp.concatenate([k, zpad], axis=0)
                v = jnp.concatenate([v, zpad], axis=0)
            k_s[...] = k.astype(jnp.bfloat16)
            v_s[...] = v.astype(jnp.bfloat16)
            col = jax.lax.broadcasted_iota(jnp.int32, (1, tk), 1)

            def body(c, carry):
                m_i, l_i, acc = carry
                start = pl.multiple_of(c * tk, tk)
                kc = k_s[pl.ds(start, tk), :]
                vc = v_s[pl.ds(start, tk), :]
                s = jax.lax.dot_general(qb, kc, (((1,), (1,)), ((), ())),
                                        preferred_element_type=jnp.float32)  # (L, tk)
                s = jnp.where(col + c * tk < L, s, -1e30)
                m_new = jnp.maximum(m_i, jnp.max(s, axis=-1, keepdims=True))
                alpha = jnp.exp(m_i - m_new)
                p = jnp.exp(s - m_new)
                l_new = alpha * l_i + jnp.sum(p, axis=-1, keepdims=True)
                acc_new = alpha * acc + jnp.dot(p.astype(jnp.bfloat16), vc,
                                                preferred_element_type=jnp.float32)
                return m_new, l_new, acc_new

            init = (jnp.full((L, 1), -1e30, jnp.float32),
                    jnp.zeros((L, 1), jnp.float32),
                    jnp.zeros((L, Dk), jnp.float32))
            _, l_i, acc = jax.lax.fori_loop(0, nk, body, init, unroll=(nk <= 8))
            a = acc * pl.reciprocal(l_i, approx=True)

        attn = jnp.dot(a.astype(jnp.bfloat16), wo_ref[...],
                       preferred_element_type=jnp.float32)
        h1 = _ln(xt + attn)
        f = jnp.dot(h1.astype(jnp.bfloat16), w1_ref[...],
                    preferred_element_type=jnp.float32)                      # (L, Fp)
        f = f * jax.nn.sigmoid(f)
        f = jnp.dot(f.astype(jnp.bfloat16), w2_ref[...],
                    preferred_element_type=jnp.float32)
        y = _ln(h1 + f)                                                      # (L, C)
        o_ref[0] = (x_cl + y.T).astype(o_ref.dtype)                          # outer residual

    return kernel


def _attention_block(h, p):
    """h: (B, C, L) bf16.  Returns h + DecoderLayer(h^T)[0]^T as (B, C, L) bf16."""
    B, C, L = h.shape
    Dk = p["wq"].shape[1]
    Fp = p["w1"].shape[1]
    tk = min(512, L)
    nk = -(-L // tk)
    kernel = _make_attn_kernel(L=L, Dk=Dk, tk=tk, nk=nk)
    scratch = []
    if nk > 1:
        scratch = [pltpu.VMEM((nk * tk, Dk), jnp.bfloat16),
                   pltpu.VMEM((nk * tk, Dk), jnp.bfloat16)]
    wspec = lambda shape: pl.BlockSpec(shape, lambda bi: (0, 0),
                                       pipeline_mode=pl.Buffered(1))
    return pl.pallas_call(
        kernel,
        out_shape=jax.ShapeDtypeStruct((B, C, L), jnp.bfloat16),
        grid=(B,),
        in_specs=[pl.BlockSpec((1, C, L), lambda bi: (bi, 0, 0)),
                  wspec((C, Dk)), wspec((C, Dk)), wspec((C, Dk)),
                  wspec((Dk, C)), wspec((C, Fp)), wspec((Fp, C))],
        out_specs=pl.BlockSpec((1, C, L), lambda bi: (bi, 0, 0)),
        scratch_shapes=tuple(scratch),
        compiler_params=pltpu.CompilerParams(
            dimension_semantics=("parallel",),
            vmem_limit_bytes=_VMEM_LIMIT),
    )(h, p["wq"], p["wk"], p["wv"], p["wo"], p["w1"], p["w2"])


# ----------------------------------------------------------------------------
# Parameter init (deterministic, synthetic) and the full Decoder1d forward
# ----------------------------------------------------------------------------
def init_params(key, out_channels, base_channels, num_layers, latent_size):
    C = base_channels * 2 ** num_layers
    keys = iter(jax.random.split(key, 64))

    def conv_w(cin, cout, k):
        w = jax.random.normal(next(keys), (cout, cin, k), jnp.float32) / math.sqrt(cin * k)
        return jnp.transpose(w, (0, 2, 1)).reshape(cout, k * cin).astype(jnp.bfloat16)

    def bias(cout):
        return jax.random.normal(next(keys), (cout, 1), jnp.float32) * 0.01

    def lin(cin, cout):
        w = jax.random.normal(next(keys), (cin, cout), jnp.float32) / math.sqrt(cin)
        return w.astype(jnp.bfloat16)

    params = {"latent_w": conv_w(latent_size, C, 3), "latent_b": bias(C)}

    # Synthetic DecoderLayer weights; FFN width zero-padded to a 128 multiple.
    Dk = 128
    F = C * 8 // 3
    Fp = max(128, ((F + 127) // 128) * 128)
    w1 = jax.random.normal(next(keys), (C, F), jnp.float32) / math.sqrt(C)
    w2 = jax.random.normal(next(keys), (F, C), jnp.float32) / math.sqrt(F)
    params["attn"] = dict(
        wq=lin(C, Dk), wk=lin(C, Dk), wv=lin(C, Dk), wo=lin(Dk, C),
        w1=jnp.pad(w1, ((0, 0), (0, Fp - F))).astype(jnp.bfloat16),
        w2=jnp.pad(w2, ((0, Fp - F), (0, 0))).astype(jnp.bfloat16))

    layers = []
    for i in range(num_layers, 0, -1):
        cin = base_channels * 2 ** i
        cout = base_channels * 2 ** (i - 1)
        wt = jax.random.normal(next(keys), (cout, 4, cin), jnp.float32) / math.sqrt(cin)
        bt = jax.random.normal(next(keys), (cout,), jnp.float32) * 0.01
        layers.append(dict(
            up_w=wt.reshape(cout * 4, cin).astype(jnp.bfloat16),
            up_b=jnp.repeat(bt, 4).reshape(cout * 4, 1),
            sc_w=conv_w(cout, cout, 1), sc_b=bias(cout),
            c1_w=conv_w(cout, cout, 3), c1_b=bias(cout),
            c2_w=conv_w(cout, cout, 3), c2_b=bias(cout)))
    params["layers"] = layers

    params["out_w"] = conv_w(base_channels, out_channels, 3)
    params["out_b"] = bias(out_channels)
    return params


def decoder1d_forward(x, params):
    # x: (B, latent_size, L)
    h = x.astype(jnp.bfloat16)
    # conv_latent_in
    h = _conv3_block(h, params["latent_w"], params["latent_b"], norm=False, act=None)
    # x = x + attention(x^T)[0]^T  (residual + transposes fused in the kernel)
    h = _attention_block(h, params["attn"])
    for lp in params["layers"]:
        # UpBlock: ConvTranspose1d(k=4, s=4) then Residual
        u = _upsample(h, lp["up_w"], lp["up_b"], K=4)
        # Residual: shortcut (1x1) and conv1 (3x1) share one InstanceNorm+SiLU pass
        y, res = _conv3_block(u, lp["c1_w"], lp["c1_b"], norm=True, act="silu",
                              sc=(lp["sc_w"], lp["sc_b"]))
        # conv2 with the residual add fused in:  h = res + conv2(y)
        h = _conv3_block(y, lp["c2_w"], lp["c2_b"], norm=True, act="silu", res=res)
    # norm_out + Tanh (nonlinear_out was overwritten to Tanh in __init__) + conv_out
    return _conv3_block(h, params["out_w"], params["out_b"], norm=True, act="tanh",
                        out_dtype=jnp.float32)


if __name__ == "__main__":
    out_channels, base_channels, num_layers, latent_size = 2, 4, 2, 8
    B, L = 2, 8

    key = jax.random.PRNGKey(0)
    pkey, xkey = jax.random.split(key)
    params = init_params(pkey, out_channels, base_channels, num_layers, latent_size)
    x = jax.random.normal(xkey, (B, latent_size, L), jnp.float32)

    y = jax.jit(decoder1d_forward)(x, params)
    jax.block_until_ready(y)
    assert y.shape == (B, out_channels, L * 4 ** num_layers), y.shape
    assert bool(jnp.all(jnp.isfinite(y)))
    print("KERNEL_OK")
</pallas_src>

<mosaic_0001>
module attributes {stable_mosaic.version = 11 : i64} {
  func.func @kernel(%arg0: i32, %arg1: i32, %arg2: memref<1x8x8xbf16, #tpu.memory_space<vmem>>, %arg3: memref<1x8x2xbf16, #tpu.memory_space<vmem>>, %arg4: memref<16x24xbf16, #tpu.memory_space<vmem>>, %arg5: memref<16x1xf32, #tpu.memory_space<vmem>>, %arg6: memref<1x16x8xbf16, #tpu.memory_space<vmem>>) attributes {dimension_semantics = [#tpu.dimension_semantics<parallel>, #tpu.dimension_semantics<parallel>], iteration_bounds = array<i64: 2, 1>, scalar_prefetch = 0 : i64, scratch_operands = 0 : i64, tpu.core_type = #tpu.core_type<tc>, window_params = [{transform_indices = @transform_0, window_bounds = array<i64: 1, 8, 8>}, {transform_indices = @transform_1, window_bounds = array<i64: 1, 8, 2>}, {pipeline_mode = #tpu.pipeline_mode<synchronous>, transform_indices = @transform_2, window_bounds = array<i64: 16, 24>}, {pipeline_mode = #tpu.pipeline_mode<synchronous>, transform_indices = @transform_3, window_bounds = array<i64: 16, 1>}, {transform_indices = @transform_4, window_bounds = array<i64: 1, 16, 8>}]} {
    %c0 = arith.constant 0 : index
    %c0_0 = arith.constant 0 : index
    %c0_1 = arith.constant 0 : index
    %0 = vector.load %arg2[%c0, %c0_0, %c0_1] : memref<1x8x8xbf16, #tpu.memory_space<vmem>>, vector<1x8x8xbf16>
    %1 = vector.shape_cast %0 : vector<1x8x8xbf16> to vector<8x8xbf16>
    %c0_2 = arith.constant 0 : index
    %c0_3 = arith.constant 0 : index
    %c0_4 = arith.constant 0 : index
    %2 = vector.load %arg3[%c0_2, %c0_3, %c0_4] : memref<1x8x2xbf16, #tpu.memory_space<vmem>>, vector<1x8x2xbf16>
    %3 = vector.shape_cast %2 : vector<1x8x2xbf16> to vector<8x2xbf16>
    %4 = vector.extract_strided_slice %3 {offsets = [0, 0], sizes = [8, 1], strides = [1, 1]} : vector<8x2xbf16> to vector<8x1xbf16>
    %5 = vector.extract_strided_slice %3 {offsets = [0, 1], sizes = [8, 1], strides = [1, 1]} : vector<8x2xbf16> to vector<8x1xbf16>
    %6 = vector.extract_strided_slice %1 {offsets = [0, 0], sizes = [8, 7], strides = [1, 1]} : vector<8x8xbf16> to vector<8x7xbf16>
    %7 = tpu.concatenate %4, %6 in 1 : vector<8x1xbf16>, vector<8x7xbf16> -> vector<8x8xbf16>
    %8 = vector.extract_strided_slice %1 {offsets = [0, 1], sizes = [8, 7], strides = [1, 1]} : vector<8x8xbf16> to vector<8x7xbf16>
    %9 = tpu.concatenate %8, %5 in 1 : vector<8x7xbf16>, vector<8x1xbf16> -> vector<8x8xbf16>
    %10 = tpu.concatenate %7, %1, %9 in 0 : vector<8x8xbf16>, vector<8x8xbf16>, vector<8x8xbf16> -> vector<24x8xbf16>
    %c0_5 = arith.constant 0 : index
    %c0_6 = arith.constant 0 : index
    %11 = vector.load %arg4[%c0_5, %c0_6] : memref<16x24xbf16, #tpu.memory_space<vmem>>, vector<16x24xbf16>
    %cst = arith.constant dense<0.000000e+00> : vector<16x8xf32>
    %12 = tpu.matmul %11, %10, %cst {dimension_numbers = #tpu.dot_dimension_numbers<[1], [0], [0], [1], [0, 0, 1, 1], [], []>} : vector<16x24xbf16>, vector<24x8xbf16>, vector<16x8xf32> -> vector<16x8xf32>
    %c0_7 = arith.constant 0 : index
    %c0_8 = arith.constant 0 : index
    %13 = vector.load %arg5[%c0_7, %c0_8] : memref<16x1xf32, #tpu.memory_space<vmem>>, vector<16x1xf32>
    %14 = vector.broadcast %13 : vector<16x1xf32> to vector<16x8xf32>
    %15 = arith.addf %12, %14 : vector<16x8xf32>
    %16 = arith.truncf %15 : vector<16x8xf32> to vector<16x8xbf16>
    %c0_9 = arith.constant 0 : index
    %c0_10 = arith.constant 0 : index
    %c0_11 = arith.constant 0 : index
    %17 = vector.load %arg6[%c0_9, %c0_10, %c0_11] : memref<1x16x8xbf16, #tpu.memory_space<vmem>>, vector<1x16x8xbf16>
    %18 = vector.shape_cast %17 : vector<1x16x8xbf16> to vector<16x8xbf16>
    %19 = vector.shape_cast %16 : vector<16x8xbf16> to vector<1x16x8xbf16>
    tpu.vector_store %arg6[%c0_9, %c0_10, %c0_11], %19 {strides = array<i32>} : memref<1x16x8xbf16, #tpu.memory_space<vmem>>, vector<1x16x8xbf16>,
    return
  }
  func.func @transform_0(%arg0: i32, %arg1: i32) -> (i32, i32, i32) {
    %c0_i32 = arith.constant 0 : i32
    %c0_i32_0 = arith.constant 0 : i32
    return %arg0, %c0_i32, %arg1 : i32, i32, i32
  }
  func.func @transform_1(%arg0: i32, %arg1: i32) -> (i32, i32, i32) {
    %c1_i32 = arith.constant 1 : i32
    %0 = arith.muli %arg0, %c1_i32 : i32
    %1 = arith.addi %0, %arg1 : i32
    %c0_i32 = arith.constant 0 : i32
    %c0_i32_0 = arith.constant 0 : i32
    %c0_i32_1 = arith.constant 0 : i32
    return %1, %c0_i32, %c0_i32_0 : i32, i32, i32
  }
  func.func @transform_2(%arg0: i32, %arg1: i32) -> (i32, i32) {
    %c0_i32 = arith.constant 0 : i32
    %c0_i32_0 = arith.constant 0 : i32
    %c0_i32_1 = arith.constant 0 : i32
    return %c0_i32, %c0_i32_0 : i32, i32
  }
  func.func @transform_3(%arg0: i32, %arg1: i32) -> (i32, i32) {
    %c0_i32 = arith.constant 0 : i32
    %c0_i32_0 = arith.constant 0 : i32
    %c0_i32_1 = arith.constant 0 : i32
    return %c0_i32, %c0_i32_0 : i32, i32
  }
  func.func @transform_4(%arg0: i32, %arg1: i32) -> (i32, i32, i32) {
    %c0_i32 = arith.constant 0 : i32
    %c0_i32_0 = arith.constant 0 : i32
    return %arg0, %c0_i32, %arg1 : i32, i32, i32
  }
}

module attributes {stable_mosaic.version = 11 : i64} {
  func.func @kernel(%arg0: i32, %arg1: memref<1x16x8xbf16, #tpu.memory_space<vmem>>, %arg2: memref<16x128xbf16, #tpu.memory_space<vmem>>, %arg3: memref<16x128xbf16, #tpu.memory_space<vmem>>, %arg4: memref<16x128xbf16, #tpu.memory_space<vmem>>, %arg5: memref<128x16xbf16, #tpu.memory_space<vmem>>, %arg6: memref<16x128xbf16, #tpu.memory_space<vmem>>, %arg7: memref<128x16xbf16, #tpu.memory_space<vmem>>, %arg8: memref<1x16x8xbf16, #tpu.memory_space<vmem>>) attributes {dimension_semantics = [#tpu.dimension_semantics<parallel>], iteration_bounds = array<i64: 2>, scalar_prefetch = 0 : i64, scratch_operands = 0 : i64, tpu.core_type = #tpu.core_type<tc>, window_params = [{transform_indices = @transform_0, window_bounds = array<i64: 1, 16, 8>}, {pipeline_mode = #tpu.pipeline_mode<synchronous>, transform_indices = @transform_1, window_bounds = array<i64: 16, 128>}, {pipeline_mode = #tpu.pipeline_mode<synchronous>, transform_indices = @transform_2, window_bounds = array<i64: 16, 128>}, {pipeline_mode = #tpu.pipeline_mode<synchronous>, transform_indices = @transform_3, window_bounds = array<i64: 16, 128>}, {pipeline_mode = #tpu.pipeline_mode<synchronous>, transform_indices = @transform_4, window_bounds = array<i64: 128, 16>}, {pipeline_mode = #tpu.pipeline_mode<synchronous>, transform_indices = @transform_5, window_bounds = array<i64: 16, 128>}, {pipeline_mode = #tpu.pipeline_mode<synchronous>, transform_indices = @transform_6, window_bounds = array<i64: 128, 16>}, {transform_indices = @transform_7, window_bounds = array<i64: 1, 16, 8>}]} {
    %c0 = arith.constant 0 : index
    %c0_0 = arith.constant 0 : index
    %c0_1 = arith.constant 0 : index
    %0 = vector.load %arg1[%c0, %c0_0, %c0_1] : memref<1x16x8xbf16, #tpu.memory_space<vmem>>, vector<1x16x8xbf16>
    %1 = vector.shape_cast %0 : vector<1x16x8xbf16> to vector<16x8xbf16>
    %2 = arith.extf %1 : vector<16x8xbf16> to vector<16x8xf32>
    %3 = tpu.transpose %2, [1, 0] : vector<16x8xf32> -> vector<8x16xf32>
    %4 = arith.truncf %3 : vector<8x16xf32> to vector<8x16xbf16>
    %c0_2 = arith.constant 0 : index
    %c0_3 = arith.constant 0 : index
    %5 = vector.load %arg2[%c0_2, %c0_3] : memref<16x128xbf16, #tpu.memory_space<vmem>>, vector<16x128xbf16>
    %cst = arith.constant dense<0.000000e+00> : vector<8x128xf32>
    %6 = tpu.matmul %4, %5, %cst {dimension_numbers = #tpu.dot_dimension_numbers<[1], [0], [0], [1], [0, 0, 1, 1], [], []>} : vector<8x16xbf16>, vector<16x128xbf16>, vector<8x128xf32> -> vector<8x128xf32>
    %cst_4 = arith.constant 0.0883883461 : f32
    %7 = vector.broadcast %cst_4 : f32 to vector<8x128xf32>
    %8 = arith.mulf %6, %7 : vector<8x128xf32>
    %c0_5 = arith.constant 0 : index
    %c0_6 = arith.constant 0 : index
    %9 = vector.load %arg3[%c0_5, %c0_6] : memref<16x128xbf16, #tpu.memory_space<vmem>>, vector<16x128xbf16>
    %cst_7 = arith.constant dense<0.000000e+00> : vector<8x128xf32>
    %10 = tpu.matmul %4, %9, %cst_7 {dimension_numbers = #tpu.dot_dimension_numbers<[1], [0], [0], [1], [0, 0, 1, 1], [], []>} : vector<8x16xbf16>, vector<16x128xbf16>, vector<8x128xf32> -> vector<8x128xf32>
    %c0_8 = arith.constant 0 : index
    %c0_9 = arith.constant 0 : index
    %11 = vector.load %arg4[%c0_8, %c0_9] : memref<16x128xbf16, #tpu.memory_space<vmem>>, vector<16x128xbf16>
    %cst_10 = arith.constant dense<0.000000e+00> : vector<8x128xf32>
    %12 = tpu.matmul %4, %11, %cst_10 {dimension_numbers = #tpu.dot_dimension_numbers<[1], [0], [0], [1], [0, 0, 1, 1], [], []>} : vector<8x16xbf16>, vector<16x128xbf16>, vector<8x128xf32> -> vector<8x128xf32>
    %13 = arith.truncf %8 : vector<8x128xf32> to vector<8x128xbf16>
    %14 = arith.truncf %10 : vector<8x128xf32> to vector<8x128xbf16>
    %15 = arith.truncf %12 : vector<8x128xf32> to vector<8x128xbf16>
    %cst_11 = arith.constant dense<0.000000e+00> : vector<8x8xf32>
    %16 = tpu.matmul %13, %14, %cst_11 {dimension_numbers = #tpu.dot_dimension_numbers<[1], [1], [0], [0], [0, 0, 1, 0], [], []>} : vector<8x128xbf16>, vector<8x128xbf16>, vector<8x8xf32> -> vector<8x8xf32>
    %cst_12 = arith.constant dense<0xFF800000> : vector<8xf32>
    %17 = vector.multi_reduction <maximumf>, %16, %cst_12 [1] : vector<8x8xf32> to vector<8xf32>
    %18 = vector.shape_cast %17 : vector<8xf32> to vector<8x1xf32>
    %19 = vector.broadcast %18 : vector<8x1xf32> to vector<8x8xf32>
    %20 = arith.subf %16, %19 : vector<8x8xf32>
    %21 = math.exp %20 : vector<8x8xf32>
    %cst_13 = arith.constant dense<0.000000e+00> : vector<8xf32>
    %22 = vector.multi_reduction <add>, %21, %cst_13 [1] : vector<8x8xf32> to vector<8xf32>
    %23 = vector.shape_cast %22 : vector<8xf32> to vector<8x1xf32>
    %24 = arith.truncf %21 : vector<8x8xf32> to vector<8x8xbf16>
    %cst_14 = arith.constant dense<0.000000e+00> : vector<8x128xf32>
    %25 = tpu.matmul %24, %15, %cst_14 {dimension_numbers = #tpu.dot_dimension_numbers<[1], [0], [0], [1], [0, 0, 1, 1], [], []>} : vector<8x8xbf16>, vector<8x128xbf16>, vector<8x128xf32> -> vector<8x128xf32>
    %26 = tpu.reciprocal %23 {approx = true} : vector<8x1xf32> -> vector<8x1xf32>
    %27 = vector.broadcast %26 : vector<8x1xf32> to vector<8x128xf32>
    %28 = arith.mulf %25, %27 : vector<8x128xf32>
    %29 = arith.truncf %28 : vector<8x128xf32> to vector<8x128xbf16>
    %c0_15 = arith.constant 0 : index
    %c0_16 = arith.constant 0 : index
    %30 = vector.load %arg5[%c0_15, %c0_16] : memref<128x16xbf16, #tpu.memory_space<vmem>>, vector<128x16xbf16>
    %cst_17 = arith.constant dense<0.000000e+00> : vector<8x16xf32>
    %31 = tpu.matmul %29, %30, %cst_17 {dimension_numbers = #tpu.dot_dimension_numbers<[1], [0], [0], [1], [0, 0, 1, 1], [], []>} : vector<8x128xbf16>, vector<128x16xbf16>, vector<8x16xf32> -> vector<8x16xf32>
    %32 = arith.addf %3, %31 : vector<8x16xf32>
    %cst_18 = arith.constant dense<0.000000e+00> : vector<8xf32>
    %33 = vector.multi_reduction <add>, %32, %cst_18 [1] : vector<8x16xf32> to vector<8xf32>
    %34 = vector.shape_cast %33 : vector<8xf32> to vector<8x1xf32>
    %cst_19 = arith.constant 1.600000e+01 : f32
    %35 = vector.broadcast %cst_19 : f32 to vector<8x1xf32>
    %36 = arith.divf %34, %35 : vector<8x1xf32>
    %37 = vector.broadcast %36 : vector<8x1xf32> to vector<8x16xf32>
    %38 = arith.subf %32, %37 : vector<8x16xf32>
    %39 = arith.mulf %38, %38 : vector<8x16xf32>
    %cst_20 = arith.constant dense<0.000000e+00> : vector<8xf32>
    %40 = vector.multi_reduction <add>, %39, %cst_20 [1] : vector<8x16xf32> to vector<8xf32>
    %41 = vector.shape_cast %40 : vector<8xf32> to vector<8x1xf32>
    %cst_21 = arith.constant 1.600000e+01 : f32
    %42 = vector.broadcast %cst_21 : f32 to vector<8x1xf32>
    %43 = arith.divf %41, %42 : vector<8x1xf32>
    %44 = vector.broadcast %36 : vector<8x1xf32> to vector<8x16xf32>
    %45 = arith.subf %32, %44 : vector<8x16xf32>
    %cst_22 = arith.constant 9.99999974E-6 : f32
    %46 = vector.broadcast %cst_22 : f32 to vector<8x1xf32>
    %47 = arith.addf %43, %46 : vector<8x1xf32>
    %48 = math.rsqrt %47 : vector<8x1xf32>
    %49 = vector.broadcast %48 : vector<8x1xf32> to vector<8x16xf32>
    %50 = arith.mulf %45, %49 : vector<8x16xf32>
    %51 = arith.truncf %50 : vector<8x16xf32> to vector<8x16xbf16>
    %c0_23 = arith.constant 0 : index
    %c0_24 = arith.constant 0 : index
    %52 = vector.load %arg6[%c0_23, %c0_24] : memref<16x128xbf16, #tpu.memory_space<vmem>>, vector<16x128xbf16>
    %cst_25 = arith.constant dense<0.000000e+00> : vector<8x128xf32>
    %53 = tpu.matmul %51, %52, %cst_25 {dimension_numbers = #tpu.dot_dimension_numbers<[1], [0], [0], [1], [0, 0, 1, 1], [], []>} : vector<8x16xbf16>, vector<16x128xbf16>, vector<8x128xf32> -> vector<8x128xf32>
    %54 = arith.negf %53 : vector<8x128xf32>
    %55 = math.exp %54 : vector<8x128xf32>
    %cst_26 = arith.constant 1.000000e+00 : f32
    %56 = vector.broadcast %cst_26 : f32 to vector<8x128xf32>
    %57 = arith.addf %56, %55 : vector<8x128xf32>
    %58 = arith.divf %56, %57 : vector<8x128xf32>
    %59 = arith.mulf %53, %58 : vector<8x128xf32>
    %60 = arith.truncf %59 : vector<8x128xf32> to vector<8x128xbf16>
    %c0_27 = arith.constant 0 : index
    %c0_28 = arith.constant 0 : index
    %61 = vector.load %arg7[%c0_27, %c0_28] : memref<128x16xbf16, #tpu.memory_space<vmem>>, vector<128x16xbf16>
    %cst_29 = arith.constant dense<0.000000e+00> : vector<8x16xf32>
    %62 = tpu.matmul %60, %61, %cst_29 {dimension_numbers = #tpu.dot_dimension_numbers<[1], [0], [0], [1], [0, 0, 1, 1], [], []>} : vector<8x128xbf16>, vector<128x16xbf16>, vector<8x16xf32> -> vector<8x16xf32>
    %63 = arith.addf %50, %62 : vector<8x16xf32>
    %cst_30 = arith.constant dense<0.000000e+00> : vector<8xf32>
    %64 = vector.multi_reduction <add>, %63, %cst_30 [1] : vector<8x16xf32> to vector<8xf32>
    %65 = vector.shape_cast %64 : vector<8xf32> to vector<8x1xf32>
    %cst_31 = arith.constant 1.600000e+01 : f32
    %66 = vector.broadcast %cst_31 : f32 to vector<8x1xf32>
    %67 = arith.divf %65, %66 : vector<8x1xf32>
    %68 = vector.broadcast %67 : vector<8x1xf32> to vector<8x16xf32>
    %69 = arith.subf %63, %68 : vector<8x16xf32>
    %70 = arith.mulf %69, %69 : vector<8x16xf32>
    %cst_32 = arith.constant dense<0.000000e+00> : vector<8xf32>
    %71 = vector.multi_reduction <add>, %70, %cst_32 [1] : vector<8x16xf32> to vector<8xf32>
    %72 = vector.shape_cast %71 : vector<8xf32> to vector<8x1xf32>
    %cst_33 = arith.constant 1.600000e+01 : f32
    %73 = vector.broadcast %cst_33 : f32 to vector<8x1xf32>
    %74 = arith.divf %72, %73 : vector<8x1xf32>
    %75 = vector.broadcast %67 : vector<8x1xf32> to vector<8x16xf32>
    %76 = arith.subf %63, %75 : vector<8x16xf32>
    %cst_34 = arith.constant 9.99999974E-6 : f32
    %77 = vector.broadcast %cst_34 : f32 to vector<8x1xf32>
    %78 = arith.addf %74, %77 : vector<8x1xf32>
    %79 = math.rsqrt %78 : vector<8x1xf32>
    %80 = vector.broadcast %79 : vector<8x1xf32> to vector<8x16xf32>
    %81 = arith.mulf %76, %80 : vector<8x16xf32>
    %82 = tpu.transpose %81, [1, 0] : vector<8x16xf32> -> vector<16x8xf32>
    %83 = arith.addf %2, %82 : vector<16x8xf32>
    %84 = arith.truncf %83 : vector<16x8xf32> to vector<16x8xbf16>
    %c0_35 = arith.constant 0 : index
    %c0_36 = arith.constant 0 : index
    %c0_37 = arith.constant 0 : index
    %85 = vector.load %arg8[%c0_35, %c0_36, %c0_37] : memref<1x16x8xbf16, #tpu.memory_space<vmem>>, vector<1x16x8xbf16>
    %86 = vector.shape_cast %85 : vector<1x16x8xbf16> to vector<16x8xbf16>
    %87 = vector.shape_cast %84 : vector<16x8xbf16> to vector<1x16x8xbf16>
    tpu.vector_store %arg8[%c0_35, %c0_36, %c0_37], %87 {strides = array<i32>} : memref<1x16x8xbf16, #tpu.memory_space<vmem>>, vector<1x16x8xbf16>,
    return
  }
  func.func @transform_0(%arg0: i32) -> (i32, i32, i32) {
    %c0_i32 = arith.constant 0 : i32
    %c0_i32_0 = arith.constant 0 : i32
    %c0_i32_1 = arith.constant 0 : i32
    return %arg0, %c0_i32, %c0_i32_0 : i32, i32, i32
  }
  func.func @transform_1(%arg0: i32) -> (i32, i32) {
    %c0_i32 = arith.constant 0 : i32
    %c0_i32_0 = arith.constant 0 : i32
    %c0_i32_1 = arith.constant 0 : i32
    return %c0_i32, %c0_i32_0 : i32, i32
  }
  func.func @transform_2(%arg0: i32) -> (i32, i32) {
    %c0_i32 = arith.constant 0 : i32
    %c0_i32_0 = arith.constant 0 : i32
    %c0_i32_1 = arith.constant 0 : i32
    return %c0_i32, %c0_i32_0 : i32, i32
  }
  func.func @transform_3(%arg0: i32) -> (i32, i32) {
    %c0_i32 = arith.constant 0 : i32
    %c0_i32_0 = arith.constant 0 : i32
    %c0_i32_1 = arith.constant 0 : i32
    return %c0_i32, %c0_i32_0 : i32, i32
  }
  func.func @transform_4(%arg0: i32) -> (i32, i32) {
    %c0_i32 = arith.constant 0 : i32
    %c0_i32_0 = arith.constant 0 : i32
    %c0_i32_1 = arith.constant 0 : i32
    return %c0_i32, %c0_i32_0 : i32, i32
  }
  func.func @transform_5(%arg0: i32) -> (i32, i32) {
    %c0_i32 = arith.constant 0 : i32
    %c0_i32_0 = arith.constant 0 : i32
    %c0_i32_1 = arith.constant 0 : i32
    return %c0_i32, %c0_i32_0 : i32, i32
  }
  func.func @transform_6(%arg0: i32) -> (i32, i32) {
    %c0_i32 = arith.constant 0 : i32
    %c0_i32_0 = arith.constant 0 : i32
    %c0_i32_1 = arith.constant 0 : i32
    return %c0_i32, %c0_i32_0 : i32, i32
  }
  func.func @transform_7(%arg0: i32) -> (i32, i32, i32) {
    %c0_i32 = arith.constant 0 : i32
    %c0_i32_0 = arith.constant 0 : i32
    %c0_i32_1 = arith.constant 0 : i32
    return %arg0, %c0_i32, %c0_i32_0 : i32, i32, i32
  }
}

module attributes {stable_mosaic.version = 11 : i64} {
  func.func @_convt_kernel(%arg0: i32, %arg1: i32, %arg2: memref<1x16x8xbf16, #tpu.memory_space<vmem>>, %arg3: memref<32x16xbf16, #tpu.memory_space<vmem>>, %arg4: memref<32x1xf32, #tpu.memory_space<vmem>>, %arg5: memref<1x32x8xbf16, #tpu.memory_space<vmem>>) attributes {dimension_semantics = [#tpu.dimension_semantics<parallel>, #tpu.dimension_semantics<parallel>], iteration_bounds = array<i64: 2, 1>, scalar_prefetch = 0 : i64, scratch_operands = 0 : i64, tpu.core_type = #tpu.core_type<tc>, window_params = [{transform_indices = @transform_0, window_bounds = array<i64: 1, 16, 8>}, {pipeline_mode = #tpu.pipeline_mode<synchronous>, transform_indices = @transform_1, window_bounds = array<i64: 32, 16>}, {pipeline_mode = #tpu.pipeline_mode<synchronous>, transform_indices = @transform_2, window_bounds = array<i64: 32, 1>}, {transform_indices = @transform_3, window_bounds = array<i64: 1, 32, 8>}]} {
    %c0 = arith.constant 0 : index
    %c0_0 = arith.constant 0 : index
    %0 = vector.load %arg3[%c0, %c0_0] : memref<32x16xbf16, #tpu.memory_space<vmem>>, vector<32x16xbf16>
    %c0_1 = arith.constant 0 : index
    %c0_2 = arith.constant 0 : index
    %c0_3 = arith.constant 0 : index
    %1 = vector.load %arg2[%c0_1, %c0_2, %c0_3] : memref<1x16x8xbf16, #tpu.memory_space<vmem>>, vector<1x16x8xbf16>
    %2 = vector.shape_cast %1 : vector<1x16x8xbf16> to vector<16x8xbf16>
    %cst = arith.constant dense<0.000000e+00> : vector<32x8xf32>
    %3 = tpu.matmul %0, %2, %cst {dimension_numbers = #tpu.dot_dimension_numbers<[1], [0], [0], [1], [0, 0, 1, 1], [], []>} : vector<32x16xbf16>, vector<16x8xbf16>, vector<32x8xf32> -> vector<32x8xf32>
    %c0_4 = arith.constant 0 : index
    %c0_5 = arith.constant 0 : index
    %4 = vector.load %arg4[%c0_4, %c0_5] : memref<32x1xf32, #tpu.memory_space<vmem>>, vector<32x1xf32>
    %5 = vector.broadcast %4 : vector<32x1xf32> to vector<32x8xf32>
    %6 = arith.addf %3, %5 : vector<32x8xf32>
    %7 = arith.truncf %6 : vector<32x8xf32> to vector<32x8xbf16>
    %c0_6 = arith.constant 0 : index
    %c0_7 = arith.constant 0 : index
    %c0_8 = arith.constant 0 : index
    %8 = vector.load %arg5[%c0_6, %c0_7, %c0_8] : memref<1x32x8xbf16, #tpu.memory_space<vmem>>, vector<1x32x8xbf16>
    %9 = vector.shape_cast %8 : vector<1x32x8xbf16> to vector<32x8xbf16>
    %10 = vector.shape_cast %7 : vector<32x8xbf16> to vector<1x32x8xbf16>
    tpu.vector_store %arg5[%c0_6, %c0_7, %c0_8], %10 {strides = array<i32>} : memref<1x32x8xbf16, #tpu.memory_space<vmem>>, vector<1x32x8xbf16>,
    return
  }
  func.func @transform_0(%arg0: i32, %arg1: i32) -> (i32, i32, i32) {
    %c0_i32 = arith.constant 0 : i32
    %c0_i32_0 = arith.constant 0 : i32
    return %arg0, %c0_i32, %arg1 : i32, i32, i32
  }
  func.func @transform_1(%arg0: i32, %arg1: i32) -> (i32, i32) {
    %c0_i32 = arith.constant 0 : i32
    %c0_i32_0 = arith.constant 0 : i32
    %c0_i32_1 = arith.constant 0 : i32
    return %c0_i32, %c0_i32_0 : i32, i32
  }
  func.func @transform_2(%arg0: i32, %arg1: i32) -> (i32, i32) {
    %c0_i32 = arith.constant 0 : i32
    %c0_i32_0 = arith.constant 0 : i32
    %c0_i32_1 = arith.constant 0 : i32
    return %c0_i32, %c0_i32_0 : i32, i32
  }
  func.func @transform_3(%arg0: i32, %arg1: i32) -> (i32, i32, i32) {
    %c0_i32 = arith.constant 0 : i32
    %c0_i32_0 = arith.constant 0 : i32
    return %arg0, %c0_i32, %arg1 : i32, i32, i32
  }
}

module attributes {stable_mosaic.version = 11 : i64} {
  func.func @kernel(%arg0: i32, %arg1: i32, %arg2: memref<1x8x32xbf16, #tpu.memory_space<vmem>>, %arg3: memref<1x8x2xbf16, #tpu.memory_space<vmem>>, %arg4: memref<1x8x2xf32, #tpu.memory_space<vmem>>, %arg5: memref<8x24xbf16, #tpu.memory_space<vmem>>, %arg6: memref<8x1xf32, #tpu.memory_space<vmem>>, %arg7: memref<8x8xbf16, #tpu.memory_space<vmem>>, %arg8: memref<8x1xf32, #tpu.memory_space<vmem>>, %arg9: memref<1x8x32xbf16, #tpu.memory_space<vmem>>, %arg10: memref<1x8x32xbf16, #tpu.memory_space<vmem>>) attributes {dimension_semantics = [#tpu.dimension_semantics<parallel>, #tpu.dimension_semantics<parallel>], iteration_bounds = array<i64: 2, 1>, scalar_prefetch = 0 : i64, scratch_operands = 0 : i64, tpu.core_type = #tpu.core_type<tc>, window_params = [{transform_indices = @transform_0, window_bounds = array<i64: 1, 8, 32>}, {transform_indices = @transform_1, window_bounds = array<i64: 1, 8, 2>}, {transform_indices = @transform_2, window_bounds = array<i64: 1, 8, 2>}, {pipeline_mode = #tpu.pipeline_mode<synchronous>, transform_indices = @transform_3, window_bounds = array<i64: 8, 24>}, {pipeline_mode = #tpu.pipeline_mode<synchronous>, transform_indices = @transform_4, window_bounds = array<i64: 8, 1>}, {pipeline_mode = #tpu.pipeline_mode<synchronous>, transform_indices = @transform_5, window_bounds = array<i64: 8, 8>}, {pipeline_mode = #tpu.pipeline_mode<synchronous>, transform_indices = @transform_6, window_bounds = array<i64: 8, 1>}, {transform_indices = @transform_7, window_bounds = array<i64: 1, 8, 32>}, {transform_indices = @transform_8, window_bounds = array<i64: 1, 8, 32>}]} {
    %c0 = arith.constant 0 : index
    %c0_0 = arith.constant 0 : index
    %c0_1 = arith.constant 0 : index
    %0 = vector.load %arg2[%c0, %c0_0, %c0_1] : memref<1x8x32xbf16, #tpu.memory_space<vmem>>, vector<1x8x32xbf16>
    %1 = vector.shape_cast %0 : vector<1x8x32xbf16> to vector<8x32xbf16>
    %c0_2 = arith.constant 0 : index
    %c0_3 = arith.constant 0 : index
    %c0_4 = arith.constant 0 : index
    %2 = vector.load %arg3[%c0_2, %c0_3, %c0_4] : memref<1x8x2xbf16, #tpu.memory_space<vmem>>, vector<1x8x2xbf16>
    %3 = vector.shape_cast %2 : vector<1x8x2xbf16> to vector<8x2xbf16>
    %4 = arith.extf %1 : vector<8x32xbf16> to vector<8x32xf32>
    %5 = arith.extf %3 : vector<8x2xbf16> to vector<8x2xf32>
    %c0_5 = arith.constant 0 : index
    %c0_6 = arith.constant 0 : index
    %c0_7 = arith.constant 0 : index
    %6 = vector.load %arg4[%c0_5, %c0_6, %c0_7] : memref<1x8x2xf32, #tpu.memory_space<vmem>>, vector<1x8x2xf32>
    %7 = vector.shape_cast %6 : vector<1x8x2xf32> to vector<8x2xf32>
    %8 = vector.extract_strided_slice %7 {offsets = [0, 0], sizes = [8, 1], strides = [1, 1]} : vector<8x2xf32> to vector<8x1xf32>
    %c0_8 = arith.constant 0 : index
    %c0_9 = arith.constant 0 : index
    %c0_10 = arith.constant 0 : index
    %9 = vector.load %arg4[%c0_8, %c0_9, %c0_10] : memref<1x8x2xf32, #tpu.memory_space<vmem>>, vector<1x8x2xf32>
    %10 = vector.shape_cast %9 : vector<1x8x2xf32> to vector<8x2xf32>
    %11 = vector.extract_strided_slice %10 {offsets = [0, 1], sizes = [8, 1], strides = [1, 1]} : vector<8x2xf32> to vector<8x1xf32>
    %12 = vector.broadcast %8 : vector<8x1xf32> to vector<8x32xf32>
    %13 = arith.subf %4, %12 : vector<8x32xf32>
    %14 = vector.broadcast %11 : vector<8x1xf32> to vector<8x32xf32>
    %15 = arith.mulf %13, %14 : vector<8x32xf32>
    %16 = vector.broadcast %8 : vector<8x1xf32> to vector<8x2xf32>
    %17 = arith.subf %5, %16 : vector<8x2xf32>
    %18 = vector.broadcast %11 : vector<8x1xf32> to vector<8x2xf32>
    %19 = arith.mulf %17, %18 : vector<8x2xf32>
    %20 = arith.negf %15 : vector<8x32xf32>
    %21 = math.exp %20 : vector<8x32xf32>
    %cst = arith.constant 1.000000e+00 : f32
    %22 = vector.broadcast %cst : f32 to vector<8x32xf32>
    %23 = arith.addf %22, %21 : vector<8x32xf32>
    %24 = arith.divf %22, %23 : vector<8x32xf32>
    %25 = arith.mulf %15, %24 : vector<8x32xf32>
    %26 = arith.negf %19 : vector<8x2xf32>
    %27 = math.exp %26 : vector<8x2xf32>
    %cst_11 = arith.constant 1.000000e+00 : f32
    %28 = vector.broadcast %cst_11 : f32 to vector<8x2xf32>
    %29 = arith.addf %28, %27 : vector<8x2xf32>
    %30 = arith.divf %28, %29 : vector<8x2xf32>
    %31 = arith.mulf %19, %30 : vector<8x2xf32>
    %32 = arith.truncf %25 : vector<8x32xf32> to vector<8x32xbf16>
    %33 = arith.truncf %31 : vector<8x2xf32> to vector<8x2xbf16>
    %34 = vector.extract_strided_slice %33 {offsets = [0, 0], sizes = [8, 1], strides = [1, 1]} : vector<8x2xbf16> to vector<8x1xbf16>
    %35 = vector.extract_strided_slice %33 {offsets = [0, 1], sizes = [8, 1], strides = [1, 1]} : vector<8x2xbf16> to vector<8x1xbf16>
    %36 = vector.extract_strided_slice %32 {offsets = [0, 0], sizes = [8, 31], strides = [1, 1]} : vector<8x32xbf16> to vector<8x31xbf16>
    %37 = tpu.concatenate %34, %36 in 1 : vector<8x1xbf16>, vector<8x31xbf16> -> vector<8x32xbf16>
    %38 = vector.extract_strided_slice %32 {offsets = [0, 1], sizes = [8, 31], strides = [1, 1]} : vector<8x32xbf16> to vector<8x31xbf16>
    %39 = tpu.concatenate %38, %35 in 1 : vector<8x31xbf16>, vector<8x1xbf16> -> vector<8x32xbf16>
    %40 = tpu.concatenate %37, %32, %39 in 0 : vector<8x32xbf16>, vector<8x32xbf16>, vector<8x32xbf16> -> vector<24x32xbf16>
    %c0_12 = arith.constant 0 : index
    %c0_13 = arith.constant 0 : index
    %41 = vector.load %arg5[%c0_12, %c0_13] : memref<8x24xbf16, #tpu.memory_space<vmem>>, vector<8x24xbf16>
    %cst_14 = arith.constant dense<0.000000e+00> : vector<8x32xf32>
    %42 = tpu.matmul %41, %40, %cst_14 {dimension_numbers = #tpu.dot_dimension_numbers<[1], [0], [0], [1], [0, 0, 1, 1], [], []>} : vector<8x24xbf16>, vector<24x32xbf16>, vector<8x32xf32> -> vector<8x32xf32>
    %c0_15 = arith.constant 0 : index
    %c0_16 = arith.constant 0 : index
    %43 = vector.load %arg6[%c0_15, %c0_16] : memref<8x1xf32, #tpu.memory_space<vmem>>, vector<8x1xf32>
    %44 = vector.broadcast %43 : vector<8x1xf32> to vector<8x32xf32>
    %45 = arith.addf %42, %44 : vector<8x32xf32>
    %46 = arith.truncf %45 : vector<8x32xf32> to vector<8x32xbf16>
    %c0_17 = arith.constant 0 : index
    %c0_18 = arith.constant 0 : index
    %c0_19 = arith.constant 0 : index
    %47 = vector.load %arg9[%c0_17, %c0_18, %c0_19] : memref<1x8x32xbf16, #tpu.memory_space<vmem>>, vector<1x8x32xbf16>
    %48 = vector.shape_cast %47 : vector<1x8x32xbf16> to vector<8x32xbf16>
    %49 = vector.shape_cast %46 : vector<8x32xbf16> to vector<1x8x32xbf16>
    tpu.vector_store %arg9[%c0_17, %c0_18, %c0_19], %49 {strides = array<i32>} : memref<1x8x32xbf16, #tpu.memory_space<vmem>>, vector<1x8x32xbf16>,
    %c0_20 = arith.constant 0 : index
    %c0_21 = arith.constant 0 : index
    %50 = vector.load %arg7[%c0_20, %c0_21] : memref<8x8xbf16, #tpu.memory_space<vmem>>, vector<8x8xbf16>
    %cst_22 = arith.constant dense<0.000000e+00> : vector<8x32xf32>
    %51 = tpu.matmul %50, %32, %cst_22 {dimension_numbers = #tpu.dot_dimension_numbers<[1], [0], [0], [1], [0, 0, 1, 1], [], []>} : vector<8x8xbf16>, vector<8x32xbf16>, vector<8x32xf32> -> vector<8x32xf32>
    %c0_23 = arith.constant 0 : index
    %c0_24 = arith.constant 0 : index
    %52 = vector.load %arg8[%c0_23, %c0_24] : memref<8x1xf32, #tpu.memory_space<vmem>>, vector<8x1xf32>
    %53 = vector.broadcast %52 : vector<8x1xf32> to vector<8x32xf32>
    %54 = arith.addf %51, %53 : vector<8x32xf32>
    %55 = arith.truncf %54 : vector<8x32xf32> to vector<8x32xbf16>
    %c0_25 = arith.constant 0 : index
    %c0_26 = arith.constant 0 : index
    %c0_27 = arith.constant 0 : index
    %56 = vector.load %arg10[%c0_25, %c0_26, %c0_27] : memref<1x8x32xbf16, #tpu.memory_space<vmem>>, vector<1x8x32xbf16>
    %57 = vector.shape_cast %56 : vector<1x8x32xbf16> to vector<8x32xbf16>
    %58 = vector.shape_cast %55 : vector<8x32xbf16> to vector<1x8x32xbf16>
    tpu.vector_store %arg10[%c0_25, %c0_26, %c0_27], %58 {strides = array<i32>} : memref<1x8x32xbf16, #tpu.memory_space<vmem>>, vector<1x8x32xbf16>,
    return
  }
  func.func @transform_0(%arg0: i32, %arg1: i32) -> (i32, i32, i32) {
    %c0_i32 = arith.constant 0 : i32
    %c0_i32_0 = arith.constant 0 : i32
    return %arg0, %c0_i32, %arg1 : i32, i32, i32
  }
  func.func @transform_1(%arg0: i32, %arg1: i32) -> (i32, i32, i32) {
    %c1_i32 = arith.constant 1 : i32
    %0 = arith.muli %arg0, %c1_i32 : i32
    %1 = arith.addi %0, %arg1 : i32
    %c0_i32 = arith.constant 0 : i32
    %c0_i32_0 = arith.constant 0 : i32
    %c0_i32_1 = arith.constant 0 : i32
    return %1, %c0_i32, %c0_i32_0 : i32, i32, i32
  }
  func.func @transform_2(%arg0: i32, %arg1: i32) -> (i32, i32, i32) {
    %c0_i32 = arith.constant 0 : i32
    %c0_i32_0 = arith.constant 0 : i32
    %c0_i32_1 = arith.constant 0 : i32
    return %arg0, %c0_i32, %c0_i32_0 : i32, i32, i32
  }
  func.func @transform_3(%arg0: i32, %arg1: i32) -> (i32, i32) {
    %c0_i32 = arith.constant 0 : i32
    %c0_i32_0 = arith.constant 0 : i32
    %c0_i32_1 = arith.constant 0 : i32
    return %c0_i32, %c0_i32_0 : i32, i32
  }
  func.func @transform_4(%arg0: i32, %arg1: i32) -> (i32, i32) {
    %c0_i32 = arith.constant 0 : i32
    %c0_i32_0 = arith.constant 0 : i32
    %c0_i32_1 = arith.constant 0 : i32
    return %c0_i32, %c0_i32_0 : i32, i32
  }
  func.func @transform_5(%arg0: i32, %arg1: i32) -> (i32, i32) {
    %c0_i32 = arith.constant 0 : i32
    %c0_i32_0 = arith.constant 0 : i32
    %c0_i32_1 = arith.constant 0 : i32
    return %c0_i32, %c0_i32_0 : i32, i32
  }
  func.func @transform_6(%arg0: i32, %arg1: i32) -> (i32, i32) {
    %c0_i32 = arith.constant 0 : i32
    %c0_i32_0 = arith.constant 0 : i32
    %c0_i32_1 = arith.constant 0 : i32
    return %c0_i32, %c0_i32_0 : i32, i32
  }
  func.func @transform_7(%arg0: i32, %arg1: i32) -> (i32, i32, i32) {
    %c0_i32 = arith.constant 0 : i32
    %c0_i32_0 = arith.constant 0 : i32
    return %arg0, %c0_i32, %arg1 : i32, i32, i32
  }
  func.func @transform_8(%arg0: i32, %arg1: i32) -> (i32, i32, i32) {
    %c0_i32 = arith.constant 0 : i32
    %c0_i32_0 = arith.constant 0 : i32
    return %arg0, %c0_i32, %arg1 : i32, i32, i32
  }
}

module attributes {stable_mosaic.version = 11 : i64} {
  func.func @kernel(%arg0: i32, %arg1: i32, %arg2: memref<1x8x32xbf16, #tpu.memory_space<vmem>>, %arg3: memref<1x8x2xbf16, #tpu.memory_space<vmem>>, %arg4: memref<1x8x2xf32, #tpu.memory_space<vmem>>, %arg5: memref<8x24xbf16, #tpu.memory_space<vmem>>, %arg6: memref<8x1xf32, #tpu.memory_space<vmem>>, %arg7: memref<1x8x32xbf16, #tpu.memory_space<vmem>>, %arg8: memref<1x8x32xbf16, #tpu.memory_space<vmem>>) attributes {dimension_semantics = [#tpu.dimension_semantics<parallel>, #tpu.dimension_semantics<parallel>], iteration_bounds = array<i64: 2, 1>, scalar_prefetch = 0 : i64, scratch_operands = 0 : i64, tpu.core_type = #tpu.core_type<tc>, window_params = [{transform_indices = @transform_0, window_bounds = array<i64: 1, 8, 32>}, {transform_indices = @transform_1, window_bounds = array<i64: 1, 8, 2>}, {transform_indices = @transform_2, window_bounds = array<i64: 1, 8, 2>}, {pipeline_mode = #tpu.pipeline_mode<synchronous>, transform_indices = @transform_3, window_bounds = array<i64: 8, 24>}, {pipeline_mode = #tpu.pipeline_mode<synchronous>, transform_indices = @transform_4, window_bounds = array<i64: 8, 1>}, {transform_indices = @transform_5, window_bounds = array<i64: 1, 8, 32>}, {transform_indices = @transform_6, window_bounds = array<i64: 1, 8, 32>}]} {
    %c0 = arith.constant 0 : index
    %c0_0 = arith.constant 0 : index
    %c0_1 = arith.constant 0 : index
    %0 = vector.load %arg2[%c0, %c0_0, %c0_1] : memref<1x8x32xbf16, #tpu.memory_space<vmem>>, vector<1x8x32xbf16>
    %1 = vector.shape_cast %0 : vector<1x8x32xbf16> to vector<8x32xbf16>
    %c0_2 = arith.constant 0 : index
    %c0_3 = arith.constant 0 : index
    %c0_4 = arith.constant 0 : index
    %2 = vector.load %arg3[%c0_2, %c0_3, %c0_4] : memref<1x8x2xbf16, #tpu.memory_space<vmem>>, vector<1x8x2xbf16>
    %3 = vector.shape_cast %2 : vector<1x8x2xbf16> to vector<8x2xbf16>
    %4 = arith.extf %1 : vector<8x32xbf16> to vector<8x32xf32>
    %5 = arith.extf %3 : vector<8x2xbf16> to vector<8x2xf32>
    %c0_5 = arith.constant 0 : index
    %c0_6 = arith.constant 0 : index
    %c0_7 = arith.constant 0 : index
    %6 = vector.load %arg4[%c0_5, %c0_6, %c0_7] : memref<1x8x2xf32, #tpu.memory_space<vmem>>, vector<1x8x2xf32>
    %7 = vector.shape_cast %6 : vector<1x8x2xf32> to vector<8x2xf32>
    %8 = vector.extract_strided_slice %7 {offsets = [0, 0], sizes = [8, 1], strides = [1, 1]} : vector<8x2xf32> to vector<8x1xf32>
    %c0_8 = arith.constant 0 : index
    %c0_9 = arith.constant 0 : index
    %c0_10 = arith.constant 0 : index
    %9 = vector.load %arg4[%c0_8, %c0_9, %c0_10] : memref<1x8x2xf32, #tpu.memory_space<vmem>>, vector<1x8x2xf32>
    %10 = vector.shape_cast %9 : vector<1x8x2xf32> to vector<8x2xf32>
    %11 = vector.extract_strided_slice %10 {offsets = [0, 1], sizes = [8, 1], strides = [1, 1]} : vector<8x2xf32> to vector<8x1xf32>
    %12 = vector.broadcast %8 : vector<8x1xf32> to vector<8x32xf32>
    %13 = arith.subf %4, %12 : vector<8x32xf32>
    %14 = vector.broadcast %11 : vector<8x1xf32> to vector<8x32xf32>
    %15 = arith.mulf %13, %14 : vector<8x32xf32>
    %16 = vector.broadcast %8 : vector<8x1xf32> to vector<8x2xf32>
    %17 = arith.subf %5, %16 : vector<8x2xf32>
    %18 = vector.broadcast %11 : vector<8x1xf32> to vector<8x2xf32>
    %19 = arith.mulf %17, %18 : vector<8x2xf32>
    %20 = arith.negf %15 : vector<8x32xf32>
    %21 = math.exp %20 : vector<8x32xf32>
    %cst = arith.constant 1.000000e+00 : f32
    %22 = vector.broadcast %cst : f32 to vector<8x32xf32>
    %23 = arith.addf %22, %21 : vector<8x32xf32>
    %24 = arith.divf %22, %23 : vector<8x32xf32>
    %25 = arith.mulf %15, %24 : vector<8x32xf32>
    %26 = arith.negf %19 : vector<8x2xf32>
    %27 = math.exp %26 : vector<8x2xf32>
    %cst_11 = arith.constant 1.000000e+00 : f32
    %28 = vector.broadcast %cst_11 : f32 to vector<8x2xf32>
    %29 = arith.addf %28, %27 : vector<8x2xf32>
    %30 = arith.divf %28, %29 : vector<8x2xf32>
    %31 = arith.mulf %19, %30 : vector<8x2xf32>
    %32 = arith.truncf %25 : vector<8x32xf32> to vector<8x32xbf16>
    %33 = arith.truncf %31 : vector<8x2xf32> to vector<8x2xbf16>
    %34 = vector.extract_strided_slice %33 {offsets = [0, 0], sizes = [8, 1], strides = [1, 1]} : vector<8x2xbf16> to vector<8x1xbf16>
    %35 = vector.extract_strided_slice %33 {offsets = [0, 1], sizes = [8, 1], strides = [1, 1]} : vector<8x2xbf16> to vector<8x1xbf16>
    %36 = vector.extract_strided_slice %32 {offsets = [0, 0], sizes = [8, 31], strides = [1, 1]} : vector<8x32xbf16> to vector<8x31xbf16>
    %37 = tpu.concatenate %34, %36 in 1 : vector<8x1xbf16>, vector<8x31xbf16> -> vector<8x32xbf16>
    %38 = vector.extract_strided_slice %32 {offsets = [0, 1], sizes = [8, 31], strides = [1, 1]} : vector<8x32xbf16> to vector<8x31xbf16>
    %39 = tpu.concatenate %38, %35 in 1 : vector<8x31xbf16>, vector<8x1xbf16> -> vector<8x32xbf16>
    %40 = tpu.concatenate %37, %32, %39 in 0 : vector<8x32xbf16>, vector<8x32xbf16>, vector<8x32xbf16> -> vector<24x32xbf16>
    %c0_12 = arith.constant 0 : index
    %c0_13 = arith.constant 0 : index
    %41 = vector.load %arg5[%c0_12, %c0_13] : memref<8x24xbf16, #tpu.memory_space<vmem>>, vector<8x24xbf16>
    %cst_14 = arith.constant dense<0.000000e+00> : vector<8x32xf32>
    %42 = tpu.matmul %41, %40, %cst_14 {dimension_numbers = #tpu.dot_dimension_numbers<[1], [0], [0], [1], [0, 0, 1, 1], [], []>} : vector<8x24xbf16>, vector<24x32xbf16>, vector<8x32xf32> -> vector<8x32xf32>
    %c0_15 = arith.constant 0 : index
    %c0_16 = arith.constant 0 : index
    %43 = vector.load %arg6[%c0_15, %c0_16] : memref<8x1xf32, #tpu.memory_space<vmem>>, vector<8x1xf32>
    %44 = vector.broadcast %43 : vector<8x1xf32> to vector<8x32xf32>
    %45 = arith.addf %42, %44 : vector<8x32xf32>
    %c0_17 = arith.constant 0 : index
    %c0_18 = arith.constant 0 : index
    %c0_19 = arith.constant 0 : index
    %46 = vector.load %arg7[%c0_17, %c0_18, %c0_19] : memref<1x8x32xbf16, #tpu.memory_space<vmem>>, vector<1x8x32xbf16>
    %47 = vector.shape_cast %46 : vector<1x8x32xbf16> to vector<8x32xbf16>
    %48 = arith.extf %47 : vector<8x32xbf16> to vector<8x32xf32>
    %49 = arith.addf %45, %48 : vector<8x32xf32>
    %50 = arith.truncf %49 : vector<8x32xf32> to vector<8x32xbf16>
    %c0_20 = arith.constant 0 : index
    %c0_21 = arith.constant 0 : index
    %c0_22 = arith.constant 0 : index
    %51 = vector.load %arg8[%c0_20, %c0_21, %c0_22] : memref<1x8x32xbf16, #tpu.memory_space<vmem>>, vector<1x8x32xbf16>
    %52 = vector.shape_cast %51 : vector<1x8x32xbf16> to vector<8x32xbf16>
    %53 = vector.shape_cast %50 : vector<8x32xbf16> to vector<1x8x32xbf16>
    tpu.vector_store %arg8[%c0_20, %c0_21, %c0_22], %53 {strides = array<i32>} : memref<1x8x32xbf16, #tpu.memory_space<vmem>>, vector<1x8x32xbf16>,
    return
  }
  func.func @transform_0(%arg0: i32, %arg1: i32) -> (i32, i32, i32) {
    %c0_i32 = arith.constant 0 : i32
    %c0_i32_0 = arith.constant 0 : i32
    return %arg0, %c0_i32, %arg1 : i32, i32, i32
  }
  func.func @transform_1(%arg0: i32, %arg1: i32) -> (i32, i32, i32) {
    %c1_i32 = arith.constant 1 : i32
    %0 = arith.muli %arg0, %c1_i32 : i32
    %1 = arith.addi %0, %arg1 : i32
    %c0_i32 = arith.constant 0 : i32
    %c0_i32_0 = arith.constant 0 : i32
    %c0_i32_1 = arith.constant 0 : i32
    return %1, %c0_i32, %c0_i32_0 : i32, i32, i32
  }
  func.func @transform_2(%arg0: i32, %arg1: i32) -> (i32, i32, i32) {
    %c0_i32 = arith.constant 0 : i32
    %c0_i32_0 = arith.constant 0 : i32
    %c0_i32_1 = arith.constant 0 : i32
    return %arg0, %c0_i32, %c0_i32_0 : i32, i32, i32
  }
  func.func @transform_3(%arg0: i32, %arg1: i32) -> (i32, i32) {
    %c0_i32 = arith.constant 0 : i32
    %c0_i32_0 = arith.constant 0 : i32
    %c0_i32_1 = arith.constant 0 : i32
    return %c0_i32, %c0_i32_0 : i32, i32
  }
  func.func @transform_4(%arg0: i32, %arg1: i32) -> (i32, i32) {
    %c0_i32 = arith.constant 0 : i32
    %c0_i32_0 = arith.constant 0 : i32
    %c0_i32_1 = arith.constant 0 : i32
    return %c0_i32, %c0_i32_0 : i32, i32
  }
  func.func @transform_5(%arg0: i32, %arg1: i32) -> (i32, i32, i32) {
    %c0_i32 = arith.constant 0 : i32
    %c0_i32_0 = arith.constant 0 : i32
    return %arg0, %c0_i32, %arg1 : i32, i32, i32
  }
  func.func @transform_6(%arg0: i32, %arg1: i32) -> (i32, i32, i32) {
    %c0_i32 = arith.constant 0 : i32
    %c0_i32_0 = arith.constant 0 : i32
    return %arg0, %c0_i32, %arg1 : i32, i32, i32
  }
}

module attributes {stable_mosaic.version = 11 : i64} {
  func.func @_convt_kernel(%arg0: i32, %arg1: i32, %arg2: memref<1x8x32xbf16, #tpu.memory_space<vmem>>, %arg3: memref<16x8xbf16, #tpu.memory_space<vmem>>, %arg4: memref<16x1xf32, #tpu.memory_space<vmem>>, %arg5: memref<1x16x32xbf16, #tpu.memory_space<vmem>>) attributes {dimension_semantics = [#tpu.dimension_semantics<parallel>, #tpu.dimension_semantics<parallel>], iteration_bounds = array<i64: 2, 1>, scalar_prefetch = 0 : i64, scratch_operands = 0 : i64, tpu.core_type = #tpu.core_type<tc>, window_params = [{transform_indices = @transform_0, window_bounds = array<i64: 1, 8, 32>}, {pipeline_mode = #tpu.pipeline_mode<synchronous>, transform_indices = @transform_1, window_bounds = array<i64: 16, 8>}, {pipeline_mode = #tpu.pipeline_mode<synchronous>, transform_indices = @transform_2, window_bounds = array<i64: 16, 1>}, {transform_indices = @transform_3, window_bounds = array<i64: 1, 16, 32>}]} {
    %c0 = arith.constant 0 : index
    %c0_0 = arith.constant 0 : index
    %0 = vector.load %arg3[%c0, %c0_0] : memref<16x8xbf16, #tpu.memory_space<vmem>>, vector<16x8xbf16>
    %c0_1 = arith.constant 0 : index
    %c0_2 = arith.constant 0 : index
    %c0_3 = arith.constant 0 : index
    %1 = vector.load %arg2[%c0_1, %c0_2, %c0_3] : memref<1x8x32xbf16, #tpu.memory_space<vmem>>, vector<1x8x32xbf16>
    %2 = vector.shape_cast %1 : vector<1x8x32xbf16> to vector<8x32xbf16>
    %cst = arith.constant dense<0.000000e+00> : vector<16x32xf32>
    %3 = tpu.matmul %0, %2, %cst {dimension_numbers = #tpu.dot_dimension_numbers<[1], [0], [0], [1], [0, 0, 1, 1], [], []>} : vector<16x8xbf16>, vector<8x32xbf16>, vector<16x32xf32> -> vector<16x32xf32>
    %c0_4 = arith.constant 0 : index
    %c0_5 = arith.constant 0 : index
    %4 = vector.load %arg4[%c0_4, %c0_5] : memref<16x1xf32, #tpu.memory_space<vmem>>, vector<16x1xf32>
    %5 = vector.broadcast %4 : vector<16x1xf32> to vector<16x32xf32>
    %6 = arith.addf %3, %5 : vector<16x32xf32>
    %7 = arith.truncf %6 : vector<16x32xf32> to vector<16x32xbf16>
    %c0_6 = arith.constant 0 : index
    %c0_7 = arith.constant 0 : index
    %c0_8 = arith.constant 0 : index
    %8 = vector.load %arg5[%c0_6, %c0_7, %c0_8] : memref<1x16x32xbf16, #tpu.memory_space<vmem>>, vector<1x16x32xbf16>
    %9 = vector.shape_cast %8 : vector<1x16x32xbf16> to vector<16x32xbf16>
    %10 = vector.shape_cast %7 : vector<16x32xbf16> to vector<1x16x32xbf16>
    tpu.vector_store %arg5[%c0_6, %c0_7, %c0_8], %10 {strides = array<i32>} : memref<1x16x32xbf16, #tpu.memory_space<vmem>>, vector<1x16x32xbf16>,
    return
  }
  func.func @transform_0(%arg0: i32, %arg1: i32) -> (i32, i32, i32) {
    %c0_i32 = arith.constant 0 : i32
    %c0_i32_0 = arith.constant 0 : i32
    return %arg0, %c0_i32, %arg1 : i32, i32, i32
  }
  func.func @transform_1(%arg0: i32, %arg1: i32) -> (i32, i32) {
    %c0_i32 = arith.constant 0 : i32
    %c0_i32_0 = arith.constant 0 : i32
    %c0_i32_1 = arith.constant 0 : i32
    return %c0_i32, %c0_i32_0 : i32, i32
  }
  func.func @transform_2(%arg0: i32, %arg1: i32) -> (i32, i32) {
    %c0_i32 = arith.constant 0 : i32
    %c0_i32_0 = arith.constant 0 : i32
    %c0_i32_1 = arith.constant 0 : i32
    return %c0_i32, %c0_i32_0 : i32, i32
  }
  func.func @transform_3(%arg0: i32, %arg1: i32) -> (i32, i32, i32) {
    %c0_i32 = arith.constant 0 : i32
    %c0_i32_0 = arith.constant 0 : i32
    return %arg0, %c0_i32, %arg1 : i32, i32, i32
  }
}

module attributes {stable_mosaic.version = 11 : i64} {
  func.func @kernel(%arg0: i32, %arg1: i32, %arg2: memref<1x4x128xbf16, #tpu.memory_space<vmem>>, %arg3: memref<1x4x2xbf16, #tpu.memory_space<vmem>>, %arg4: memref<1x4x2xf32, #tpu.memory_space<vmem>>, %arg5: memref<4x12xbf16, #tpu.memory_space<vmem>>, %arg6: memref<4x1xf32, #tpu.memory_space<vmem>>, %arg7: memref<1x4x128xbf16, #tpu.memory_space<vmem>>, %arg8: memref<1x4x128xbf16, #tpu.memory_space<vmem>>) attributes {dimension_semantics = [#tpu.dimension_semantics<parallel>, #tpu.dimension_semantics<parallel>], iteration_bounds = array<i64: 2, 1>, scalar_prefetch = 0 : i64, scratch_operands = 0 : i64, tpu.core_type = #tpu.core_type<tc>, window_params = [{transform_indices = @transform_0, window_bounds = array<i64: 1, 4, 128>}, {transform_indices = @transform_1, window_bounds = array<i64: 1, 4, 2>}, {transform_indices = @transform_2, window_bounds = array<i64: 1, 4, 2>}, {pipeline_mode = #tpu.pipeline_mode<synchronous>, transform_indices = @transform_3, window_bounds = array<i64: 4, 12>}, {pipeline_mode = #tpu.pipeline_mode<synchronous>, transform_indices = @transform_4, window_bounds = array<i64: 4, 1>}, {transform_indices = @transform_5, window_bounds = array<i64: 1, 4, 128>}, {transform_indices = @transform_6, window_bounds = array<i64: 1, 4, 128>}]} {
    %c0 = arith.constant 0 : index
    %c0_0 = arith.constant 0 : index
    %c0_1 = arith.constant 0 : index
    %0 = vector.load %arg2[%c0, %c0_0, %c0_1] : memref<1x4x128xbf16, #tpu.memory_space<vmem>>, vector<1x4x128xbf16>
    %1 = vector.shape_cast %0 : vector<1x4x128xbf16> to vector<4x128xbf16>
    %c0_2 = arith.constant 0 : index
    %c0_3 = arith.constant 0 : index
    %c0_4 = arith.constant 0 : index
    %2 = vector.load %arg3[%c0_2, %c0_3, %c0_4] : memref<1x4x2xbf16, #tpu.memory_space<vmem>>, vector<1x4x2xbf16>
    %3 = vector.shape_cast %2 : vector<1x4x2xbf16> to vector<4x2xbf16>
    %4 = arith.extf %1 : vector<4x128xbf16> to vector<4x128xf32>
    %5 = arith.extf %3 : vector<4x2xbf16> to vector<4x2xf32>
    %c0_5 = arith.constant 0 : index
    %c0_6 = arith.constant 0 : index
    %c0_7 = arith.constant 0 : index
    %6 = vector.load %arg4[%c0_5, %c0_6, %c0_7] : memref<1x4x2xf32, #tpu.memory_space<vmem>>, vector<1x4x2xf32>
    %7 = vector.shape_cast %6 : vector<1x4x2xf32> to vector<4x2xf32>
    %8 = vector.extract_strided_slice %7 {offsets = [0, 0], sizes = [4, 1], strides = [1, 1]} : vector<4x2xf32> to vector<4x1xf32>
    %c0_8 = arith.constant 0 : index
    %c0_9 = arith.constant 0 : index
    %c0_10 = arith.constant 0 : index
    %9 = vector.load %arg4[%c0_8, %c0_9, %c0_10] : memref<1x4x2xf32, #tpu.memory_space<vmem>>, vector<1x4x2xf32>
    %10 = vector.shape_cast %9 : vector<1x4x2xf32> to vector<4x2xf32>
    %11 = vector.extract_strided_slice %10 {offsets = [0, 1], sizes = [4, 1], strides = [1, 1]} : vector<4x2xf32> to vector<4x1xf32>
    %12 = vector.broadcast %8 : vector<4x1xf32> to vector<4x128xf32>
    %13 = arith.subf %4, %12 : vector<4x128xf32>
    %14 = vector.broadcast %11 : vector<4x1xf32> to vector<4x128xf32>
    %15 = arith.mulf %13, %14 : vector<4x128xf32>
    %16 = vector.broadcast %8 : vector<4x1xf32> to vector<4x2xf32>
    %17 = arith.subf %5, %16 : vector<4x2xf32>
    %18 = vector.broadcast %11 : vector<4x1xf32> to vector<4x2xf32>
    %19 = arith.mulf %17, %18 : vector<4x2xf32>
    %20 = arith.negf %15 : vector<4x128xf32>
    %21 = math.exp %20 : vector<4x128xf32>
    %cst = arith.constant 1.000000e+00 : f32
    %22 = vector.broadcast %cst : f32 to vector<4x128xf32>
    %23 = arith.addf %22, %21 : vector<4x128xf32>
    %24 = arith.divf %22, %23 : vector<4x128xf32>
    %25 = arith.mulf %15, %24 : vector<4x128xf32>
    %26 = arith.negf %19 : vector<4x2xf32>
    %27 = math.exp %26 : vector<4x2xf32>
    %cst_11 = arith.constant 1.000000e+00 : f32
    %28 = vector.broadcast %cst_11 : f32 to vector<4x2xf32>
    %29 = arith.addf %28, %27 : vector<4x2xf32>
    %30 = arith.divf %28, %29 : vector<4x2xf32>
    %31 = arith.mulf %19, %30 : vector<4x2xf32>
    %32 = arith.truncf %25 : vector<4x128xf32> to vector<4x128xbf16>
    %33 = arith.truncf %31 : vector<4x2xf32> to vector<4x2xbf16>
    %34 = vector.extract_strided_slice %33 {offsets = [0, 0], sizes = [4, 1], strides = [1, 1]} : vector<4x2xbf16> to vector<4x1xbf16>
    %35 = vector.extract_strided_slice %33 {offsets = [0, 1], sizes = [4, 1], strides = [1, 1]} : vector<4x2xbf16> to vector<4x1xbf16>
    %36 = vector.extract_strided_slice %32 {offsets = [0, 0], sizes = [4, 127], strides = [1, 1]} : vector<4x128xbf16> to vector<4x127xbf16>
    %37 = tpu.concatenate %34, %36 in 1 : vector<4x1xbf16>, vector<4x127xbf16> -> vector<4x128xbf16>
    %38 = vector.extract_strided_slice %32 {offsets = [0, 1], sizes = [4, 127], strides = [1, 1]} : vector<4x128xbf16> to vector<4x127xbf16>
    %39 = tpu.concatenate %38, %35 in 1 : vector<4x127xbf16>, vector<4x1xbf16> -> vector<4x128xbf16>
    %40 = tpu.concatenate %37, %32, %39 in 0 : vector<4x128xbf16>, vector<4x128xbf16>, vector<4x128xbf16> -> vector<12x128xbf16>
    %c0_12 = arith.constant 0 : index
    %c0_13 = arith.constant 0 : index
    %41 = vector.load %arg5[%c0_12, %c0_13] : memref<4x12xbf16, #tpu.memory_space<vmem>>, vector<4x12xbf16>
    %cst_14 = arith.constant dense<0.000000e+00> : vector<4x128xf32>
    %42 = tpu.matmul %41, %40, %cst_14 {dimension_numbers = #tpu.dot_dimension_numbers<[1], [0], [0], [1], [0, 0, 1, 1], [], []>} : vector<4x12xbf16>, vector<12x128xbf16>, vector<4x128xf32> -> vector<4x128xf32>
    %c0_15 = arith.constant 0 : index
    %c0_16 = arith.constant 0 : index
    %43 = vector.load %arg6[%c0_15, %c0_16] : memref<4x1xf32, #tpu.memory_space<vmem>>, vector<4x1xf32>
    %44 = vector.broadcast %43 : vector<4x1xf32> to vector<4x128xf32>
    %45 = arith.addf %42, %44 : vector<4x128xf32>
    %c0_17 = arith.constant 0 : index
    %c0_18 = arith.constant 0 : index
    %c0_19 = arith.constant 0 : index
    %46 = vector.load %arg7[%c0_17, %c0_18, %c0_19] : memref<1x4x128xbf16, #tpu.memory_space<vmem>>, vector<1x4x128xbf16>
    %47 = vector.shape_cast %46 : vector<1x4x128xbf16> to vector<4x128xbf16>
    %48 = arith.extf %47 : vector<4x128xbf16> to vector<4x128xf32>
    %49 = arith.addf %45, %48 : vector<4x128xf32>
    %50 = arith.truncf %49 : vector<4x128xf32> to vector<4x128xbf16>
    %c0_20 = arith.constant 0 : index
    %c0_21 = arith.constant 0 : index
    %c0_22 = arith.constant 0 : index
    %51 = vector.load %arg8[%c0_20, %c0_21, %c0_22] : memref<1x4x128xbf16, #tpu.memory_space<vmem>>, vector<1x4x128xbf16>
    %52 = vector.shape_cast %51 : vector<1x4x128xbf16> to vector<4x128xbf16>
    %53 = vector.shape_cast %50 : vector<4x128xbf16> to vector<1x4x128xbf16>
    tpu.vector_store %arg8[%c0_20, %c0_21, %c0_22], %53 {strides = array<i32>} : memref<1x4x128xbf16, #tpu.memory_space<vmem>>, vector<1x4x128xbf16>,
    return
  }
  func.func @transform_0(%arg0: i32, %arg1: i32) -> (i32, i32, i32) {
    %c0_i32 = arith.constant 0 : i32
    %c0_i32_0 = arith.constant 0 : i32
    return %arg0, %c0_i32, %arg1 : i32, i32, i32
  }
  func.func @transform_1(%arg0: i32, %arg1: i32) -> (i32, i32, i32) {
    %c1_i32 = arith.constant 1 : i32
    %0 = arith.muli %arg0, %c1_i32 : i32
    %1 = arith.addi %0, %arg1 : i32
    %c0_i32 = arith.constant 0 : i32
    %c0_i32_0 = arith.constant 0 : i32
    %c0_i32_1 = arith.constant 0 : i32
    return %1, %c0_i32, %c0_i32_0 : i32, i32, i32
  }
  func.func @transform_2(%arg0: i32, %arg1: i32) -> (i32, i32, i32) {
    %c0_i32 = arith.constant 0 : i32
    %c0_i32_0 = arith.constant 0 : i32
    %c0_i32_1 = arith.constant 0 : i32
    return %arg0, %c0_i32, %c0_i32_0 : i32, i32, i32
  }
  func.func @transform_3(%arg0: i32, %arg1: i32) -> (i32, i32) {
    %c0_i32 = arith.constant 0 : i32
    %c0_i32_0 = arith.constant 0 : i32
    %c0_i32_1 = arith.constant 0 : i32
    return %c0_i32, %c0_i32_0 : i32, i32
  }
  func.func @transform_4(%arg0: i32, %arg1: i32) -> (i32, i32) {
    %c0_i32 = arith.constant 0 : i32
    %c0_i32_0 = arith.constant 0 : i32
    %c0_i32_1 = arith.constant 0 : i32
    return %c0_i32, %c0_i32_0 : i32, i32
  }
  func.func @transform_5(%arg0: i32, %arg1: i32) -> (i32, i32, i32) {
    %c0_i32 = arith.constant 0 : i32
    %c0_i32_0 = arith.constant 0 : i32
    return %arg0, %c0_i32, %arg1 : i32, i32, i32
  }
  func.func @transform_6(%arg0: i32, %arg1: i32) -> (i32, i32, i32) {
    %c0_i32 = arith.constant 0 : i32
    %c0_i32_0 = arith.constant 0 : i32
    return %arg0, %c0_i32, %arg1 : i32, i32, i32
  }
}

module attributes {stable_mosaic.version = 11 : i64} {
  func.func @kernel(%arg0: i32, %arg1: i32, %arg2: memref<1x4x128xbf16, #tpu.memory_space<vmem>>, %arg3: memref<1x4x2xbf16, #tpu.memory_space<vmem>>, %arg4: memref<1x4x2xf32, #tpu.memory_space<vmem>>, %arg5: memref<4x12xbf16, #tpu.memory_space<vmem>>, %arg6: memref<4x1xf32, #tpu.memory_space<vmem>>, %arg7: memref<4x4xbf16, #tpu.memory_space<vmem>>, %arg8: memref<4x1xf32, #tpu.memory_space<vmem>>, %arg9: memref<1x4x128xbf16, #tpu.memory_space<vmem>>, %arg10: memref<1x4x128xbf16, #tpu.memory_space<vmem>>) attributes {dimension_semantics = [#tpu.dimension_semantics<parallel>, #tpu.dimension_semantics<parallel>], iteration_bounds = array<i64: 2, 1>, scalar_prefetch = 0 : i64, scratch_operands = 0 : i64, tpu.core_type = #tpu.core_type<tc>, window_params = [{transform_indices = @transform_0, window_bounds = array<i64: 1, 4, 128>}, {transform_indices = @transform_1, window_bounds = array<i64: 1, 4, 2>}, {transform_indices = @transform_2, window_bounds = array<i64: 1, 4, 2>}, {pipeline_mode = #tpu.pipeline_mode<synchronous>, transform_indices = @transform_3, window_bounds = array<i64: 4, 12>}, {pipeline_mode = #tpu.pipeline_mode<synchronous>, transform_indices = @transform_4, window_bounds = array<i64: 4, 1>}, {pipeline_mode = #tpu.pipeline_mode<synchronous>, transform_indices = @transform_5, window_bounds = array<i64: 4, 4>}, {pipeline_mode = #tpu.pipeline_mode<synchronous>, transform_indices = @transform_6, window_bounds = array<i64: 4, 1>}, {transform_indices = @transform_7, window_bounds = array<i64: 1, 4, 128>}, {transform_indices = @transform_8, window_bounds = array<i64: 1, 4, 128>}]} {
    %c0 = arith.constant 0 : index
    %c0_0 = arith.constant 0 : index
    %c0_1 = arith.constant 0 : index
    %0 = vector.load %arg2[%c0, %c0_0, %c0_1] : memref<1x4x128xbf16, #tpu.memory_space<vmem>>, vector<1x4x128xbf16>
    %1 = vector.shape_cast %0 : vector<1x4x128xbf16> to vector<4x128xbf16>
    %c0_2 = arith.constant 0 : index
    %c0_3 = arith.constant 0 : index
    %c0_4 = arith.constant 0 : index
    %2 = vector.load %arg3[%c0_2, %c0_3, %c0_4] : memref<1x4x2xbf16, #tpu.memory_space<vmem>>, vector<1x4x2xbf16>
    %3 = vector.shape_cast %2 : vector<1x4x2xbf16> to vector<4x2xbf16>
    %4 = arith.extf %1 : vector<4x128xbf16> to vector<4x128xf32>
    %5 = arith.extf %3 : vector<4x2xbf16> to vector<4x2xf32>
    %c0_5 = arith.constant 0 : index
    %c0_6 = arith.constant 0 : index
    %c0_7 = arith.constant 0 : index
    %6 = vector.load %arg4[%c0_5, %c0_6, %c0_7] : memref<1x4x2xf32, #tpu.memory_space<vmem>>, vector<1x4x2xf32>
    %7 = vector.shape_cast %6 : vector<1x4x2xf32> to vector<4x2xf32>
    %8 = vector.extract_strided_slice %7 {offsets = [0, 0], sizes = [4, 1], strides = [1, 1]} : vector<4x2xf32> to vector<4x1xf32>
    %c0_8 = arith.constant 0 : index
    %c0_9 = arith.constant 0 : index
    %c0_10 = arith.constant 0 : index
    %9 = vector.load %arg4[%c0_8, %c0_9, %c0_10] : memref<1x4x2xf32, #tpu.memory_space<vmem>>, vector<1x4x2xf32>
    %10 = vector.shape_cast %9 : vector<1x4x2xf32> to vector<4x2xf32>
    %11 = vector.extract_strided_slice %10 {offsets = [0, 1], sizes = [4, 1], strides = [1, 1]} : vector<4x2xf32> to vector<4x1xf32>
    %12 = vector.broadcast %8 : vector<4x1xf32> to vector<4x128xf32>
    %13 = arith.subf %4, %12 : vector<4x128xf32>
    %14 = vector.broadcast %11 : vector<4x1xf32> to vector<4x128xf32>
    %15 = arith.mulf %13, %14 : vector<4x128xf32>
    %16 = vector.broadcast %8 : vector<4x1xf32> to vector<4x2xf32>
    %17 = arith.subf %5, %16 : vector<4x2xf32>
    %18 = vector.broadcast %11 : vector<4x1xf32> to vector<4x2xf32>
    %19 = arith.mulf %17, %18 : vector<4x2xf32>
    %20 = arith.negf %15 : vector<4x128xf32>
    %21 = math.exp %20 : vector<4x128xf32>
    %cst = arith.constant 1.000000e+00 : f32
    %22 = vector.broadcast %cst : f32 to vector<4x128xf32>
    %23 = arith.addf %22, %21 : vector<4x128xf32>
    %24 = arith.divf %22, %23 : vector<4x128xf32>
    %25 = arith.mulf %15, %24 : vector<4x128xf32>
    %26 = arith.negf %19 : vector<4x2xf32>
    %27 = math.exp %26 : vector<4x2xf32>
    %cst_11 = arith.constant 1.000000e+00 : f32
    %28 = vector.broadcast %cst_11 : f32 to vector<4x2xf32>
    %29 = arith.addf %28, %27 : vector<4x2xf32>
    %30 = arith.divf %28, %29 : vector<4x2xf32>
    %31 = arith.mulf %19, %30 : vector<4x2xf32>
    %32 = arith.truncf %25 : vector<4x128xf32> to vector<4x128xbf16>
    %33 = arith.truncf %31 : vector<4x2xf32> to vector<4x2xbf16>
    %34 = vector.extract_strided_slice %33 {offsets = [0, 0], sizes = [4, 1], strides = [1, 1]} : vector<4x2xbf16> to vector<4x1xbf16>
    %35 = vector.extract_strided_slice %33 {offsets = [0, 1], sizes = [4, 1], strides = [1, 1]} : vector<4x2xbf16> to vector<4x1xbf16>
    %36 = vector.extract_strided_slice %32 {offsets = [0, 0], sizes = [4, 127], strides = [1, 1]} : vector<4x128xbf16> to vector<4x127xbf16>
    %37 = tpu.concatenate %34, %36 in 1 : vector<4x1xbf16>, vector<4x127xbf16> -> vector<4x128xbf16>
    %38 = vector.extract_strided_slice %32 {offsets = [0, 1], sizes = [4, 127], strides = [1, 1]} : vector<4x128xbf16> to vector<4x127xbf16>
    %39 = tpu.concatenate %38, %35 in 1 : vector<4x127xbf16>, vector<4x1xbf16> -> vector<4x128xbf16>
    %40 = tpu.concatenate %37, %32, %39 in 0 : vector<4x128xbf16>, vector<4x128xbf16>, vector<4x128xbf16> -> vector<12x128xbf16>
    %c0_12 = arith.constant 0 : index
    %c0_13 = arith.constant 0 : index
    %41 = vector.load %arg5[%c0_12, %c0_13] : memref<4x12xbf16, #tpu.memory_space<vmem>>, vector<4x12xbf16>
    %cst_14 = arith.constant dense<0.000000e+00> : vector<4x128xf32>
    %42 = tpu.matmul %41, %40, %cst_14 {dimension_numbers = #tpu.dot_dimension_numbers<[1], [0], [0], [1], [0, 0, 1, 1], [], []>} : vector<4x12xbf16>, vector<12x128xbf16>, vector<4x128xf32> -> vector<4x128xf32>
    %c0_15 = arith.constant 0 : index
    %c0_16 = arith.constant 0 : index
    %43 = vector.load %arg6[%c0_15, %c0_16] : memref<4x1xf32, #tpu.memory_space<vmem>>, vector<4x1xf32>
    %44 = vector.broadcast %43 : vector<4x1xf32> to vector<4x128xf32>
    %45 = arith.addf %42, %44 : vector<4x128xf32>
    %46 = arith.truncf %45 : vector<4x128xf32> to vector<4x128xbf16>
    %c0_17 = arith.constant 0 : index
    %c0_18 = arith.constant 0 : index
    %c0_19 = arith.constant 0 : index
    %47 = vector.load %arg9[%c0_17, %c0_18, %c0_19] : memref<1x4x128xbf16, #tpu.memory_space<vmem>>, vector<1x4x128xbf16>
    %48 = vector.shape_cast %47 : vector<1x4x128xbf16> to vector<4x128xbf16>
    %49 = vector.shape_cast %46 : vector<4x128xbf16> to vector<1x4x128xbf16>
    tpu.vector_store %arg9[%c0_17, %c0_18, %c0_19], %49 {strides = array<i32>} : memref<1x4x128xbf16, #tpu.memory_space<vmem>>, vector<1x4x128xbf16>,
    %c0_20 = arith.constant 0 : index
    %c0_21 = arith.constant 0 : index
    %50 = vector.load %arg7[%c0_20, %c0_21] : memref<4x4xbf16, #tpu.memory_space<vmem>>, vector<4x4xbf16>
    %cst_22 = arith.constant dense<0.000000e+00> : vector<4x128xf32>
    %51 = tpu.matmul %50, %32, %cst_22 {dimension_numbers = #tpu.dot_dimension_numbers<[1], [0], [0], [1], [0, 0, 1, 1], [], []>} : vector<4x4xbf16>, vector<4x128xbf16>, vector<4x128xf32> -> vector<4x128xf32>
    %c0_23 = arith.constant 0 : index
    %c0_24 = arith.constant 0 : index
    %52 = vector.load %arg8[%c0_23, %c0_24] : memref<4x1xf32, #tpu.memory_space<vmem>>, vector<4x1xf32>
    %53 = vector.broadcast %52 : vector<4x1xf32> to vector<4x128xf32>
    %54 = arith.addf %51, %53 : vector<4x128xf32>
    %55 = arith.truncf %54 : vector<4x128xf32> to vector<4x128xbf16>
    %c0_25 = arith.constant 0 : index
    %c0_26 = arith.constant 0 : index
    %c0_27 = arith.constant 0 : index
    %56 = vector.load %arg10[%c0_25, %c0_26, %c0_27] : memref<1x4x128xbf16, #tpu.memory_space<vmem>>, vector<1x4x128xbf16>
    %57 = vector.shape_cast %56 : vector<1x4x128xbf16> to vector<4x128xbf16>
    %58 = vector.shape_cast %55 : vector<4x128xbf16> to vector<1x4x128xbf16>
    tpu.vector_store %arg10[%c0_25, %c0_26, %c0_27], %58 {strides = array<i32>} : memref<1x4x128xbf16, #tpu.memory_space<vmem>>, vector<1x4x128xbf16>,
    return
  }
  func.func @transform_0(%arg0: i32, %arg1: i32) -> (i32, i32, i32) {
    %c0_i32 = arith.constant 0 : i32
    %c0_i32_0 = arith.constant 0 : i32
    return %arg0, %c0_i32, %arg1 : i32, i32, i32
  }
  func.func @transform_1(%arg0: i32, %arg1: i32) -> (i32, i32, i32) {
    %c1_i32 = arith.constant 1 : i32
    %0 = arith.muli %arg0, %c1_i32 : i32
    %1 = arith.addi %0, %arg1 : i32
    %c0_i32 = arith.constant 0 : i32
    %c0_i32_0 = arith.constant 0 : i32
    %c0_i32_1 = arith.constant 0 : i32
    return %1, %c0_i32, %c0_i32_0 : i32, i32, i32
  }
  func.func @transform_2(%arg0: i32, %arg1: i32) -> (i32, i32, i32) {
    %c0_i32 = arith.constant 0 : i32
    %c0_i32_0 = arith.constant 0 : i32
    %c0_i32_1 = arith.constant 0 : i32
    return %arg0, %c0_i32, %c0_i32_0 : i32, i32, i32
  }
  func.func @transform_3(%arg0: i32, %arg1: i32) -> (i32, i32) {
    %c0_i32 = arith.constant 0 : i32
    %c0_i32_0 = arith.constant 0 : i32
    %c0_i32_1 = arith.constant 0 : i32
    return %c0_i32, %c0_i32_0 : i32, i32
  }
  func.func @transform_4(%arg0: i32, %arg1: i32) -> (i32, i32) {
    %c0_i32 = arith.constant 0 : i32
    %c0_i32_0 = arith.constant 0 : i32
    %c0_i32_1 = arith.constant 0 : i32
    return %c0_i32, %c0_i32_0 : i32, i32
  }
  func.func @transform_5(%arg0: i32, %arg1: i32) -> (i32, i32) {
    %c0_i32 = arith.constant 0 : i32
    %c0_i32_0 = arith.constant 0 : i32
    %c0_i32_1 = arith.constant 0 : i32
    return %c0_i32, %c0_i32_0 : i32, i32
  }
  func.func @transform_6(%arg0: i32, %arg1: i32) -> (i32, i32) {
    %c0_i32 = arith.constant 0 : i32
    %c0_i32_0 = arith.constant 0 : i32
    %c0_i32_1 = arith.constant 0 : i32
    return %c0_i32, %c0_i32_0 : i32, i32
  }
  func.func @transform_7(%arg0: i32, %arg1: i32) -> (i32, i32, i32) {
    %c0_i32 = arith.constant 0 : i32
    %c0_i32_0 = arith.constant 0 : i32
    return %arg0, %c0_i32, %arg1 : i32, i32, i32
  }
  func.func @transform_8(%arg0: i32, %arg1: i32) -> (i32, i32, i32) {
    %c0_i32 = arith.constant 0 : i32
    %c0_i32_0 = arith.constant 0 : i32
    return %arg0, %c0_i32, %arg1 : i32, i32, i32
  }
}

module attributes {stable_mosaic.version = 11 : i64} {
  func.func @kernel(%arg0: i32, %arg1: i32, %arg2: memref<1x4x128xbf16, #tpu.memory_space<vmem>>, %arg3: memref<1x4x2xbf16, #tpu.memory_space<vmem>>, %arg4: memref<1x4x2xf32, #tpu.memory_space<vmem>>, %arg5: memref<2x12xbf16, #tpu.memory_space<vmem>>, %arg6: memref<2x1xf32, #tpu.memory_space<vmem>>, %arg7: memref<1x2x128xf32, #tpu.memory_space<vmem>>) attributes {dimension_semantics = [#tpu.dimension_semantics<parallel>, #tpu.dimension_semantics<parallel>], iteration_bounds = array<i64: 2, 1>, scalar_prefetch = 0 : i64, scratch_operands = 0 : i64, tpu.core_type = #tpu.core_type<tc>, window_params = [{transform_indices = @transform_0, window_bounds = array<i64: 1, 4, 128>}, {transform_indices = @transform_1, window_bounds = array<i64: 1, 4, 2>}, {transform_indices = @transform_2, window_bounds = array<i64: 1, 4, 2>}, {pipeline_mode = #tpu.pipeline_mode<synchronous>, transform_indices = @transform_3, window_bounds = array<i64: 2, 12>}, {pipeline_mode = #tpu.pipeline_mode<synchronous>, transform_indices = @transform_4, window_bounds = array<i64: 2, 1>}, {transform_indices = @transform_5, window_bounds = array<i64: 1, 2, 128>}]} {
    %c0 = arith.constant 0 : index
    %c0_0 = arith.constant 0 : index
    %c0_1 = arith.constant 0 : index
    %0 = vector.load %arg2[%c0, %c0_0, %c0_1] : memref<1x4x128xbf16, #tpu.memory_space<vmem>>, vector<1x4x128xbf16>
    %1 = vector.shape_cast %0 : vector<1x4x128xbf16> to vector<4x128xbf16>
    %c0_2 = arith.constant 0 : index
    %c0_3 = arith.constant 0 : index
    %c0_4 = arith.constant 0 : index
    %2 = vector.load %arg3[%c0_2, %c0_3, %c0_4] : memref<1x4x2xbf16, #tpu.memory_space<vmem>>, vector<1x4x2xbf16>
    %3 = vector.shape_cast %2 : vector<1x4x2xbf16> to vector<4x2xbf16>
    %4 = arith.extf %1 : vector<4x128xbf16> to vector<4x128xf32>
    %5 = arith.extf %3 : vector<4x2xbf16> to vector<4x2xf32>
    %c0_5 = arith.constant 0 : index
    %c0_6 = arith.constant 0 : index
    %c0_7 = arith.constant 0 : index
    %6 = vector.load %arg4[%c0_5, %c0_6, %c0_7] : memref<1x4x2xf32, #tpu.memory_space<vmem>>, vector<1x4x2xf32>
    %7 = vector.shape_cast %6 : vector<1x4x2xf32> to vector<4x2xf32>
    %8 = vector.extract_strided_slice %7 {offsets = [0, 0], sizes = [4, 1], strides = [1, 1]} : vector<4x2xf32> to vector<4x1xf32>
    %c0_8 = arith.constant 0 : index
    %c0_9 = arith.constant 0 : index
    %c0_10 = arith.constant 0 : index
    %9 = vector.load %arg4[%c0_8, %c0_9, %c0_10] : memref<1x4x2xf32, #tpu.memory_space<vmem>>, vector<1x4x2xf32>
    %10 = vector.shape_cast %9 : vector<1x4x2xf32> to vector<4x2xf32>
    %11 = vector.extract_strided_slice %10 {offsets = [0, 1], sizes = [4, 1], strides = [1, 1]} : vector<4x2xf32> to vector<4x1xf32>
    %12 = vector.broadcast %8 : vector<4x1xf32> to vector<4x128xf32>
    %13 = arith.subf %4, %12 : vector<4x128xf32>
    %14 = vector.broadcast %11 : vector<4x1xf32> to vector<4x128xf32>
    %15 = arith.mulf %13, %14 : vector<4x128xf32>
    %16 = vector.broadcast %8 : vector<4x1xf32> to vector<4x2xf32>
    %17 = arith.subf %5, %16 : vector<4x2xf32>
    %18 = vector.broadcast %11 : vector<4x1xf32> to vector<4x2xf32>
    %19 = arith.mulf %17, %18 : vector<4x2xf32>
    %20 = math.tanh %15 : vector<4x128xf32>
    %21 = math.tanh %19 : vector<4x2xf32>
    %22 = arith.truncf %20 : vector<4x128xf32> to vector<4x128xbf16>
    %23 = arith.truncf %21 : vector<4x2xf32> to vector<4x2xbf16>
    %24 = vector.extract_strided_slice %23 {offsets = [0, 0], sizes = [4, 1], strides = [1, 1]} : vector<4x2xbf16> to vector<4x1xbf16>
    %25 = vector.extract_strided_slice %23 {offsets = [0, 1], sizes = [4, 1], strides = [1, 1]} : vector<4x2xbf16> to vector<4x1xbf16>
    %26 = vector.extract_strided_slice %22 {offsets = [0, 0], sizes = [4, 127], strides = [1, 1]} : vector<4x128xbf16> to vector<4x127xbf16>
    %27 = tpu.concatenate %24, %26 in 1 : vector<4x1xbf16>, vector<4x127xbf16> -> vector<4x128xbf16>
    %28 = vector.extract_strided_slice %22 {offsets = [0, 1], sizes = [4, 127], strides = [1, 1]} : vector<4x128xbf16> to vector<4x127xbf16>
    %29 = tpu.concatenate %28, %25 in 1 : vector<4x127xbf16>, vector<4x1xbf16> -> vector<4x128xbf16>
    %30 = tpu.concatenate %27, %22, %29 in 0 : vector<4x128xbf16>, vector<4x128xbf16>, vector<4x128xbf16> -> vector<12x128xbf16>
    %c0_11 = arith.constant 0 : index
    %c0_12 = arith.constant 0 : index
    %31 = vector.load %arg5[%c0_11, %c0_12] : memref<2x12xbf16, #tpu.memory_space<vmem>>, vector<2x12xbf16>
    %cst = arith.constant dense<0.000000e+00> : vector<2x128xf32>
    %32 = tpu.matmul %31, %30, %cst {dimension_numbers = #tpu.dot_dimension_numbers<[1], [0], [0], [1], [0, 0, 1, 1], [], []>} : vector<2x12xbf16>, vector<12x128xbf16>, vector<2x128xf32> -> vector<2x128xf32>
    %c0_13 = arith.constant 0 : index
    %c0_14 = arith.constant 0 : index
    %33 = vector.load %arg6[%c0_13, %c0_14] : memref<2x1xf32, #tpu.memory_space<vmem>>, vector<2x1xf32>
    %34 = vector.broadcast %33 : vector<2x1xf32> to vector<2x128xf32>
    %35 = arith.addf %32, %34 : vector<2x128xf32>
    %c0_15 = arith.constant 0 : index
    %c0_16 = arith.constant 0 : index
    %c0_17 = arith.constant 0 : index
    %36 = vector.load %arg7[%c0_15, %c0_16, %c0_17] : memref<1x2x128xf32, #tpu.memory_space<vmem>>, vector<1x2x128xf32>
    %37 = vector.shape_cast %36 : vector<1x2x128xf32> to vector<2x128xf32>
    %38 = vector.shape_cast %35 : vector<2x128xf32> to vector<1x2x128xf32>
    tpu.vector_store %arg7[%c0_15, %c0_16, %c0_17], %38 {strides = array<i32>} : memref<1x2x128xf32, #tpu.memory_space<vmem>>, vector<1x2x128xf32>,
    return
  }
  func.func @transform_0(%arg0: i32, %arg1: i32) -> (i32, i32, i32) {
    %c0_i32 = arith.constant 0 : i32
    %c0_i32_0 = arith.constant 0 : i32
    return %arg0, %c0_i32, %arg1 : i32, i32, i32
  }
  func.func @transform_1(%arg0: i32, %arg1: i32) -> (i32, i32, i32) {
    %c1_i32 = arith.constant 1 : i32
    %0 = arith.muli %arg0, %c1_i32 : i32
    %1 = arith.addi %0, %arg1 : i32
    %c0_i32 = arith.constant 0 : i32
    %c0_i32_0 = arith.constant 0 : i32
    %c0_i32_1 = arith.constant 0 : i32
    return %1, %c0_i32, %c0_i32_0 : i32, i32, i32
  }
  func.func @transform_2(%arg0: i32, %arg1: i32) -> (i32, i32, i32) {
    %c0_i32 = arith.constant 0 : i32
    %c0_i32_0 = arith.constant 0 : i32
    %c0_i32_1 = arith.constant 0 : i32
    return %arg0, %c0_i32, %c0_i32_0 : i32, i32, i32
  }
  func.func @transform_3(%arg0: i32, %arg1: i32) -> (i32, i32) {
    %c0_i32 = arith.constant 0 : i32
    %c0_i32_0 = arith.constant 0 : i32
    %c0_i32_1 = arith.constant 0 : i32
    return %c0_i32, %c0_i32_0 : i32, i32
  }
  func.func @transform_4(%arg0: i32, %arg1: i32) -> (i32, i32) {
    %c0_i32 = arith.constant 0 : i32
    %c0_i32_0 = arith.constant 0 : i32
    %c0_i32_1 = arith.constant 0 : i32
    return %c0_i32, %c0_i32_0 : i32, i32
  }
  func.func @transform_5(%arg0: i32, %arg1: i32) -> (i32, i32, i32) {
    %c0_i32 = arith.constant 0 : i32
    %c0_i32_0 = arith.constant 0 : i32
    return %arg0, %c0_i32, %arg1 : i32, i32, i32
  }
}

</mosaic_0001>

<llo_original>
// kernel: decoder1d_forward.11
$region0: #{decoder1d_forward.11}
  #allocation0 [shape = 'u32[]', space=smem, size = 0x4, offset = 0x4, fixed_abs, tag = 'smem constant byte address 0x4 - core index']
  #allocation1 [shape = 'u32[144,128]{1,0:T(1,128)}', space=vmem, size = 0x12000, scoped, tag = 'internal scratch']
  %s0 = inlined_call_operand.vmem [shape: bf16[2,16,8], index: 0, kind: input, shape index: {}]
  %s1 = inlined_call_operand.vmem [shape: bf16[32,16], index: 1, kind: input, shape index: {}]
  %s2 = inlined_call_operand.vmem [shape: f32[32,1], index: 2, kind: input, shape index: {}]
  %s3 = inlined_call_operand.vmem [shape: bf16[2,32,8], index: 3, kind: output, shape index: {}]
  %s4 = sld [smem:[#allocation0]]
  $region45: #{decoder1d_forward.11} parent=0
    _
  %s6 = ssub.s32 1, %s4
  %s7 = scalar_select 0, %s6, %s4
  loop: start=0, step=1, limit=4
  $region2: #{decoder1d_forward.11} parent=0 // loop_pre_header
    _
  $region3: #{decoder1d_forward.11} parent=0 // loop_header
    %s9 = sphi 0, %s13
    %p10 = scmp.ge.s32.totalorder %s9, 4
    %s16 = sphi 0, %s28
    %s17 = sphi 0, %s24
    %s18 = sphi 0, %s16
    %s19 = sphi 0, %s17
    %s20 = sphi 0, %s18
    %s21 = sphi 0, %s19
    %s33 = sphi 0, %s35
    %s36 = sphi 0, %s33
    %s37 = sphi 0, %s36
    %s53 = sphi 0, %s37
    %s57 = sphi 0, %s57
    %s59 = sphi 0, %s57
    %s60 = sphi 0, %s59
    %s74 = sphi 0, %s60
    %s78 = sphi 0, %s78
    %s80 = sphi 0, %s78
    %s81 = sphi 0, %s80
    %s95 = sphi 0, %s81
    %s103 = sphi 0, %s105
    %s106 = sphi 0, %s103
    %s107 = sphi 0, %s106
    %s123 = sphi 0, %s107
  $region4: #{decoder1d_forward.11} parent=0 // loop_header_branch
    %12 = sbr.rel (%p10) target = $region8
  $region5: #{decoder1d_forward.11} parent=0 // loop_body
    %s14 = ssub.s32 %s9, 1
    %s15 = ssub.s32 %s9, 2
    %s22 = sadd.s32 1, %s17
    %p23 = scmp.ge.s32.totalorder %s22, 1
    %s24 = scalar_select %p23, 0, %s22
    %s25 = sadd.s32 1, %s16
    %s26 = scalar_select %p23, %s25, %s16
    %p27 = scmp.ge.s32.totalorder %s26, 2
    %s28 = scalar_select %p27, 0, %s26
    %s29 = ssub.s32 %s16, %s28
    %s30 = ssub.s32 %s17, %s24
    %s31 = sor.u32 %s29, %s30
    %p32 = scmp.eq.s32.totalorder %s31, 0
    %s34 = sadd.s32 %s33, 1
    %s35 = scalar_select %p32, %s33, %s34
    %p38 = pneg %p32
    %p39 = scmp.eq.s32.totalorder %s9, 1
    %p40 = por %p38, %p39
    %p41 = scmp.ne.s32.totalorder %s33, %s36
    %p42 = scmp.eq.s32.totalorder %s9, 0
    %p43 = por %p41, %p42
    %p44 = scmp.ne.s32.totalorder %s33, %s36
    %p45 = scmp.eq.s32.totalorder %s14, 1
    %p46 = por %p44, %p45
    %p47 = scmp.ne.s32.totalorder %s36, %s37
    %p48 = scmp.eq.s32.totalorder %s14, 0
    %p49 = por %p47, %p48
    %p50 = scmp.ne.s32.totalorder %s36, %s37
    %p51 = scmp.eq.s32.totalorder %s15, 1
    %p52 = por %p50, %p51
    %p54 = scmp.ne.s32.totalorder %s37, %s53
    %p55 = scmp.eq.s32.totalorder %s15, 0
    %p56 = por %p54, %p55
    %s58 = sadd.s32 %s57, 1
    %p61 = scmp.eq.s32.totalorder %s9, 1
    %p62 = scmp.ne.s32.totalorder %s57, %s59
    %p63 = scmp.eq.s32.totalorder %s9, 0
    %p64 = por %p62, %p63
    %p65 = scmp.ne.s32.totalorder %s57, %s59
    %p66 = scmp.eq.s32.totalorder %s14, 1
    %p67 = por %p65, %p66
    %p68 = scmp.ne.s32.totalorder %s59, %s60
    %p69 = scmp.eq.s32.totalorder %s14, 0
    %p70 = por %p68, %p69
    %p71 = scmp.ne.s32.totalorder %s59, %s60
    %p72 = scmp.eq.s32.totalorder %s15, 1
    %p73 = por %p71, %p72
    %p75 = scmp.ne.s32.totalorder %s60, %s74
    %p76 = scmp.eq.s32.totalorder %s15, 0
    %p77 = por %p75, %p76
    %s79 = sadd.s32 %s78, 1
    %p82 = scmp.eq.s32.totalorder %s9, 1
    %p83 = scmp.ne.s32.totalorder %s78, %s80
    %p84 = scmp.eq.s32.totalorder %s9, 0
    %p85 = por %p83, %p84
    %p86 = scmp.ne.s32.totalorder %s78, %s80
    %p87 = scmp.eq.s32.totalorder %s14, 1
    %p88 = por %p86, %p87
    %p89 = scmp.ne.s32.totalorder %s80, %s81
    %p90 = scmp.eq.s32.totalorder %s14, 0
    %p91 = por %p89, %p90
    %p92 = scmp.ne.s32.totalorder %s80, %s81
    %p93 = scmp.eq.s32.totalorder %s15, 1
    %p94 = por %p92, %p93
    %p96 = scmp.ne.s32.totalorder %s81, %s95
    %p97 = scmp.eq.s32.totalorder %s15, 0
    %p98 = por %p96, %p97
    %s99 = ssub.s32 %s16, %s28
    %s100 = ssub.s32 %s17, %s24
    %s101 = sor.u32 %s99, %s100
    %p102 = scmp.eq.s32.totalorder %s101, 0
    %s104 = sadd.s32 %s103, 1
    %s105 = scalar_select %p102, %s103, %s104
    %p108 = pneg %p102
    %p109 = scmp.eq.s32.totalorder %s9, 1
    %p110 = por %p108, %p109
    %p111 = scmp.ne.s32.totalorder %s103, %s106
    %p112 = scmp.eq.s32.totalorder %s9, 0
    %p113 = por %p111, %p112
    %p114 = scmp.ne.s32.totalorder %s103, %s106
    %p115 = scmp.eq.s32.totalorder %s14, 1
    %p116 = por %p114, %p115
    %p117 = scmp.ne.s32.totalorder %s106, %s107
    %p118 = scmp.eq.s32.totalorder %s14, 0
    %p119 = por %p117, %p118
    %p120 = scmp.ne.s32.totalorder %s106, %s107
    %p121 = scmp.eq.s32.totalorder %s15, 1
    %p122 = por %p120, %p121
    %p124 = scmp.ne.s32.totalorder %s107, %s123
    %p125 = scmp.eq.s32.totalorder %s15, 0
    %p126 = por %p124, %p125
    %p127 = scmp.le.s32.totalorder 1, %s9
    %p128 = scmp.lt.s32.totalorder %s9, 3
    %p129 = pnand %p127, %p128
    %p130 = pneg %p129
    // Predicated region
    $region9: #{decoder1d_forward.11} parent=5 // pred_check
      _
    $region10: #{decoder1d_forward.11} parent=5 // pred_check_branch
      %132 = sbr.rel (%p129) target = $region12
    $region11: #{decoder1d_forward.11} parent=5 // pred_region
      %s133 = ssub.s32 %s9, 1
      // Predicated region
      $region13: #{decoder1d_forward.11} parent=11 // pred_check
        %p134 = pneg %p70
      $region14: #{decoder1d_forward.11} parent=11 // pred_check_branch
        %136 = sbr.rel (%p134) target = $region16
      $region15: #{decoder1d_forward.11} parent=11 // pred_region
        _
      $region16: #{decoder1d_forward.11} parent=11 // pred_fallthru
        _
      // Predicated region
      $region17: #{decoder1d_forward.11} parent=11 // pred_check
        %p137 = pneg %p91
      $region18: #{decoder1d_forward.11} parent=11 // pred_check_branch
        %139 = sbr.rel (%p137) target = $region20
      $region19: #{decoder1d_forward.11} parent=11 // pred_region
        _
      $region20: #{decoder1d_forward.11} parent=11 // pred_fallthru
        _
    $region12: #{decoder1d_forward.11} parent=5 // pred_fallthru
      _
    %p140 = scmp.lt.s32.totalorder %s9, 2
    // Predicated region
    $region21: #{decoder1d_forward.11} parent=5 // pred_check
      %p141 = pneg %p140
    $region22: #{decoder1d_forward.11} parent=5 // pred_check_branch
      %143 = sbr.rel (%p141) target = $region24
    $region23: #{decoder1d_forward.11} parent=5 // pred_region
      // Predicated region
      $region25: #{decoder1d_forward.11} parent=23 // pred_check
        %p144 = pneg %p43
      $region26: #{decoder1d_forward.11} parent=23 // pred_check_branch
        %146 = sbr.rel (%p144) target = $region28
      $region27: #{decoder1d_forward.11} parent=23 // pred_region
        %p147 = scmp.lt.s32.totalorder %s16, 1
        %s148 = scalar_select %p147, %s16, 1
        %p149 = scmp.lt.s32.totalorder %s17, 0
        %s150 = scalar_select %p149, %s17, 0
        %s151 = smul.addr %s148, 2
        %s152 = sadd.s32 %s150, %s151
        %s153 = smul.addr %s152, 4
        %s154 = scalar_lea.vmem %s0, %s153
      $region28: #{decoder1d_forward.11} parent=23 // pred_fallthru
        _
    $region24: #{decoder1d_forward.11} parent=5 // pred_fallthru
      _
    %p155 = scmp.le.s32.totalorder 1, %s9
    %p156 = scmp.lt.s32.totalorder %s9, 3
    %p157 = pnand %p155, %p156
    %p158 = pneg %p157
    // Predicated region
    $region29: #{decoder1d_forward.11} parent=5 // pred_check
      _
    $region30: #{decoder1d_forward.11} parent=5 // pred_check_branch
      %160 = sbr.rel (%p157) target = $region32
    $region31: #{decoder1d_forward.11} parent=5 // pred_region
      %s161 = ssub.s32 %s9, 1
      %p162 = scmp.lt.s32.totalorder %s18, 1
      %s163 = scalar_select %p162, %s18, 1
      %p164 = scmp.lt.s32.totalorder %s19, 0
      %s165 = scalar_select %p164, %s19, 0
      %s166 = smul.addr %s163, 2
      %s167 = sadd.s32 %s165, %s166
      %s168 = smul.addr %s167, 4
      %s169 = scalar_lea.vmem %s0, %s168
      %p170 = pneg %p49
      %p171 = pneg %p46
      %p172 = pneg %p70
      %p173 = pneg %p67
      %p174 = pneg %p91
      %p175 = pneg %p88
      %p176 = pneg %p119
      %p177 = pneg %p116
      %p178 = scmp.lt.s32.totalorder %s18, 1
      %s179 = scalar_select %p178, %s18, 1
      %p180 = scmp.lt.s32.totalorder %s19, 0
      %s181 = scalar_select %p180, %s19, 0
      %s182 = smul.addr %s179, 4
      %s183 = sadd.s32 %s181, %s182
      %s184 = smul.addr %s183, 4
      %s185 = scalar_lea.vmem %s3, %s184
      %p186 = scmp.lt.s32.totalorder %s18, 1
      %s187 = scalar_select %p186, %s18, 1
      %p188 = scmp.lt.s32.totalorder %s19, 0
      %s189 = scalar_select %p188, %s19, 0
      %s190 = smul.addr %s187, 2
      %s191 = sadd.s32 %s189, %s190
      %s192 = smul.addr %s191, 4
      %s193 = scalar_lea.vmem %s0, %s192
      %p194 = scmp.lt.s32.totalorder %s18, 1
      %s195 = scalar_select %p194, %s18, 1
      %p196 = scmp.lt.s32.totalorder %s19, 0
      %s197 = scalar_select %p196, %s19, 0
      %s198 = smul.addr %s195, 4
      %s199 = sadd.s32 %s197, %s198
      %s200 = smul.addr %s199, 4
      %s201 = scalar_lea.vmem %s3, %s200
      %v203 = vld [vmem:[%s1] sm:$0xf]
      %v204 = vld [vmem:[%s1 + $0x4] sm:$0xf]
      %v205 = vld [vmem:[%s1 + $0x8] sm:$0xf]
      %v206 = vld [vmem:[%s1 + $0xc] sm:$0xf]
      %v207 = vld [vmem:[%s193] sm:$0xf]
      %v208 = vld [vmem:[%s193 + $0x4] sm:$0xf]
      %v209 = vld [vmem:[%s2] sm:$0xff]
      %v210 = vld [vmem:[%s2 + $0x8] sm:$0xff]
      %v211 = vld [vmem:[%s2 + $0x10] sm:$0xff]
      %v212 = vld [vmem:[%s2 + $0x18] sm:$0xff]
      %214 = vset.pattern.permute.xlu0 0
      %215 = vperm.xlu0 %214, %v209
      %v216 = vpop.permute.xlu0 %215
      %219 = vset.pattern.permute.xlu0 0
      %220 = vperm.xlu0 %219, %v210
      %v221 = vpop.permute.xlu0 %220
      %224 = vset.pattern.permute.xlu0 0
      %225 = vperm.xlu0 %224, %v211
      %v226 = vpop.permute.xlu0 %225
      %229 = vset.pattern.permute.xlu0 0
      %230 = vperm.xlu0 %229, %v212
      %v231 = vpop.permute.xlu0 %230
      %v237 = vunpack.c.l.b16 %v203
      %v238 = vunpack.c.l.b16 %v204
      %v239 = vunpack.c.l.b16 %v205
      %v240 = vunpack.c.l.b16 %v206
      %v241 = vpack.c.b16 %v238, %v237
      %v242 = vpack.c.b16 %v240, %v239
      %v245 = vunpack.c.l.b16 %v207
      %v246 = vunpack.c.l.b16 %v208
      %v247 = vpack.c.b16 %v246, %v245
      %vm249 = vcmask 130048
      %v251 = vsel %vm249, %v241, 0
      %v254 = vsel %vm249, %v242, 0
      %256 = vmatprep.subr.bf16.mxu0 0
      %257 = vmatpush1.bf16.msra.mxu0 %v247
      %258 = vmatprep.subr.bf16.mxu0 0
      %259 = vmatpush1.bf16.msra.mxu0 0
      %260 = vmatprep.subr.bf16.mxu0 0
      %261 = vmatpush1.bf16.msra.mxu0 0
      %262 = vmatprep.subr.bf16.mxu0 0
      %263 = vmatpush1.bf16.msra.mxu0 0
      %264 = vmatprep.subr.bf16.mxu0 0
      %265 = vmatpush1.bf16.msra.mxu0 0
      %266 = vmatprep.subr.bf16.mxu0 0
      %267 = vmatpush1.bf16.msra.mxu0 0
      %268 = vmatprep.subr.bf16.mxu0 0
      %269 = vmatpush1.bf16.msra.mxu0 0
      %270 = vmatprep.subr.bf16.mxu0 0
      %271 = vmatpush1.bf16.msra.mxu0 0
      %272 = vmatprep.subr.bf16.mxu0 0
      %273 = vmatpush1.bf16.msra.mxu0 0
      %274 = vmatprep.subr.bf16.mxu0 0
      %275 = vmatpush1.bf16.msra.mxu0 0
      %276 = vmatprep.subr.bf16.mxu0 0
      %277 = vmatpush1.bf16.msra.mxu0 0
      %278 = vmatprep.subr.bf16.mxu0 0
      %279 = vmatpush1.bf16.msra.mxu0 0
      %280 = vmatprep.subr.bf16.mxu0 0
      %281 = vmatpush1.bf16.msra.mxu0 0
      %282 = vmatprep.subr.bf16.mxu0 0
      %283 = vmatpush1.bf16.msra.mxu0 0
      %284 = vmatprep.subr.bf16.mxu0 0
      %285 = vmatpush1.bf16.msra.mxu0 0
      %286 = vmatprep.subr.bf16.mxu0 0
      %287 = vmatpush1.bf16.msra.mxu0 0
      %288 = vmatprep.mubr.bf16.mxu0 0
      %289 = vmatmul.mubr.bf16.gmra.mrb[0].mxu0 %v251
      %v290 = vpop.f32.mrb[0].mxu0
      %v291 = vadd.f32 %v216, %v290
      %v292 = vpop.f32.mrb[0].mxu0
      %v293 = vpop.f32.mrb[0].mxu0
      %v294 = vadd.f32 %v221, %v293
      %v295 = vpop.f32.mrb[0].mxu0
      %296 = vmatprep.mubr.bf16.mxu0 0
      %297 = vmatmul.mubr.bf16.gmra.mrb[0].mxu0 %v254
      %v298 = vpop.f32.mrb[0].mxu0
      %v299 = vadd.f32 %v226, %v298
      %v300 = vpop.f32.mrb[0].mxu0
      %v301 = vpop.f32.mrb[0].mxu0
      %v302 = vadd.f32 %v231, %v301
      %v303 = vpop.f32.mrb[0].mxu0
      %304 = vdwg.mxu0
      %v305 = vpack.c.bf16 %v294, %v291
      %v306 = vpack.c.bf16 %v302, %v299
      %v309 = vunpack.c.l.b16 %v305
      %v310 = vunpack.c.h.b16 %v305
      %v311 = vunpack.c.l.b16 %v306
      %v312 = vunpack.c.h.b16 %v306
      %v313 = vpack.c.b16 %v309, %v309
      %v314 = vpack.c.b16 %v310, %v310
      %v315 = vpack.c.b16 %v311, %v311
      %v316 = vpack.c.b16 %v312, %v312
      %vm321 = vcmask 60416
      %322 = vst.msk [vmem:[%s201] sm:$0xf] %vm321, %v313
      %323 = vst.msk [vmem:[%s201 + $0x4] sm:$0xf] %vm321, %v314
      %324 = vst.msk [vmem:[%s201 + $0x8] sm:$0xf] %vm321, %v315
      %325 = vst.msk [vmem:[%s201 + $0xc] sm:$0xf] %vm321, %v316
      %p326 = scmp.lt.s32.totalorder %s18, 1
      %s327 = scalar_select %p326, %s18, 1
      %p328 = scmp.lt.s32.totalorder %s19, 0
      %s329 = scalar_select %p328, %s19, 0
      %s330 = smul.addr %s327, 4
      %s331 = sadd.s32 %s329, %s330
      %s332 = smul.addr %s331, 4
      %s333 = scalar_lea.vmem %s3, %s332
      // Predicated region
      $region33: #{decoder1d_forward.11} parent=31 // pred_check
        %p334 = pneg %p116
      $region34: #{decoder1d_forward.11} parent=31 // pred_check_branch
        %336 = sbr.rel (%p334) target = $region36
      $region35: #{decoder1d_forward.11} parent=31 // pred_region
        _
      $region36: #{decoder1d_forward.11} parent=31 // pred_fallthru
        _
    $region32: #{decoder1d_forward.11} parent=5 // pred_fallthru
      _
    %p337 = scmp.le.s32.totalorder 2, %s9
    // Predicated region
    $region37: #{decoder1d_forward.11} parent=5 // pred_check
      %p338 = pneg %p337
    $region38: #{decoder1d_forward.11} parent=5 // pred_check_branch
      %340 = sbr.rel (%p338) target = $region40
    $region39: #{decoder1d_forward.11} parent=5 // pred_region
      %s341 = ssub.s32 %s9, 2
      // Predicated region
      $region41: #{decoder1d_forward.11} parent=39 // pred_check
        %p342 = pneg %p122
      $region42: #{decoder1d_forward.11} parent=39 // pred_check_branch
        %344 = sbr.rel (%p342) target = $region44
      $region43: #{decoder1d_forward.11} parent=39 // pred_region
        %p345 = scmp.lt.s32.totalorder %s20, 1
        %s346 = scalar_select %p345, %s20, 1
        %p347 = scmp.lt.s32.totalorder %s21, 0
        %s348 = scalar_select %p347, %s21, 0
        %s349 = smul.addr %s346, 4
        %s350 = sadd.s32 %s348, %s349
        %s351 = smul.addr %s350, 4
        %s352 = scalar_lea.vmem %s3, %s351
      $region44: #{decoder1d_forward.11} parent=39 // pred_fallthru
        _
    $region40: #{decoder1d_forward.11} parent=5 // pred_fallthru
      _
  $region6: #{decoder1d_forward.11} parent=0 // loop_footer
    %s13 = sadd.s32 1, %s9
  $region7: #{decoder1d_forward.11} parent=0 // loop_footer_branch
    %8 = sbr.rel target = $region3
  $region8: #{decoder1d_forward.11} parent=0 // loop_exit
    _

// kernel: decoder1d_forward.9
$region0: #{decoder1d_forward.9}
  #allocation0 [shape = 'u32[]', space=smem, size = 0x4, offset = 0x4, fixed_abs, tag = 'smem constant byte address 0x4 - core index']
  #allocation1 [shape = 'u32[144,128]{1,0:T(1,128)}', space=vmem, size = 0x12000, scoped, tag = 'internal scratch']
  %s0 = inlined_call_operand.vmem [shape: bf16[2,8,8], index: 0, kind: input, shape index: {}]
  %s1 = inlined_call_operand.vmem [shape: bf16[2,8,2], index: 1, kind: input, shape index: {}]
  %s2 = inlined_call_operand.vmem [shape: bf16[16,24], index: 2, kind: input, shape index: {}]
  %s3 = inlined_call_operand.vmem [shape: f32[16,1], index: 3, kind: input, shape index: {}]
  %s4 = inlined_call_operand.vmem [shape: bf16[2,16,8], index: 4, kind: output, shape index: {}]
  %s5 = sld [smem:[#allocation0]]
  $region49: #{decoder1d_forward.9} parent=0
    _
  %s7 = ssub.s32 1, %s5
  %s8 = scalar_select 0, %s7, %s5
  loop: start=0, step=1, limit=4
  $region2: #{decoder1d_forward.9} parent=0 // loop_pre_header
    _
  $region3: #{decoder1d_forward.9} parent=0 // loop_header
    %s10 = sphi 0, %s14
    %p11 = scmp.ge.s32.totalorder %s10, 4
    %s17 = sphi 0, %s29
    %s18 = sphi 0, %s25
    %s19 = sphi 0, %s17
    %s20 = sphi 0, %s18
    %s21 = sphi 0, %s19
    %s22 = sphi 0, %s20
    %s34 = sphi 0, %s36
    %s37 = sphi 0, %s34
    %s38 = sphi 0, %s37
    %s54 = sphi 0, %s38
    %s62 = sphi 0, %s64
    %s65 = sphi 0, %s62
    %s66 = sphi 0, %s65
    %s82 = sphi 0, %s66
    %s86 = sphi 0, %s86
    %s88 = sphi 0, %s86
    %s89 = sphi 0, %s88
    %s103 = sphi 0, %s89
    %s107 = sphi 0, %s107
    %s109 = sphi 0, %s107
    %s110 = sphi 0, %s109
    %s124 = sphi 0, %s110
    %s132 = sphi 0, %s134
    %s135 = sphi 0, %s132
    %s136 = sphi 0, %s135
    %s152 = sphi 0, %s136
  $region4: #{decoder1d_forward.9} parent=0 // loop_header_branch
    %13 = sbr.rel (%p11) target = $region8
  $region5: #{decoder1d_forward.9} parent=0 // loop_body
    %s15 = ssub.s32 %s10, 1
    %s16 = ssub.s32 %s10, 2
    %s23 = sadd.s32 1, %s18
    %p24 = scmp.ge.s32.totalorder %s23, 1
    %s25 = scalar_select %p24, 0, %s23
    %s26 = sadd.s32 1, %s17
    %s27 = scalar_select %p24, %s26, %s17
    %p28 = scmp.ge.s32.totalorder %s27, 2
    %s29 = scalar_select %p28, 0, %s27
    %s30 = ssub.s32 %s17, %s29
    %s31 = ssub.s32 %s18, %s25
    %s32 = sor.u32 %s30, %s31
    %p33 = scmp.eq.s32.totalorder %s32, 0
    %s35 = sadd.s32 %s34, 1
    %s36 = scalar_select %p33, %s34, %s35
    %p39 = pneg %p33
    %p40 = scmp.eq.s32.totalorder %s10, 1
    %p41 = por %p39, %p40
    %p42 = scmp.ne.s32.totalorder %s34, %s37
    %p43 = scmp.eq.s32.totalorder %s10, 0
    %p44 = por %p42, %p43
    %p45 = scmp.ne.s32.totalorder %s34, %s37
    %p46 = scmp.eq.s32.totalorder %s15, 1
    %p47 = por %p45, %p46
    %p48 = scmp.ne.s32.totalorder %s37, %s38
    %p49 = scmp.eq.s32.totalorder %s15, 0
    %p50 = por %p48, %p49
    %p51 = scmp.ne.s32.totalorder %s37, %s38
    %p52 = scmp.eq.s32.totalorder %s16, 1
    %p53 = por %p51, %p52
    %p55 = scmp.ne.s32.totalorder %s38, %s54
    %p56 = scmp.eq.s32.totalorder %s16, 0
    %p57 = por %p55, %p56
    %s58 = sadd.s32 %s17, %s18
    %s59 = sadd.s32 %s29, %s25
    %s60 = ssub.s32 %s58, %s59
    %p61 = scmp.eq.s32.totalorder %s60, 0
    %s63 = sadd.s32 %s62, 1
    %s64 = scalar_select %p61, %s62, %s63
    %p67 = pneg %p61
    %p68 = scmp.eq.s32.totalorder %s10, 1
    %p69 = por %p67, %p68
    %p70 = scmp.ne.s32.totalorder %s62, %s65
    %p71 = scmp.eq.s32.totalorder %s10, 0
    %p72 = por %p70, %p71
    %p73 = scmp.ne.s32.totalorder %s62, %s65
    %p74 = scmp.eq.s32.totalorder %s15, 1
    %p75 = por %p73, %p74
    %p76 = scmp.ne.s32.totalorder %s65, %s66
    %p77 = scmp.eq.s32.totalorder %s15, 0
    %p78 = por %p76, %p77
    %p79 = scmp.ne.s32.totalorder %s65, %s66
    %p80 = scmp.eq.s32.totalorder %s16, 1
    %p81 = por %p79, %p80
    %p83 = scmp.ne.s32.totalorder %s66, %s82
    %p84 = scmp.eq.s32.totalorder %s16, 0
    %p85 = por %p83, %p84
    %s87 = sadd.s32 %s86, 1
    %p90 = scmp.eq.s32.totalorder %s10, 1
    %p91 = scmp.ne.s32.totalorder %s86, %s88
    %p92 = scmp.eq.s32.totalorder %s10, 0
    %p93 = por %p91, %p92
    %p94 = scmp.ne.s32.totalorder %s86, %s88
    %p95 = scmp.eq.s32.totalorder %s15, 1
    %p96 = por %p94, %p95
    %p97 = scmp.ne.s32.totalorder %s88, %s89
    %p98 = scmp.eq.s32.totalorder %s15, 0
    %p99 = por %p97, %p98
    %p100 = scmp.ne.s32.totalorder %s88, %s89
    %p101 = scmp.eq.s32.totalorder %s16, 1
    %p102 = por %p100, %p101
    %p104 = scmp.ne.s32.totalorder %s89, %s103
    %p105 = scmp.eq.s32.totalorder %s16, 0
    %p106 = por %p104, %p105
    %s108 = sadd.s32 %s107, 1
    %p111 = scmp.eq.s32.totalorder %s10, 1
    %p112 = scmp.ne.s32.totalorder %s107, %s109
    %p113 = scmp.eq.s32.totalorder %s10, 0
    %p114 = por %p112, %p113
    %p115 = scmp.ne.s32.totalorder %s107, %s109
    %p116 = scmp.eq.s32.totalorder %s15, 1
    %p117 = por %p115, %p116
    %p118 = scmp.ne.s32.totalorder %s109, %s110
    %p119 = scmp.eq.s32.totalorder %s15, 0
    %p120 = por %p118, %p119
    %p121 = scmp.ne.s32.totalorder %s109, %s110
    %p122 = scmp.eq.s32.totalorder %s16, 1
    %p123 = por %p121, %p122
    %p125 = scmp.ne.s32.totalorder %s110, %s124
    %p126 = scmp.eq.s32.totalorder %s16, 0
    %p127 = por %p125, %p126
    %s128 = ssub.s32 %s17, %s29
    %s129 = ssub.s32 %s18, %s25
    %s130 = sor.u32 %s128, %s129
    %p131 = scmp.eq.s32.totalorder %s130, 0
    %s133 = sadd.s32 %s132, 1
    %s134 = scalar_select %p131, %s132, %s133
    %p137 = pneg %p131
    %p138 = scmp.eq.s32.totalorder %s10, 1
    %p139 = por %p137, %p138
    %p140 = scmp.ne.s32.totalorder %s132, %s135
    %p141 = scmp.eq.s32.totalorder %s10, 0
    %p142 = por %p140, %p141
    %p143 = scmp.ne.s32.totalorder %s132, %s135
    %p144 = scmp.eq.s32.totalorder %s15, 1
    %p145 = por %p143, %p144
    %p146 = scmp.ne.s32.totalorder %s135, %s136
    %p147 = scmp.eq.s32.totalorder %s15, 0
    %p148 = por %p146, %p147
    %p149 = scmp.ne.s32.totalorder %s135, %s136
    %p150 = scmp.eq.s32.totalorder %s16, 1
    %p151 = por %p149, %p150
    %p153 = scmp.ne.s32.totalorder %s136, %s152
    %p154 = scmp.eq.s32.totalorder %s16, 0
    %p155 = por %p153, %p154
    %p156 = scmp.le.s32.totalorder 1, %s10
    %p157 = scmp.lt.s32.totalorder %s10, 3
    %p158 = pnand %p156, %p157
    %p159 = pneg %p158
    // Predicated region
    $region9: #{decoder1d_forward.9} parent=5 // pred_check
      _
    $region10: #{decoder1d_forward.9} parent=5 // pred_check_branch
      %161 = sbr.rel (%p158) target = $region12
    $region11: #{decoder1d_forward.9} parent=5 // pred_region
      %s162 = ssub.s32 %s10, 1
      // Predicated region
      $region13: #{decoder1d_forward.9} parent=11 // pred_check
        %p163 = pneg %p99
      $region14: #{decoder1d_forward.9} parent=11 // pred_check_branch
        %165 = sbr.rel (%p163) target = $region16
      $region15: #{decoder1d_forward.9} parent=11 // pred_region
        _
      $region16: #{decoder1d_forward.9} parent=11 // pred_fallthru
        _
      // Predicated region
      $region17: #{decoder1d_forward.9} parent=11 // pred_check
        %p166 = pneg %p120
      $region18: #{decoder1d_forward.9} parent=11 // pred_check_branch
        %168 = sbr.rel (%p166) target = $region20
      $region19: #{decoder1d_forward.9} parent=11 // pred_region
        _
      $region20: #{decoder1d_forward.9} parent=11 // pred_fallthru
        _
    $region12: #{decoder1d_forward.9} parent=5 // pred_fallthru
      _
    %p169 = scmp.lt.s32.totalorder %s10, 2
    // Predicated region
    $region21: #{decoder1d_forward.9} parent=5 // pred_check
      %p170 = pneg %p169
    $region22: #{decoder1d_forward.9} parent=5 // pred_check_branch
      %172 = sbr.rel (%p170) target = $region24
    $region23: #{decoder1d_forward.9} parent=5 // pred_region
      // Predicated region
      $region25: #{decoder1d_forward.9} parent=23 // pred_check
        %p173 = pneg %p44
      $region26: #{decoder1d_forward.9} parent=23 // pred_check_branch
        %175 = sbr.rel (%p173) target = $region28
      $region27: #{decoder1d_forward.9} parent=23 // pred_region
        %p176 = scmp.lt.s32.totalorder %s17, 1
        %s177 = scalar_select %p176, %s17, 1
        %p178 = scmp.lt.s32.totalorder %s18, 0
        %s179 = scalar_select %p178, %s18, 0
        %s180 = sadd.s32 %s179, %s177
        %s181 = smul.addr %s180, 4
        %s182 = scalar_lea.vmem %s0, %s181
      $region28: #{decoder1d_forward.9} parent=23 // pred_fallthru
        _
      // Predicated region
      $region29: #{decoder1d_forward.9} parent=23 // pred_check
        %p183 = pneg %p72
      $region30: #{decoder1d_forward.9} parent=23 // pred_check_branch
        %185 = sbr.rel (%p183) target = $region32
      $region31: #{decoder1d_forward.9} parent=23 // pred_region
        %s186 = sadd.s32 %s17, %s18
        %p187 = scmp.lt.s32.totalorder %s186, 1
        %s188 = scalar_select %p187, %s186, 1
        %s189 = smul.addr %s188, 4
        %s190 = scalar_lea.vmem %s1, %s189
        %s191 = sadd.s32 %s17, %s18
      $region32: #{decoder1d_forward.9} parent=23 // pred_fallthru
        _
    $region24: #{decoder1d_forward.9} parent=5 // pred_fallthru
      _
    %p192 = scmp.le.s32.totalorder 1, %s10
    %p193 = scmp.lt.s32.totalorder %s10, 3
    %p194 = pnand %p192, %p193
    %p195 = pneg %p194
    // Predicated region
    $region33: #{decoder1d_forward.9} parent=5 // pred_check
      _
    $region34: #{decoder1d_forward.9} parent=5 // pred_check_branch
      %197 = sbr.rel (%p194) target = $region36
    $region35: #{decoder1d_forward.9} parent=5 // pred_region
      %s198 = ssub.s32 %s10, 1
      %p199 = scmp.lt.s32.totalorder %s19, 1
      %s200 = scalar_select %p199, %s19, 1
      %p201 = scmp.lt.s32.totalorder %s20, 0
      %s202 = scalar_select %p201, %s20, 0
      %s203 = sadd.s32 %s202, %s200
      %s204 = smul.addr %s203, 4
      %s205 = scalar_lea.vmem %s0, %s204
      %p206 = pneg %p50
      %p207 = pneg %p47
      %s208 = sadd.s32 %s19, %s20
      %p209 = scmp.lt.s32.totalorder %s208, 1
      %s210 = scalar_select %p209, %s208, 1
      %s211 = smul.addr %s210, 4
      %s212 = scalar_lea.vmem %s1, %s211
      %p213 = pneg %p78
      %p214 = pneg %p75
      %p215 = pneg %p99
      %p216 = pneg %p96
      %p217 = pneg %p120
      %p218 = pneg %p117
      %p219 = pneg %p148
      %p220 = pneg %p145
      %p221 = scmp.lt.s32.totalorder %s19, 1
      %s222 = scalar_select %p221, %s19, 1
      %p223 = scmp.lt.s32.totalorder %s20, 0
      %s224 = scalar_select %p223, %s20, 0
      %s225 = smul.addr %s222, 2
      %s226 = sadd.s32 %s224, %s225
      %s227 = smul.addr %s226, 4
      %s228 = scalar_lea.vmem %s4, %s227
      %p229 = scmp.lt.s32.totalorder %s19, 1
      %s230 = scalar_select %p229, %s19, 1
      %p231 = scmp.lt.s32.totalorder %s20, 0
      %s232 = scalar_select %p231, %s20, 0
      %s233 = sadd.s32 %s232, %s230
      %s234 = smul.addr %s233, 4
      %s235 = scalar_lea.vmem %s0, %s234
      %s236 = sadd.s32 %s19, %s20
      %p237 = scmp.lt.s32.totalorder %s236, 1
      %s238 = scalar_select %p237, %s236, 1
      %s239 = smul.addr %s238, 4
      %s240 = scalar_lea.vmem %s1, %s239
      %s241 = sadd.s32 %s19, %s20
      %p242 = scmp.lt.s32.totalorder %s19, 1
      %s243 = scalar_select %p242, %s19, 1
      %p244 = scmp.lt.s32.totalorder %s20, 0
      %s245 = scalar_select %p244, %s20, 0
      %s246 = smul.addr %s243, 2
      %s247 = sadd.s32 %s245, %s246
      %s248 = smul.addr %s247, 4
      %s249 = scalar_lea.vmem %s4, %s248
      %v251 = vld [vmem:[%s235] sm:$0xf]
      %v252 = vld [vmem:[%s240] sm:$0xf]
      %v254 = vunpack.c.l.b16 %v251
      %v255 = vpack.c.b16 %v254, %v254
      %256 = vrot.lane.b32.xlu0 %v255, 1
      %v257 = vpop.permute.xlu0 %256
      %vm258 = vcmask 7168
      %v261 = vsel %vm258, %v252, %v257
      %262 = vrot.lane.b32.xlu0 %v255, 127
      %v263 = vpop.permute.xlu0 %262
      %v265 = vunpack.c.l.b16 %v252
      %v266 = vpack.c.b16 %v265, %v265
      %267 = vrot.lane.b32.xlu0 %v266, 6
      %v268 = vpop.permute.xlu0 %267
      %vm269 = vcmask 56320
      %v272 = vsel %vm269, %v263, %v268
      %vm273 = vcmask 1043456
      %v275 = vsel %vm273, %v261, %v255
      %v277 = vld [vmem:[%s2] sm:$0xf]
      %v278 = vld [vmem:[%s2 + $0x4] sm:$0xf]
      %v279 = vld [vmem:[%s3] sm:$0xff]
      %v280 = vld [vmem:[%s3 + $0x8] sm:$0xff]
      %282 = vset.pattern.permute.xlu0 0
      %283 = vperm.xlu0 %282, %v279
      %v284 = vpop.permute.xlu0 %283
      %287 = vset.pattern.permute.xlu0 0
      %288 = vperm.xlu0 %287, %v280
      %v289 = vpop.permute.xlu0 %288
      %v293 = vunpack.c.l.b16 %v277
      %v294 = vunpack.c.l.b16 %v278
      %v295 = vpack.c.b16 %v294, %v293
      %vm296 = vcmask 195584
      %v298 = vsel %vm296, %v295, 0
      %v300 = vsel %vm273, %v272, 0
      %302 = vmatprep.subr.bf16.mxu0 0
      %303 = vmatpush1.bf16.msra.mxu0 %v275
      %304 = vmatprep.subr.bf16.mxu0 0
      %305 = vmatpush1.bf16.msra.mxu0 %v300
      %306 = vmatprep.subr.bf16.mxu0 0
      %307 = vmatpush1.bf16.msra.mxu0 0
      %308 = vmatprep.subr.bf16.mxu0 0
      %309 = vmatpush1.bf16.msra.mxu0 0
      %310 = vmatprep.subr.bf16.mxu0 0
      %311 = vmatpush1.bf16.msra.mxu0 0
      %312 = vmatprep.subr.bf16.mxu0 0
      %313 = vmatpush1.bf16.msra.mxu0 0
      %314 = vmatprep.subr.bf16.mxu0 0
      %315 = vmatpush1.bf16.msra.mxu0 0
      %316 = vmatprep.subr.bf16.mxu0 0
      %317 = vmatpush1.bf16.msra.mxu0 0
      %318 = vmatprep.subr.bf16.mxu0 0
      %319 = vmatpush1.bf16.msra.mxu0 0
      %320 = vmatprep.subr.bf16.mxu0 0
      %321 = vmatpush1.bf16.msra.mxu0 0
      %322 = vmatprep.subr.bf16.mxu0 0
      %323 = vmatpush1.bf16.msra.mxu0 0
      %324 = vmatprep.subr.bf16.mxu0 0
      %325 = vmatpush1.bf16.msra.mxu0 0
      %326 = vmatprep.subr.bf16.mxu0 0
      %327 = vmatpush1.bf16.msra.mxu0 0
      %328 = vmatprep.subr.bf16.mxu0 0
      %329 = vmatpush1.bf16.msra.mxu0 0
      %330 = vmatprep.subr.bf16.mxu0 0
      %331 = vmatpush1.bf16.msra.mxu0 0
      %332 = vmatprep.subr.bf16.mxu0 0
      %333 = vmatpush1.bf16.msra.mxu0 0
      %334 = vmatprep.mubr.bf16.mxu0 0
      %335 = vmatmul.mubr.bf16.gmra.mrb[0].mxu0 %v298
      %v336 = vpop.f32.mrb[0].mxu0
      %v337 = vadd.f32 %v284, %v336
      %v338 = vpop.f32.mrb[0].mxu0
      %v339 = vpop.f32.mrb[0].mxu0
      %v340 = vadd.f32 %v289, %v339
      %v341 = vpop.f32.mrb[0].mxu0
      %342 = vdwg.mxu0
      %v343 = vpack.c.bf16 %v340, %v337
      %v345 = vunpack.c.l.b16 %v343
      %v346 = vunpack.c.h.b16 %v343
      %v347 = vpack.c.b16 %v345, %v345
      %v348 = vpack.c.b16 %v346, %v346
      %vm351 = vcmask 60416
      %352 = vst.msk [vmem:[%s249] sm:$0xf] %vm351, %v347
      %353 = vst.msk [vmem:[%s249 + $0x4] sm:$0xf] %vm351, %v348
      %p354 = scmp.lt.s32.totalorder %s19, 1
      %s355 = scalar_select %p354, %s19, 1
      %p356 = scmp.lt.s32.totalorder %s20, 0
      %s357 = scalar_select %p356, %s20, 0
      %s358 = smul.addr %s355, 2
      %s359 = sadd.s32 %s357, %s358
      %s360 = smul.addr %s359, 4
      %s361 = scalar_lea.vmem %s4, %s360
      // Predicated region
      $region37: #{decoder1d_forward.9} parent=35 // pred_check
        %p362 = pneg %p145
      $region38: #{decoder1d_forward.9} parent=35 // pred_check_branch
        %364 = sbr.rel (%p362) target = $region40
      $region39: #{decoder1d_forward.9} parent=35 // pred_region
        _
      $region40: #{decoder1d_forward.9} parent=35 // pred_fallthru
        _
    $region36: #{decoder1d_forward.9} parent=5 // pred_fallthru
      _
    %p365 = scmp.le.s32.totalorder 2, %s10
    // Predicated region
    $region41: #{decoder1d_forward.9} parent=5 // pred_check
      %p366 = pneg %p365
    $region42: #{decoder1d_forward.9} parent=5 // pred_check_branch
      %368 = sbr.rel (%p366) target = $region44
    $region43: #{decoder1d_forward.9} parent=5 // pred_region
      %s369 = ssub.s32 %s10, 2
      // Predicated region
      $region45: #{decoder1d_forward.9} parent=43 // pred_check
        %p370 = pneg %p151
      $region46: #{decoder1d_forward.9} parent=43 // pred_check_branch
        %372 = sbr.rel (%p370) target = $region48
      $region47: #{decoder1d_forward.9} parent=43 // pred_region
        %p373 = scmp.lt.s32.totalorder %s21, 1
        %s374 = scalar_select %p373, %s21, 1
        %p375 = scmp.lt.s32.totalorder %s22, 0
        %s376 = scalar_select %p375, %s22, 0
        %s377 = smul.addr %s374, 2
        %s378 = sadd.s32 %s376, %s377
        %s379 = smul.addr %s378, 4
        %s380 = scalar_lea.vmem %s4, %s379
      $region48: #{decoder1d_forward.9} parent=43 // pred_fallthru
        _
    $region44: #{decoder1d_forward.9} parent=5 // pred_fallthru
      _
  $region6: #{decoder1d_forward.9} parent=0 // loop_footer
    %s14 = sadd.s32 1, %s10
  $region7: #{decoder1d_forward.9} parent=0 // loop_footer_branch
    %9 = sbr.rel target = $region3
  $region8: #{decoder1d_forward.9} parent=0 // loop_exit
    _

// kernel: decoder1d_forward.10
$region0: #{decoder1d_forward.10}
  #allocation0 [shape = 'u32[]', space=smem, size = 0x4, offset = 0x4, fixed_abs, tag = 'smem constant byte address 0x4 - core index']
  #allocation1 [shape = 'u32[144,128]{1,0:T(1,128)}', space=vmem, size = 0x12000, scoped, tag = 'internal scratch']
  %s0 = inlined_call_operand.vmem [shape: bf16[2,16,8], index: 0, kind: input, shape index: {}]
  %s1 = inlined_call_operand.vmem [shape: bf16[16,128], index: 1, kind: input, shape index: {}]
  %s2 = inlined_call_operand.vmem [shape: bf16[16,128], index: 2, kind: input, shape index: {}]
  %s3 = inlined_call_operand.vmem [shape: bf16[16,128], index: 3, kind: input, shape index: {}]
  %s4 = inlined_call_operand.vmem [shape: bf16[128,16], index: 4, kind: input, shape index: {}]
  %s5 = inlined_call_operand.vmem [shape: bf16[16,128], index: 5, kind: input, shape index: {}]
  %s6 = inlined_call_operand.vmem [shape: bf16[128,16], index: 6, kind: input, shape index: {}]
  %s7 = inlined_call_operand.vmem [shape: bf16[2,16,8], index: 7, kind: output, shape index: {}]
  %s8 = sld [smem:[#allocation0]]
  $region61: #{decoder1d_forward.10} parent=0
    _
  %s10 = ssub.s32 1, %s8
  %s11 = scalar_select 0, %s10, %s8
  loop: start=0, step=1, limit=4
  $region2: #{decoder1d_forward.10} parent=0 // loop_pre_header
    _
  $region3: #{decoder1d_forward.10} parent=0 // loop_header
    %s13 = sphi 0, %s17
    %p14 = scmp.ge.s32.totalorder %s13, 4
    %s23 = sphi 0, %s25
    %s26 = sphi 0, %s23
    %s27 = sphi 0, %s26
    %s43 = sphi 0, %s27
    %s47 = sphi 0, %s47
    %s49 = sphi 0, %s47
    %s50 = sphi 0, %s49
    %s64 = sphi 0, %s50
    %s68 = sphi 0, %s68
    %s70 = sphi 0, %s68
    %s71 = sphi 0, %s70
    %s85 = sphi 0, %s71
    %s89 = sphi 0, %s89
    %s91 = sphi 0, %s89
    %s92 = sphi 0, %s91
    %s106 = sphi 0, %s92
    %s110 = sphi 0, %s110
    %s112 = sphi 0, %s110
    %s113 = sphi 0, %s112
    %s127 = sphi 0, %s113
    %s131 = sphi 0, %s131
    %s133 = sphi 0, %s131
    %s134 = sphi 0, %s133
    %s148 = sphi 0, %s134
    %s152 = sphi 0, %s152
    %s154 = sphi 0, %s152
    %s155 = sphi 0, %s154
    %s169 = sphi 0, %s155
    %s175 = sphi 0, %s177
    %s178 = sphi 0, %s175
    %s179 = sphi 0, %s178
    %s195 = sphi 0, %s179
  $region4: #{decoder1d_forward.10} parent=0 // loop_header_branch
    %16 = sbr.rel (%p14) target = $region8
  $region5: #{decoder1d_forward.10} parent=0 // loop_body
    %s18 = ssub.s32 %s13, 1
    %s19 = ssub.s32 %s13, 2
    %s20 = sadd.s32 %s13, 1
    %s21 = ssub.s32 %s13, %s20
    %p22 = scmp.eq.s32.totalorder %s21, 0
    %s24 = sadd.s32 %s23, 1
    %s25 = scalar_select %p22, %s23, %s24
    %p28 = pneg %p22
    %p29 = scmp.eq.s32.totalorder %s13, 1
    %p30 = por %p28, %p29
    %p31 = scmp.ne.s32.totalorder %s23, %s26
    %p32 = scmp.eq.s32.totalorder %s13, 0
    %p33 = por %p31, %p32
    %p34 = scmp.ne.s32.totalorder %s23, %s26
    %p35 = scmp.eq.s32.totalorder %s18, 1
    %p36 = por %p34, %p35
    %p37 = scmp.ne.s32.totalorder %s26, %s27
    %p38 = scmp.eq.s32.totalorder %s18, 0
    %p39 = por %p37, %p38
    %p40 = scmp.ne.s32.totalorder %s26, %s27
    %p41 = scmp.eq.s32.totalorder %s19, 1
    %p42 = por %p40, %p41
    %p44 = scmp.ne.s32.totalorder %s27, %s43
    %p45 = scmp.eq.s32.totalorder %s19, 0
    %p46 = por %p44, %p45
    %s48 = sadd.s32 %s47, 1
    %p51 = scmp.eq.s32.totalorder %s13, 1
    %p52 = scmp.ne.s32.totalorder %s47, %s49
    %p53 = scmp.eq.s32.totalorder %s13, 0
    %p54 = por %p52, %p53
    %p55 = scmp.ne.s32.totalorder %s47, %s49
    %p56 = scmp.eq.s32.totalorder %s18, 1
    %p57 = por %p55, %p56
    %p58 = scmp.ne.s32.totalorder %s49, %s50
    %p59 = scmp.eq.s32.totalorder %s18, 0
    %p60 = por %p58, %p59
    %p61 = scmp.ne.s32.totalorder %s49, %s50
    %p62 = scmp.eq.s32.totalorder %s19, 1
    %p63 = por %p61, %p62
    %p65 = scmp.ne.s32.totalorder %s50, %s64
    %p66 = scmp.eq.s32.totalorder %s19, 0
    %p67 = por %p65, %p66
    %s69 = sadd.s32 %s68, 1
    %p72 = scmp.eq.s32.totalorder %s13, 1
    %p73 = scmp.ne.s32.totalorder %s68, %s70
    %p74 = scmp.eq.s32.totalorder %s13, 0
    %p75 = por %p73, %p74
    %p76 = scmp.ne.s32.totalorder %s68, %s70
    %p77 = scmp.eq.s32.totalorder %s18, 1
    %p78 = por %p76, %p77
    %p79 = scmp.ne.s32.totalorder %s70, %s71
    %p80 = scmp.eq.s32.totalorder %s18, 0
    %p81 = por %p79, %p80
    %p82 = scmp.ne.s32.totalorder %s70, %s71
    %p83 = scmp.eq.s32.totalorder %s19, 1
    %p84 = por %p82, %p83
    %p86 = scmp.ne.s32.totalorder %s71, %s85
    %p87 = scmp.eq.s32.totalorder %s19, 0
    %p88 = por %p86, %p87
    %s90 = sadd.s32 %s89, 1
    %p93 = scmp.eq.s32.totalorder %s13, 1
    %p94 = scmp.ne.s32.totalorder %s89, %s91
    %p95 = scmp.eq.s32.totalorder %s13, 0
    %p96 = por %p94, %p95
    %p97 = scmp.ne.s32.totalorder %s89, %s91
    %p98 = scmp.eq.s32.totalorder %s18, 1
    %p99 = por %p97, %p98
    %p100 = scmp.ne.s32.totalorder %s91, %s92
    %p101 = scmp.eq.s32.totalorder %s18, 0
    %p102 = por %p100, %p101
    %p103 = scmp.ne.s32.totalorder %s91, %s92
    %p104 = scmp.eq.s32.totalorder %s19, 1
    %p105 = por %p103, %p104
    %p107 = scmp.ne.s32.totalorder %s92, %s106
    %p108 = scmp.eq.s32.totalorder %s19, 0
    %p109 = por %p107, %p108
    %s111 = sadd.s32 %s110, 1
    %p114 = scmp.eq.s32.totalorder %s13, 1
    %p115 = scmp.ne.s32.totalorder %s110, %s112
    %p116 = scmp.eq.s32.totalorder %s13, 0
    %p117 = por %p115, %p116
    %p118 = scmp.ne.s32.totalorder %s110, %s112
    %p119 = scmp.eq.s32.totalorder %s18, 1
    %p120 = por %p118, %p119
    %p121 = scmp.ne.s32.totalorder %s112, %s113
    %p122 = scmp.eq.s32.totalorder %s18, 0
    %p123 = por %p121, %p122
    %p124 = scmp.ne.s32.totalorder %s112, %s113
    %p125 = scmp.eq.s32.totalorder %s19, 1
    %p126 = por %p124, %p125
    %p128 = scmp.ne.s32.totalorder %s113, %s127
    %p129 = scmp.eq.s32.totalorder %s19, 0
    %p130 = por %p128, %p129
    %s132 = sadd.s32 %s131, 1
    %p135 = scmp.eq.s32.totalorder %s13, 1
    %p136 = scmp.ne.s32.totalorder %s131, %s133
    %p137 = scmp.eq.s32.totalorder %s13, 0
    %p138 = por %p136, %p137
    %p139 = scmp.ne.s32.totalorder %s131, %s133
    %p140 = scmp.eq.s32.totalorder %s18, 1
    %p141 = por %p139, %p140
    %p142 = scmp.ne.s32.totalorder %s133, %s134
    %p143 = scmp.eq.s32.totalorder %s18, 0
    %p144 = por %p142, %p143
    %p145 = scmp.ne.s32.totalorder %s133, %s134
    %p146 = scmp.eq.s32.totalorder %s19, 1
    %p147 = por %p145, %p146
    %p149 = scmp.ne.s32.totalorder %s134, %s148
    %p150 = scmp.eq.s32.totalorder %s19, 0
    %p151 = por %p149, %p150
    %s153 = sadd.s32 %s152, 1
    %p156 = scmp.eq.s32.totalorder %s13, 1
    %p157 = scmp.ne.s32.totalorder %s152, %s154
    %p158 = scmp.eq.s32.totalorder %s13, 0
    %p159 = por %p157, %p158
    %p160 = scmp.ne.s32.totalorder %s152, %s154
    %p161 = scmp.eq.s32.totalorder %s18, 1
    %p162 = por %p160, %p161
    %p163 = scmp.ne.s32.totalorder %s154, %s155
    %p164 = scmp.eq.s32.totalorder %s18, 0
    %p165 = por %p163, %p164
    %p166 = scmp.ne.s32.totalorder %s154, %s155
    %p167 = scmp.eq.s32.totalorder %s19, 1
    %p168 = por %p166, %p167
    %p170 = scmp.ne.s32.totalorder %s155, %s169
    %p171 = scmp.eq.s32.totalorder %s19, 0
    %p172 = por %p170, %p171
    %s173 = ssub.s32 %s13, %s20
    %p174 = scmp.eq.s32.totalorder %s173, 0
    %s176 = sadd.s32 %s175, 1
    %s177 = scalar_select %p174, %s175, %s176
    %p180 = pneg %p174
    %p181 = scmp.eq.s32.totalorder %s13, 1
    %p182 = por %p180, %p181
    %p183 = scmp.ne.s32.totalorder %s175, %s178
    %p184 = scmp.eq.s32.totalorder %s13, 0
    %p185 = por %p183, %p184
    %p186 = scmp.ne.s32.totalorder %s175, %s178
    %p187 = scmp.eq.s32.totalorder %s18, 1
    %p188 = por %p186, %p187
    %p189 = scmp.ne.s32.totalorder %s178, %s179
    %p190 = scmp.eq.s32.totalorder %s18, 0
    %p191 = por %p189, %p190
    %p192 = scmp.ne.s32.totalorder %s178, %s179
    %p193 = scmp.eq.s32.totalorder %s19, 1
    %p194 = por %p192, %p193
    %p196 = scmp.ne.s32.totalorder %s179, %s195
    %p197 = scmp.eq.s32.totalorder %s19, 0
    %p198 = por %p196, %p197
    %p199 = scmp.le.s32.totalorder 1, %s13
    %p200 = scmp.lt.s32.totalorder %s13, 3
    %p201 = pnand %p199, %p200
    %p202 = pneg %p201
    // Predicated region
    $region9: #{decoder1d_forward.10} parent=5 // pred_check
      _
    $region10: #{decoder1d_forward.10} parent=5 // pred_check_branch
      %204 = sbr.rel (%p201) target = $region12
    $region11: #{decoder1d_forward.10} parent=5 // pred_region
      %s205 = ssub.s32 %s13, 1
      // Predicated region
      $region13: #{decoder1d_forward.10} parent=11 // pred_check
        %p206 = pneg %p60
      $region14: #{decoder1d_forward.10} parent=11 // pred_check_branch
        %208 = sbr.rel (%p206) target = $region16
      $region15: #{decoder1d_forward.10} parent=11 // pred_region
        _
      $region16: #{decoder1d_forward.10} parent=11 // pred_fallthru
        _
      // Predicated region
      $region17: #{decoder1d_forward.10} parent=11 // pred_check
        %p209 = pneg %p81
      $region18: #{decoder1d_forward.10} parent=11 // pred_check_branch
        %211 = sbr.rel (%p209) target = $region20
      $region19: #{decoder1d_forward.10} parent=11 // pred_region
        _
      $region20: #{decoder1d_forward.10} parent=11 // pred_fallthru
        _
      // Predicated region
      $region21: #{decoder1d_forward.10} parent=11 // pred_check
        %p212 = pneg %p102
      $region22: #{decoder1d_forward.10} parent=11 // pred_check_branch
        %214 = sbr.rel (%p212) target = $region24
      $region23: #{decoder1d_forward.10} parent=11 // pred_region
        _
      $region24: #{decoder1d_forward.10} parent=11 // pred_fallthru
        _
      // Predicated region
      $region25: #{decoder1d_forward.10} parent=11 // pred_check
        %p215 = pneg %p123
      $region26: #{decoder1d_forward.10} parent=11 // pred_check_branch
        %217 = sbr.rel (%p215) target = $region28
      $region27: #{decoder1d_forward.10} parent=11 // pred_region
        _
      $region28: #{decoder1d_forward.10} parent=11 // pred_fallthru
        _
      // Predicated region
      $region29: #{decoder1d_forward.10} parent=11 // pred_check
        %p218 = pneg %p144
      $region30: #{decoder1d_forward.10} parent=11 // pred_check_branch
        %220 = sbr.rel (%p218) target = $region32
      $region31: #{decoder1d_forward.10} parent=11 // pred_region
        _
      $region32: #{decoder1d_forward.10} parent=11 // pred_fallthru
        _
      // Predicated region
      $region33: #{decoder1d_forward.10} parent=11 // pred_check
        %p221 = pneg %p165
      $region34: #{decoder1d_forward.10} parent=11 // pred_check_branch
        %223 = sbr.rel (%p221) target = $region36
      $region35: #{decoder1d_forward.10} parent=11 // pred_region
        _
      $region36: #{decoder1d_forward.10} parent=11 // pred_fallthru
        _
    $region12: #{decoder1d_forward.10} parent=5 // pred_fallthru
      _
    %p224 = scmp.lt.s32.totalorder %s13, 2
    // Predicated region
    $region37: #{decoder1d_forward.10} parent=5 // pred_check
      %p225 = pneg %p224
    $region38: #{decoder1d_forward.10} parent=5 // pred_check_branch
      %227 = sbr.rel (%p225) target = $region40
    $region39: #{decoder1d_forward.10} parent=5 // pred_region
      // Predicated region
      $region41: #{decoder1d_forward.10} parent=39 // pred_check
        %p228 = pneg %p33
      $region42: #{decoder1d_forward.10} parent=39 // pred_check_branch
        %230 = sbr.rel (%p228) target = $region44
      $region43: #{decoder1d_forward.10} parent=39 // pred_region
        %p231 = scmp.lt.s32.totalorder %s13, 1
        %s232 = scalar_select %p231, %s13, 1
        %s233 = smul.addr %s232, 2
        %s234 = smul.addr %s233, 4
        %s235 = scalar_lea.vmem %s0, %s234
      $region44: #{decoder1d_forward.10} parent=39 // pred_fallthru
        _
    $region40: #{decoder1d_forward.10} parent=5 // pred_fallthru
      _
    %p236 = scmp.le.s32.totalorder 1, %s13
    %p237 = scmp.lt.s32.totalorder %s13, 3
    %p238 = pnand %p236, %p237
    %p239 = pneg %p238
    // Predicated region
    $region45: #{decoder1d_forward.10} parent=5 // pred_check
      _
    $region46: #{decoder1d_forward.10} parent=5 // pred_check_branch
      %241 = sbr.rel (%p238) target = $region48
    $region47: #{decoder1d_forward.10} parent=5 // pred_region
      %s242 = ssub.s32 %s13, 1
      %p243 = scmp.lt.s32.totalorder %s18, 1
      %s244 = scalar_select %p243, %s18, 1
      %s245 = smul.addr %s244, 2
      %s246 = smul.addr %s245, 4
      %s247 = scalar_lea.vmem %s0, %s246
      %p248 = pneg %p39
      %p249 = pneg %p36
      %p250 = pneg %p60
      %p251 = pneg %p57
      %p252 = pneg %p81
      %p253 = pneg %p78
      %p254 = pneg %p102
      %p255 = pneg %p99
      %p256 = pneg %p123
      %p257 = pneg %p120
      %p258 = pneg %p144
      %p259 = pneg %p141
      %p260 = pneg %p165
      %p261 = pneg %p162
      %p262 = pneg %p191
      %p263 = pneg %p188
      %p264 = scmp.lt.s32.totalorder %s18, 1
      %s265 = scalar_select %p264, %s18, 1
      %s266 = smul.addr %s265, 2
      %s267 = smul.addr %s266, 4
      %s268 = scalar_lea.vmem %s7, %s267
      %p269 = scmp.lt.s32.totalorder %s18, 1
      %s270 = scalar_select %p269, %s18, 1
      %s271 = smul.addr %s270, 2
      %s272 = smul.addr %s271, 4
      %s273 = scalar_lea.vmem %s0, %s272
      %p274 = scmp.lt.s32.totalorder %s18, 1
      %s275 = scalar_select %p274, %s18, 1
      %s276 = smul.addr %s275, 2
      %s277 = smul.addr %s276, 4
      %s278 = scalar_lea.vmem %s7, %s277
      %v280 = vld [vmem:[%s273] sm:$0xf]
      %v281 = vld [vmem:[%s273 + $0x4] sm:$0xf]
      %v282 = vunpack.c.l.bf16 %v280
      %v283 = vunpack.c.l.bf16 %v281
      %284 = vxpose.xlu0.b32.start [1/16] %v282, 128
      %285 = vxpose.xlu0.b32.cont [2/16] %v283, 128
      %286 = vxpose.xlu0.b32.cont [3/16] 0.0, 128
      %287 = vxpose.xlu0.b32.cont [4/16] 0.0, 128
      %288 = vxpose.xlu0.b32.cont [5/16] 0.0, 128
      %289 = vxpose.xlu0.b32.cont [6/16] 0.0, 128
      %290 = vxpose.xlu0.b32.cont [7/16] 0.0, 128
      %291 = vxpose.xlu0.b32.cont [8/16] 0.0, 128
      %292 = vxpose.xlu0.b32.cont [9/16] 0.0, 128
      %293 = vxpose.xlu0.b32.cont [10/16] 0.0, 128
      %294 = vxpose.xlu0.b32.cont [11/16] 0.0, 128
      %295 = vxpose.xlu0.b32.cont [12/16] 0.0, 128
      %296 = vxpose.xlu0.b32.cont [13/16] 0.0, 128
      %297 = vxpose.xlu0.b32.cont [14/16] 0.0, 128
      %298 = vxpose.xlu0.b32.cont [15/16] 0.0, 128
      %299 = vxpose.xlu0.b32.end [16/16] 0.0, 128
      %v300 = vpop.trf.xlu0
      %v301 = vpop.trf.xlu0
      %v302 = vpop.trf.xlu0
      %v303 = vpop.trf.xlu0
      %v304 = vpop.trf.xlu0
      %v305 = vpop.trf.xlu0
      %v306 = vpop.trf.xlu0
      %v307 = vpop.trf.xlu0
      %v308 = vpop.trf.xlu0
      %v309 = vpop.trf.xlu0
      %v310 = vpop.trf.xlu0
      %v311 = vpop.trf.xlu0
      %v312 = vpop.trf.xlu0
      %v313 = vpop.trf.xlu0
      %v314 = vpop.trf.xlu0
      %v315 = vpop.trf.xlu0
      %v316 = vpack.c.bf16 %v300, %v300
      %v317 = vld [vmem:[%s1] sm:$0xf]
      %v318 = vld [vmem:[%s1 + $0x4] sm:$0xf]
      %v321 = vunpack.c.l.b16 %v317
      %v322 = vunpack.c.l.b16 %v318
      %v323 = vpack.c.b16 %v322, %v321
      %vm325 = vcmask 130048
      %v327 = vsel %vm325, %v316, 0
      %329 = vmatprep.subr.bf16.mxu0 0
      %330 = vmatpush1.bf16.msra.mxu0 %v323
      %331 = vmatprep.subr.bf16.mxu0 0
      %332 = vmatpush1.bf16.msra.mxu0 0
      %333 = vmatprep.subr.bf16.mxu0 0
      %334 = vmatpush1.bf16.msra.mxu0 0
      %335 = vmatprep.subr.bf16.mxu0 0
      %336 = vmatpush1.bf16.msra.mxu0 0
      %337 = vmatprep.subr.bf16.mxu0 0
      %338 = vmatpush1.bf16.msra.mxu0 0
      %339 = vmatprep.subr.bf16.mxu0 0
      %340 = vmatpush1.bf16.msra.mxu0 0
      %341 = vmatprep.subr.bf16.mxu0 0
      %342 = vmatpush1.bf16.msra.mxu0 0
      %343 = vmatprep.subr.bf16.mxu0 0
      %344 = vmatpush1.bf16.msra.mxu0 0
      %345 = vmatprep.subr.bf16.mxu0 0
      %346 = vmatpush1.bf16.msra.mxu0 0
      %347 = vmatprep.subr.bf16.mxu0 0
      %348 = vmatpush1.bf16.msra.mxu0 0
      %349 = vmatprep.subr.bf16.mxu0 0
      %350 = vmatpush1.bf16.msra.mxu0 0
      %351 = vmatprep.subr.bf16.mxu0 0
      %352 = vmatpush1.bf16.msra.mxu0 0
      %353 = vmatprep.subr.bf16.mxu0 0
      %354 = vmatpush1.bf16.msra.mxu0 0
      %355 = vmatprep.subr.bf16.mxu0 0
      %356 = vmatpush1.bf16.msra.mxu0 0
      %357 = vmatprep.subr.bf16.mxu0 0
      %358 = vmatpush1.bf16.msra.mxu0 0
      %359 = vmatprep.subr.bf16.mxu0 0
      %360 = vmatpush1.bf16.msra.mxu0 0
      %361 = vmatprep.mubr.bf16.mxu0 0
      %362 = vmatmul.mubr.bf16.gmra.mrb[0].mxu0 %v327
      %v363 = vpop.f32.mrb[0].mxu0
      %v364 = vadd.f32 0.0, %v363
      %v365 = vpop.f32.mrb[0].mxu0
      %v366 = vpop.f32.mrb[0].mxu0
      %v367 = vpop.f32.mrb[0].mxu0
      %368 = vdwg.mxu0
      %v369 = vmul.f32 %v364, 0.088388346
      %v370 = vld [vmem:[%s2] sm:$0xf]
      %v371 = vld [vmem:[%s2 + $0x4] sm:$0xf]
      %v374 = vunpack.c.l.b16 %v370
      %v375 = vunpack.c.l.b16 %v371
      %v376 = vpack.c.b16 %v375, %v374
      %378 = vmatprep.subr.bf16.mxu0 0
      %379 = vmatpush1.bf16.msra.mxu0 %v376
      %380 = vmatprep.subr.bf16.mxu0 0
      %381 = vmatpush1.bf16.msra.mxu0 0
      %382 = vmatprep.subr.bf16.mxu0 0
      %383 = vmatpush1.bf16.msra.mxu0 0
      %384 = vmatprep.subr.bf16.mxu0 0
      %385 = vmatpush1.bf16.msra.mxu0 0
      %386 = vmatprep.subr.bf16.mxu0 0
      %387 = vmatpush1.bf16.msra.mxu0 0
      %388 = vmatprep.subr.bf16.mxu0 0
      %389 = vmatpush1.bf16.msra.mxu0 0
      %390 = vmatprep.subr.bf16.mxu0 0
      %391 = vmatpush1.bf16.msra.mxu0 0
      %392 = vmatprep.subr.bf16.mxu0 0
      %393 = vmatpush1.bf16.msra.mxu0 0
      %394 = vmatprep.subr.bf16.mxu0 0
      %395 = vmatpush1.bf16.msra.mxu0 0
      %396 = vmatprep.subr.bf16.mxu0 0
      %397 = vmatpush1.bf16.msra.mxu0 0
      %398 = vmatprep.subr.bf16.mxu0 0
      %399 = vmatpush1.bf16.msra.mxu0 0
      %400 = vmatprep.subr.bf16.mxu0 0
      %401 = vmatpush1.bf16.msra.mxu0 0
      %402 = vmatprep.subr.bf16.mxu0 0
      %403 = vmatpush1.bf16.msra.mxu0 0
      %404 = vmatprep.subr.bf16.mxu0 0
      %405 = vmatpush1.bf16.msra.mxu0 0
      %406 = vmatprep.subr.bf16.mxu0 0
      %407 = vmatpush1.bf16.msra.mxu0 0
      %408 = vmatprep.subr.bf16.mxu0 0
      %409 = vmatpush1.bf16.msra.mxu0 0
      %410 = vmatprep.mubr.bf16.mxu0 0
      %411 = vmatmul.mubr.bf16.gmra.mrb[0].mxu0 %v327
      %v412 = vpop.f32.mrb[0].mxu0
      %v413 = vadd.f32 0.0, %v412
      %v414 = vpop.f32.mrb[0].mxu0
      %v415 = vpop.f32.mrb[0].mxu0
      %v416 = vpop.f32.mrb[0].mxu0
      %417 = vdwg.mxu0
      %v418 = vld [vmem:[%s3] sm:$0xf]
      %v419 = vld [vmem:[%s3 + $0x4] sm:$0xf]
      %v422 = vunpack.c.l.b16 %v418
      %v423 = vunpack.c.l.b16 %v419
      %v424 = vpack.c.b16 %v423, %v422
      %426 = vmatprep.subr.bf16.mxu0 0
      %427 = vmatpush1.bf16.msra.mxu0 %v424
      %428 = vmatprep.subr.bf16.mxu0 0
      %429 = vmatpush1.bf16.msra.mxu0 0
      %430 = vmatprep.subr.bf16.mxu0 0
      %431 = vmatpush1.bf16.msra.mxu0 0
      %432 = vmatprep.subr.bf16.mxu0 0
      %433 = vmatpush1.bf16.msra.mxu0 0
      %434 = vmatprep.subr.bf16.mxu0 0
      %435 = vmatpush1.bf16.msra.mxu0 0
      %436 = vmatprep.subr.bf16.mxu0 0
      %437 = vmatpush1.bf16.msra.mxu0 0
      %438 = vmatprep.subr.bf16.mxu0 0
      %439 = vmatpush1.bf16.msra.mxu0 0
      %440 = vmatprep.subr.bf16.mxu0 0
      %441 = vmatpush1.bf16.msra.mxu0 0
      %442 = vmatprep.subr.bf16.mxu0 0
      %443 = vmatpush1.bf16.msra.mxu0 0
      %444 = vmatprep.subr.bf16.mxu0 0
      %445 = vmatpush1.bf16.msra.mxu0 0
      %446 = vmatprep.subr.bf16.mxu0 0
      %447 = vmatpush1.bf16.msra.mxu0 0
      %448 = vmatprep.subr.bf16.mxu0 0
      %449 = vmatpush1.bf16.msra.mxu0 0
      %450 = vmatprep.subr.bf16.mxu0 0
      %451 = vmatpush1.bf16.msra.mxu0 0
      %452 = vmatprep.subr.bf16.mxu0 0
      %453 = vmatpush1.bf16.msra.mxu0 0
      %454 = vmatprep.subr.bf16.mxu0 0
      %455 = vmatpush1.bf16.msra.mxu0 0
      %456 = vmatprep.subr.bf16.mxu0 0
      %457 = vmatpush1.bf16.msra.mxu0 0
      %458 = vmatprep.mubr.bf16.mxu0 0
      %459 = vmatmul.mubr.bf16.gmra.mrb[0].mxu0 %v327
      %v460 = vpop.f32.mrb[0].mxu0
      %v461 = vadd.f32 0.0, %v460
      %v462 = vpop.f32.mrb[0].mxu0
      %v463 = vpop.f32.mrb[0].mxu0
      %v464 = vpop.f32.mrb[0].mxu0
      %465 = vdwg.mxu0
      %v466 = vpack.c.bf16 %v369, %v369
      %v467 = vpack.c.bf16 %v413, %v413
      %v468 = vpack.c.bf16 %v461, %v461
      %469 = vmatprep.subr.bf16.mxu0 0
      %470 = vmatpush1.bf16.xpose.msra.mxu0 %v467
      %471 = vmatprep.subr.bf16.mxu0 0
      %472 = vmatpush1.bf16.xpose.msra.mxu0 0
      %473 = vmatprep.subr.bf16.mxu0 0
      %474 = vmatpush1.bf16.xpose.msra.mxu0 0
      %475 = vmatprep.subr.bf16.mxu0 0
      %476 = vmatpush1.bf16.xpose.msra.mxu0 0
      %477 = vmatprep.subr.bf16.mxu0 0
      %478 = vmatpush1.bf16.xpose.msra.mxu0 0
      %479 = vmatprep.subr.bf16.mxu0 0
      %480 = vmatpush1.bf16.xpose.msra.mxu0 0
      %481 = vmatprep.subr.bf16.mxu0 0
      %482 = vmatpush1.bf16.xpose.msra.mxu0 0
      %483 = vmatprep.subr.bf16.mxu0 0
      %484 = vmatpush1.bf16.xpose.msra.mxu0 0
      %485 = vmatprep.subr.bf16.mxu0 0
      %486 = vmatpush1.bf16.xpose.msra.mxu0 0
      %487 = vmatprep.subr.bf16.mxu0 0
      %488 = vmatpush1.bf16.xpose.msra.mxu0 0
      %489 = vmatprep.subr.bf16.mxu0 0
      %490 = vmatpush1.bf16.xpose.msra.mxu0 0
      %491 = vmatprep.subr.bf16.mxu0 0
      %492 = vmatpush1.bf16.xpose.msra.mxu0 0
      %493 = vmatprep.subr.bf16.mxu0 0
      %494 = vmatpush1.bf16.xpose.msra.mxu0 0
      %495 = vmatprep.subr.bf16.mxu0 0
      %496 = vmatpush1.bf16.xpose.msra.mxu0 0
      %497 = vmatprep.subr.bf16.mxu0 0
      %498 = vmatpush1.bf16.xpose.msra.mxu0 0
      %499 = vmatprep.subr.bf16.mxu0 0
      %500 = vmatpush1.bf16.xpose.msra.mxu0 0
      %501 = vmatprep.mubr.bf16.mxu0 0
      %502 = vmatmul.mubr.bf16.gmra.mrb[0].mxu0 %v466
      %v503 = vpop.f32.mrb[0].mxu0
      %v504 = vadd.f32 0.0, %v503
      %v505 = vpop.f32.mrb[0].mxu0
      %v506 = vpop.f32.mrb[0].mxu0
      %v507 = vpop.f32.mrb[0].mxu0
      %508 = vdwg.mxu0
      %vm509 = vcmask 64512
      %v510 = vsel %vm509, %v504, -inf
      %511 = vmax.xlane.f32.xlu0 %v510
      %v512 = vpop.xlane.xlu0 %511
      %v513 = vsub.f32 %v504, %v512
      %v514 = vmul.f32 %v513, 1.442695
      %v515 = vpow.pop %v514
      %v516 = vsel %vm509, %v515, 0.0
      %517 = vadd.xlane.f32.xlu0 %v516
      %v518 = vpop.xlane.xlu0 %517
      %v519 = vpack.c.bf16 %v515, %v515
      %v521 = vsel %vm509, %v519, 0
      %vm523 = vcmask 1043456
      %v525 = vsel %vm523, %v468, 0
      %527 = vmatprep.subr.bf16.mxu0 0
      %528 = vmatpush1.bf16.msra.mxu0 %v525
      %529 = vmatprep.subr.bf16.mxu0 0
      %530 = vmatpush1.bf16.msra.mxu0 0
      %531 = vmatprep.subr.bf16.mxu0 0
      %532 = vmatpush1.bf16.msra.mxu0 0
      %533 = vmatprep.subr.bf16.mxu0 0
      %534 = vmatpush1.bf16.msra.mxu0 0
      %535 = vmatprep.subr.bf16.mxu0 0
      %536 = vmatpush1.bf16.msra.mxu0 0
      %537 = vmatprep.subr.bf16.mxu0 0
      %538 = vmatpush1.bf16.msra.mxu0 0
      %539 = vmatprep.subr.bf16.mxu0 0
      %540 = vmatpush1.bf16.msra.mxu0 0
      %541 = vmatprep.subr.bf16.mxu0 0
      %542 = vmatpush1.bf16.msra.mxu0 0
      %543 = vmatprep.subr.bf16.mxu0 0
      %544 = vmatpush1.bf16.msra.mxu0 0
      %545 = vmatprep.subr.bf16.mxu0 0
      %546 = vmatpush1.bf16.msra.mxu0 0
      %547 = vmatprep.subr.bf16.mxu0 0
      %548 = vmatpush1.bf16.msra.mxu0 0
      %549 = vmatprep.subr.bf16.mxu0 0
      %550 = vmatpush1.bf16.msra.mxu0 0
      %551 = vmatprep.subr.bf16.mxu0 0
      %552 = vmatpush1.bf16.msra.mxu0 0
      %553 = vmatprep.subr.bf16.mxu0 0
      %554 = vmatpush1.bf16.msra.mxu0 0
      %555 = vmatprep.subr.bf16.mxu0 0
      %556 = vmatpush1.bf16.msra.mxu0 0
      %557 = vmatprep.subr.bf16.mxu0 0
      %558 = vmatpush1.bf16.msra.mxu0 0
      %559 = vmatprep.mubr.bf16.mxu0 0
      %560 = vmatmul.mubr.bf16.gmra.mrb[0].mxu0 %v521
      %v561 = vpop.f32.mrb[0].mxu0
      %v562 = vadd.f32 0.0, %v561
      %v563 = vpop.f32.mrb[0].mxu0
      %v564 = vpop.f32.mrb[0].mxu0
      %v565 = vpop.f32.mrb[0].mxu0
      %566 = vdwg.mxu0
      %v567 = vrcp.pop %v518
      %v568 = vmul.f32 %v562, %v567
      %v569 = vpack.c.bf16 %v568, %v568
      %v570 = vld [vmem:[%s4] sm:$0xf]
      %v571 = vld [vmem:[%s4 + $0x4] sm:$0xf]
      %v572 = vld [vmem:[%s4 + $0x8] sm:$0xf]
      %v573 = vld [vmem:[%s4 + $0xc] sm:$0xf]
      %v574 = vld [vmem:[%s4 + $0x10] sm:$0xf]
      %v575 = vld [vmem:[%s4 + $0x14] sm:$0xf]
      %v576 = vld [vmem:[%s4 + $0x18] sm:$0xf]
      %v577 = vld [vmem:[%s4 + $0x1c] sm:$0xf]
      %v578 = vld [vmem:[%s4 + $0x20] sm:$0xf]
      %v579 = vld [vmem:[%s4 + $0x24] sm:$0xf]
      %v580 = vld [vmem:[%s4 + $0x28] sm:$0xf]
      %v581 = vld [vmem:[%s4 + $0x2c] sm:$0xf]
      %v582 = vld [vmem:[%s4 + $0x30] sm:$0xf]
      %v583 = vld [vmem:[%s4 + $0x34] sm:$0xf]
      %v584 = vld [vmem:[%s4 + $0x38] sm:$0xf]
      %v585 = vld [vmem:[%s4 + $0x3c] sm:$0xf]
      %v602 = vunpack.c.l.b16 %v570
      %v603 = vunpack.c.l.b16 %v571
      %v604 = vunpack.c.l.b16 %v572
      %v605 = vunpack.c.l.b16 %v573
      %v606 = vunpack.c.l.b16 %v574
      %v607 = vunpack.c.l.b16 %v575
      %v608 = vunpack.c.l.b16 %v576
      %v609 = vunpack.c.l.b16 %v577
      %v610 = vunpack.c.l.b16 %v578
      %v611 = vunpack.c.l.b16 %v579
      %v612 = vunpack.c.l.b16 %v580
      %v613 = vunpack.c.l.b16 %v581
      %v614 = vunpack.c.l.b16 %v582
      %v615 = vunpack.c.l.b16 %v583
      %v616 = vunpack.c.l.b16 %v584
      %v617 = vunpack.c.l.b16 %v585
      %v618 = vpack.c.b16 %v603, %v602
      %v619 = vpack.c.b16 %v605, %v604
      %v620 = vpack.c.b16 %v607, %v606
      %v621 = vpack.c.b16 %v609, %v608
      %v622 = vpack.c.b16 %v611, %v610
      %v623 = vpack.c.b16 %v613, %v612
      %v624 = vpack.c.b16 %v615, %v614
      %v625 = vpack.c.b16 %v617, %v616
      %634 = vmatprep.subr.bf16.mxu0 0
      %635 = vmatpush1.bf16.msra.mxu0 %v618
      %636 = vmatprep.subr.bf16.mxu0 0
      %637 = vmatpush1.bf16.msra.mxu0 %v619
      %638 = vmatprep.subr.bf16.mxu0 0
      %639 = vmatpush1.bf16.msra.mxu0 %v620
      %640 = vmatprep.subr.bf16.mxu0 0
      %641 = vmatpush1.bf16.msra.mxu0 %v621
      %642 = vmatprep.subr.bf16.mxu0 0
      %643 = vmatpush1.bf16.msra.mxu0 %v622
      %644 = vmatprep.subr.bf16.mxu0 0
      %645 = vmatpush1.bf16.msra.mxu0 %v623
      %646 = vmatprep.subr.bf16.mxu0 0
      %647 = vmatpush1.bf16.msra.mxu0 %v624
      %648 = vmatprep.subr.bf16.mxu0 0
      %649 = vmatpush1.bf16.msra.mxu0 %v625
      %650 = vmatprep.subr.bf16.mxu0 0
      %651 = vmatpush1.bf16.msra.mxu0 0
      %652 = vmatprep.subr.bf16.mxu0 0
      %653 = vmatpush1.bf16.msra.mxu0 0
      %654 = vmatprep.subr.bf16.mxu0 0
      %655 = vmatpush1.bf16.msra.mxu0 0
      %656 = vmatprep.subr.bf16.mxu0 0
      %657 = vmatpush1.bf16.msra.mxu0 0
      %658 = vmatprep.subr.bf16.mxu0 0
      %659 = vmatpush1.bf16.msra.mxu0 0
      %660 = vmatprep.subr.bf16.mxu0 0
      %661 = vmatpush1.bf16.msra.mxu0 0
      %662 = vmatprep.subr.bf16.mxu0 0
      %663 = vmatpush1.bf16.msra.mxu0 0
      %664 = vmatprep.subr.bf16.mxu0 0
      %665 = vmatpush1.bf16.msra.mxu0 0
      %666 = vmatprep.mubr.bf16.mxu0 0
      %667 = vmatmul.mubr.bf16.gmra.mrb[0].mxu0 %v569
      %v668 = vpop.f32.mrb[0].mxu0
      %v669 = vadd.f32 0.0, %v668
      %v670 = vpop.f32.mrb[0].mxu0
      %v671 = vpop.f32.mrb[0].mxu0
      %v672 = vpop.f32.mrb[0].mxu0
      %673 = vdwg.mxu0
      %v674 = vadd.f32 %v300, %v669
      %v675 = vsel %vm325, %v674, 0.0
      %676 = vadd.xlane.f32.xlu0 %v675
      %v677 = vpop.xlane.xlu0 %676
      %v678 = vrcp.pop 16.0
      %v679 = vmul.f32 %v677, %v678
      %v680 = vsub.f32 %v674, %v679
      %v681 = vmul.f32 %v680, %v680
      %v682 = vsel %vm325, %v681, 0.0
      %683 = vadd.xlane.f32.xlu0 %v682
      %v684 = vpop.xlane.xlu0 %683
      %v685 = vmul.f32 %v684, %v678
      %v686 = vadd.f32 %v685, 1e-05
      %v687 = vrsqrt.pop %v686
      %v688 = vmul.f32 %v680, %v687
      %v689 = vpack.c.bf16 %v688, %v688
      %v690 = vld [vmem:[%s5] sm:$0xf]
      %v691 = vld [vmem:[%s5 + $0x4] sm:$0xf]
      %v694 = vunpack.c.l.b16 %v690
      %v695 = vunpack.c.l.b16 %v691
      %v696 = vpack.c.b16 %v695, %v694
      %v699 = vsel %vm325, %v689, 0
      %701 = vmatprep.subr.bf16.mxu0 0
      %702 = vmatpush1.bf16.msra.mxu0 %v696
      %703 = vmatprep.subr.bf16.mxu0 0
      %704 = vmatpush1.bf16.msra.mxu0 0
      %705 = vmatprep.subr.bf16.mxu0 0
      %706 = vmatpush1.bf16.msra.mxu0 0
      %707 = vmatprep.subr.bf16.mxu0 0
      %708 = vmatpush1.bf16.msra.mxu0 0
      %709 = vmatprep.subr.bf16.mxu0 0
      %710 = vmatpush1.bf16.msra.mxu0 0
      %711 = vmatprep.subr.bf16.mxu0 0
      %712 = vmatpush1.bf16.msra.mxu0 0
      %713 = vmatprep.subr.bf16.mxu0 0
      %714 = vmatpush1.bf16.msra.mxu0 0
      %715 = vmatprep.subr.bf16.mxu0 0
      %716 = vmatpush1.bf16.msra.mxu0 0
      %717 = vmatprep.subr.bf16.mxu0 0
      %718 = vmatpush1.bf16.msra.mxu0 0
      %719 = vmatprep.subr.bf16.mxu0 0
      %720 = vmatpush1.bf16.msra.mxu0 0
      %721 = vmatprep.subr.bf16.mxu0 0
      %722 = vmatpush1.bf16.msra.mxu0 0
      %723 = vmatprep.subr.bf16.mxu0 0
      %724 = vmatpush1.bf16.msra.mxu0 0
      %725 = vmatprep.subr.bf16.mxu0 0
      %726 = vmatpush1.bf16.msra.mxu0 0
      %727 = vmatprep.subr.bf16.mxu0 0
      %728 = vmatpush1.bf16.msra.mxu0 0
      %729 = vmatprep.subr.bf16.mxu0 0
      %730 = vmatpush1.bf16.msra.mxu0 0
      %731 = vmatprep.subr.bf16.mxu0 0
      %732 = vmatpush1.bf16.msra.mxu0 0
      %733 = vmatprep.mubr.bf16.mxu0 0
      %734 = vmatmul.mubr.bf16.gmra.mrb[0].mxu0 %v699
      %v735 = vpop.f32.mrb[0].mxu0
      %v736 = vadd.f32 0.0, %v735
      %v737 = vpop.f32.mrb[0].mxu0
      %v738 = vpop.f32.mrb[0].mxu0
      %v739 = vpop.f32.mrb[0].mxu0
      %740 = vdwg.mxu0
      %v741 = vxor.u32 %v736, 2147483648
      %v742 = vmul.f32 %v741, 1.442695
      %v743 = vpow.pop %v742
      %v744 = vadd.f32 %v743, 1.0
      %v745 = vrcp.pop %v744
      %v746 = vmul.f32 1.0, %v745
      %v747 = vmul.f32 %v736, %v746
      %v748 = vpack.c.bf16 %v747, %v747
      %v749 = vld [vmem:[%s6] sm:$0xf]
      %v750 = vld [vmem:[%s6 + $0x4] sm:$0xf]
      %v751 = vld [vmem:[%s6 + $0x8] sm:$0xf]
      %v752 = vld [vmem:[%s6 + $0xc] sm:$0xf]
      %v753 = vld [vmem:[%s6 + $0x10] sm:$0xf]
      %v754 = vld [vmem:[%s6 + $0x14] sm:$0xf]
      %v755 = vld [vmem:[%s6 + $0x18] sm:$0xf]
      %v756 = vld [vmem:[%s6 + $0x1c] sm:$0xf]
      %v757 = vld [vmem:[%s6 + $0x20] sm:$0xf]
      %v758 = vld [vmem:[%s6 + $0x24] sm:$0xf]
      %v759 = vld [vmem:[%s6 + $0x28] sm:$0xf]
      %v760 = vld [vmem:[%s6 + $0x2c] sm:$0xf]
      %v761 = vld [vmem:[%s6 + $0x30] sm:$0xf]
      %v762 = vld [vmem:[%s6 + $0x34] sm:$0xf]
      %v763 = vld [vmem:[%s6 + $0x38] sm:$0xf]
      %v764 = vld [vmem:[%s6 + $0x3c] sm:$0xf]
      %v781 = vunpack.c.l.b16 %v749
      %v782 = vunpack.c.l.b16 %v750
      %v783 = vunpack.c.l.b16 %v751
      %v784 = vunpack.c.l.b16 %v752
      %v785 = vunpack.c.l.b16 %v753
      %v786 = vunpack.c.l.b16 %v754
      %v787 = vunpack.c.l.b16 %v755
      %v788 = vunpack.c.l.b16 %v756
      %v789 = vunpack.c.l.b16 %v757
      %v790 = vunpack.c.l.b16 %v758
      %v791 = vunpack.c.l.b16 %v759
      %v792 = vunpack.c.l.b16 %v760
      %v793 = vunpack.c.l.b16 %v761
      %v794 = vunpack.c.l.b16 %v762
      %v795 = vunpack.c.l.b16 %v763
      %v796 = vunpack.c.l.b16 %v764
      %v797 = vpack.c.b16 %v782, %v781
      %v798 = vpack.c.b16 %v784, %v783
      %v799 = vpack.c.b16 %v786, %v785
      %v800 = vpack.c.b16 %v788, %v787
      %v801 = vpack.c.b16 %v790, %v789
      %v802 = vpack.c.b16 %v792, %v791
      %v803 = vpack.c.b16 %v794, %v793
      %v804 = vpack.c.b16 %v796, %v795
      %813 = vmatprep.subr.bf16.mxu0 0
      %814 = vmatpush1.bf16.msra.mxu0 %v797
      %815 = vmatprep.subr.bf16.mxu0 0
      %816 = vmatpush1.bf16.msra.mxu0 %v798
      %817 = vmatprep.subr.bf16.mxu0 0
      %818 = vmatpush1.bf16.msra.mxu0 %v799
      %819 = vmatprep.subr.bf16.mxu0 0
      %820 = vmatpush1.bf16.msra.mxu0 %v800
      %821 = vmatprep.subr.bf16.mxu0 0
      %822 = vmatpush1.bf16.msra.mxu0 %v801
      %823 = vmatprep.subr.bf16.mxu0 0
      %824 = vmatpush1.bf16.msra.mxu0 %v802
      %825 = vmatprep.subr.bf16.mxu0 0
      %826 = vmatpush1.bf16.msra.mxu0 %v803
      %827 = vmatprep.subr.bf16.mxu0 0
      %828 = vmatpush1.bf16.msra.mxu0 %v804
      %829 = vmatprep.subr.bf16.mxu0 0
      %830 = vmatpush1.bf16.msra.mxu0 0
      %831 = vmatprep.subr.bf16.mxu0 0
      %832 = vmatpush1.bf16.msra.mxu0 0
      %833 = vmatprep.subr.bf16.mxu0 0
      %834 = vmatpush1.bf16.msra.mxu0 0
      %835 = vmatprep.subr.bf16.mxu0 0
      %836 = vmatpush1.bf16.msra.mxu0 0
      %837 = vmatprep.subr.bf16.mxu0 0
      %838 = vmatpush1.bf16.msra.mxu0 0
      %839 = vmatprep.subr.bf16.mxu0 0
      %840 = vmatpush1.bf16.msra.mxu0 0
      %841 = vmatprep.subr.bf16.mxu0 0
      %842 = vmatpush1.bf16.msra.mxu0 0
      %843 = vmatprep.subr.bf16.mxu0 0
      %844 = vmatpush1.bf16.msra.mxu0 0
      %845 = vmatprep.mubr.bf16.mxu0 0
      %846 = vmatmul.mubr.bf16.gmra.mrb[0].mxu0 %v748
      %v847 = vpop.f32.mrb[0].mxu0
      %v848 = vadd.f32 0.0, %v847
      %v849 = vpop.f32.mrb[0].mxu0
      %v850 = vpop.f32.mrb[0].mxu0
      %v851 = vpop.f32.mrb[0].mxu0
      %852 = vdwg.mxu0
      %v853 = vadd.f32 %v688, %v848
      %v854 = vsel %vm325, %v853, 0.0
      %855 = vadd.xlane.f32.xlu0 %v854
      %v856 = vpop.xlane.xlu0 %855
      %v857 = vmul.f32 %v856, %v678
      %v858 = vsub.f32 %v853, %v857
      %v859 = vmul.f32 %v858, %v858
      %v860 = vsel %vm325, %v859, 0.0
      %861 = vadd.xlane.f32.xlu0 %v860
      %v862 = vpop.xlane.xlu0 %861
      %v863 = vmul.f32 %v862, %v678
      %v864 = vadd.f32 %v863, 1e-05
      %v865 = vrsqrt.pop %v864
      %v866 = vmul.f32 %v858, %v865
      %867 = vxpose.xlu0.b32.start [1/16] %v866, 128
      %868 = vxpose.xlu0.b32.cont [2/16] 0.0, 128
      %869 = vxpose.xlu0.b32.cont [3/16] 0.0, 128
      %870 = vxpose.xlu0.b32.cont [4/16] 0.0, 128
      %871 = vxpose.xlu0.b32.cont [5/16] 0.0, 128
      %872 = vxpose.xlu0.b32.cont [6/16] 0.0, 128
      %873 = vxpose.xlu0.b32.cont [7/16] 0.0, 128
      %874 = vxpose.xlu0.b32.cont [8/16] 0.0, 128
      %875 = vxpose.xlu0.b32.cont [9/16] 0.0, 128
      %876 = vxpose.xlu0.b32.cont [10/16] 0.0, 128
      %877 = vxpose.xlu0.b32.cont [11/16] 0.0, 128
      %878 = vxpose.xlu0.b32.cont [12/16] 0.0, 128
      %879 = vxpose.xlu0.b32.cont [13/16] 0.0, 128
      %880 = vxpose.xlu0.b32.cont [14/16] 0.0, 128
      %881 = vxpose.xlu0.b32.cont [15/16] 0.0, 128
      %882 = vxpose.xlu0.b32.end [16/16] 0.0, 128
      %v883 = vpop.trf.xlu0
      %v884 = vpop.trf.xlu0
      %v885 = vpop.trf.xlu0
      %v886 = vpop.trf.xlu0
      %v887 = vpop.trf.xlu0
      %v888 = vpop.trf.xlu0
      %v889 = vpop.trf.xlu0
      %v890 = vpop.trf.xlu0
      %v891 = vpop.trf.xlu0
      %v892 = vpop.trf.xlu0
      %v893 = vpop.trf.xlu0
      %v894 = vpop.trf.xlu0
      %v895 = vpop.trf.xlu0
      %v896 = vpop.trf.xlu0
      %v897 = vpop.trf.xlu0
      %v898 = vpop.trf.xlu0
      %v899 = vadd.f32 %v282, %v883
      %v900 = vadd.f32 %v283, %v884
      %v901 = vpack.c.bf16 %v900, %v899
      %v903 = vunpack.c.l.b16 %v901
      %v904 = vunpack.c.h.b16 %v901
      %v905 = vpack.c.b16 %v903, %v903
      %v906 = vpack.c.b16 %v904, %v904
      %vm909 = vcmask 60416
      %910 = vst.msk [vmem:[%s278] sm:$0xf] %vm909, %v905
      %911 = vst.msk [vmem:[%s278 + $0x4] sm:$0xf] %vm909, %v906
      %p912 = scmp.lt.s32.totalorder %s18, 1
      %s913 = scalar_select %p912, %s18, 1
      %s914 = smul.addr %s913, 2
      %s915 = smul.addr %s914, 4
      %s916 = scalar_lea.vmem %s7, %s915
      // Predicated region
      $region49: #{decoder1d_forward.10} parent=47 // pred_check
        %p917 = pneg %p188
      $region50: #{decoder1d_forward.10} parent=47 // pred_check_branch
        %919 = sbr.rel (%p917) target = $region52
      $region51: #{decoder1d_forward.10} parent=47 // pred_region
        _
      $region52: #{decoder1d_forward.10} parent=47 // pred_fallthru
        _
    $region48: #{decoder1d_forward.10} parent=5 // pred_fallthru
      _
    %p920 = scmp.le.s32.totalorder 2, %s13
    // Predicated region
    $region53: #{decoder1d_forward.10} parent=5 // pred_check
      %p921 = pneg %p920
    $region54: #{decoder1d_forward.10} parent=5 // pred_check_branch
      %923 = sbr.rel (%p921) target = $region56
    $region55: #{decoder1d_forward.10} parent=5 // pred_region
      %s924 = ssub.s32 %s13, 2
      // Predicated region
      $region57: #{decoder1d_forward.10} parent=55 // pred_check
        %p925 = pneg %p194
      $region58: #{decoder1d_forward.10} parent=55 // pred_check_branch
        %927 = sbr.rel (%p925) target = $region60
      $region59: #{decoder1d_forward.10} parent=55 // pred_region
        %p928 = scmp.lt.s32.totalorder %s19, 1
        %s929 = scalar_select %p928, %s19, 1
        %s930 = smul.addr %s929, 2
        %s931 = smul.addr %s930, 4
        %s932 = scalar_lea.vmem %s7, %s931
      $region60: #{decoder1d_forward.10} parent=55 // pred_fallthru
        _
    $region56: #{decoder1d_forward.10} parent=5 // pred_fallthru
      _
  $region6: #{decoder1d_forward.10} parent=0 // loop_footer
    %s17 = sadd.s32 1, %s13
  $region7: #{decoder1d_forward.10} parent=0 // loop_footer_branch
    %12 = sbr.rel target = $region3
  $region8: #{decoder1d_forward.10} parent=0 // loop_exit
    _

// kernel: decoder1d_forward.12
$region0: #{decoder1d_forward.12}
  #allocation0 [shape = 'u32[]', space=smem, size = 0x4, offset = 0x4, fixed_abs, tag = 'smem constant byte address 0x4 - core index']
  #allocation1 [shape = 'u32[144,128]{1,0:T(1,128)}', space=vmem, size = 0x12000, scoped, tag = 'internal scratch']
  %s0 = inlined_call_operand.vmem [shape: bf16[2,8,32], index: 0, kind: input, shape index: {}]
  %s1 = inlined_call_operand.vmem [shape: bf16[2,8,2], index: 1, kind: input, shape index: {}]
  %s2 = inlined_call_operand.vmem [shape: f32[2,8,2], index: 2, kind: input, shape index: {}]
  %s3 = inlined_call_operand.vmem [shape: bf16[8,24], index: 3, kind: input, shape index: {}]
  %s4 = inlined_call_operand.vmem [shape: f32[8,1], index: 4, kind: input, shape index: {}]
  %s5 = inlined_call_operand.vmem [shape: bf16[8,8], index: 5, kind: input, shape index: {}]
  %s6 = inlined_call_operand.vmem [shape: f32[8,1], index: 6, kind: input, shape index: {}]
  %s7 = inlined_call_operand.vmem [shape: bf16[2,8,32], index: 7, kind: output, shape index: {0}]
  %s8 = inlined_call_operand.vmem [shape: bf16[2,8,32], index: 8, kind: output, shape index: {1}]
  %9 = xla_tuple %s7, %s8
  %s10 = sld [smem:[#allocation0]]
  $region69: #{decoder1d_forward.12} parent=0
    _
  %s12 = ssub.s32 1, %s10
  %s13 = scalar_select 0, %s12, %s10
  loop: start=0, step=1, limit=4
  $region2: #{decoder1d_forward.12} parent=0 // loop_pre_header
    _
  $region3: #{decoder1d_forward.12} parent=0 // loop_header
    %s15 = sphi 0, %s19
    %p16 = scmp.ge.s32.totalorder %s15, 4
    %s22 = sphi 0, %s34
    %s23 = sphi 0, %s30
    %s24 = sphi 0, %s22
    %s25 = sphi 0, %s23
    %s26 = sphi 0, %s24
    %s27 = sphi 0, %s25
    %s39 = sphi 0, %s41
    %s42 = sphi 0, %s39
    %s43 = sphi 0, %s42
    %s59 = sphi 0, %s43
    %s67 = sphi 0, %s69
    %s70 = sphi 0, %s67
    %s71 = sphi 0, %s70
    %s87 = sphi 0, %s71
    %s93 = sphi 0, %s95
    %s96 = sphi 0, %s93
    %s97 = sphi 0, %s96
    %s113 = sphi 0, %s97
    %s117 = sphi 0, %s117
    %s119 = sphi 0, %s117
    %s120 = sphi 0, %s119
    %s134 = sphi 0, %s120
    %s138 = sphi 0, %s138
    %s140 = sphi 0, %s138
    %s141 = sphi 0, %s140
    %s155 = sphi 0, %s141
    %s159 = sphi 0, %s159
    %s161 = sphi 0, %s159
    %s162 = sphi 0, %s161
    %s176 = sphi 0, %s162
    %s180 = sphi 0, %s180
    %s182 = sphi 0, %s180
    %s183 = sphi 0, %s182
    %s197 = sphi 0, %s183
    %s205 = sphi 0, %s207
    %s208 = sphi 0, %s205
    %s209 = sphi 0, %s208
    %s225 = sphi 0, %s209
    %s233 = sphi 0, %s235
    %s236 = sphi 0, %s233
    %s237 = sphi 0, %s236
    %s253 = sphi 0, %s237
  $region4: #{decoder1d_forward.12} parent=0 // loop_header_branch
    %18 = sbr.rel (%p16) target = $region8
  $region5: #{decoder1d_forward.12} parent=0 // loop_body
    %s20 = ssub.s32 %s15, 1
    %s21 = ssub.s32 %s15, 2
    %s28 = sadd.s32 1, %s23
    %p29 = scmp.ge.s32.totalorder %s28, 1
    %s30 = scalar_select %p29, 0, %s28
    %s31 = sadd.s32 1, %s22
    %s32 = scalar_select %p29, %s31, %s22
    %p33 = scmp.ge.s32.totalorder %s32, 2
    %s34 = scalar_select %p33, 0, %s32
    %s35 = ssub.s32 %s22, %s34
    %s36 = ssub.s32 %s23, %s30
    %s37 = sor.u32 %s35, %s36
    %p38 = scmp.eq.s32.totalorder %s37, 0
    %s40 = sadd.s32 %s39, 1
    %s41 = scalar_select %p38, %s39, %s40
    %p44 = pneg %p38
    %p45 = scmp.eq.s32.totalorder %s15, 1
    %p46 = por %p44, %p45
    %p47 = scmp.ne.s32.totalorder %s39, %s42
    %p48 = scmp.eq.s32.totalorder %s15, 0
    %p49 = por %p47, %p48
    %p50 = scmp.ne.s32.totalorder %s39, %s42
    %p51 = scmp.eq.s32.totalorder %s20, 1
    %p52 = por %p50, %p51
    %p53 = scmp.ne.s32.totalorder %s42, %s43
    %p54 = scmp.eq.s32.totalorder %s20, 0
    %p55 = por %p53, %p54
    %p56 = scmp.ne.s32.totalorder %s42, %s43
    %p57 = scmp.eq.s32.totalorder %s21, 1
    %p58 = por %p56, %p57
    %p60 = scmp.ne.s32.totalorder %s43, %s59
    %p61 = scmp.eq.s32.totalorder %s21, 0
    %p62 = por %p60, %p61
    %s63 = sadd.s32 %s22, %s23
    %s64 = sadd.s32 %s34, %s30
    %s65 = ssub.s32 %s63, %s64
    %p66 = scmp.eq.s32.totalorder %s65, 0
    %s68 = sadd.s32 %s67, 1
    %s69 = scalar_select %p66, %s67, %s68
    %p72 = pneg %p66
    %p73 = scmp.eq.s32.totalorder %s15, 1
    %p74 = por %p72, %p73
    %p75 = scmp.ne.s32.totalorder %s67, %s70
    %p76 = scmp.eq.s32.totalorder %s15, 0
    %p77 = por %p75, %p76
    %p78 = scmp.ne.s32.totalorder %s67, %s70
    %p79 = scmp.eq.s32.totalorder %s20, 1
    %p80 = por %p78, %p79
    %p81 = scmp.ne.s32.totalorder %s70, %s71
    %p82 = scmp.eq.s32.totalorder %s20, 0
    %p83 = por %p81, %p82
    %p84 = scmp.ne.s32.totalorder %s70, %s71
    %p85 = scmp.eq.s32.totalorder %s21, 1
    %p86 = por %p84, %p85
    %p88 = scmp.ne.s32.totalorder %s71, %s87
    %p89 = scmp.eq.s32.totalorder %s21, 0
    %p90 = por %p88, %p89
    %s91 = ssub.s32 %s22, %s34
    %p92 = scmp.eq.s32.totalorder %s91, 0
    %s94 = sadd.s32 %s93, 1
    %s95 = scalar_select %p92, %s93, %s94
    %p98 = pneg %p92
    %p99 = scmp.eq.s32.totalorder %s15, 1
    %p100 = por %p98, %p99
    %p101 = scmp.ne.s32.totalorder %s93, %s96
    %p102 = scmp.eq.s32.totalorder %s15, 0
    %p103 = por %p101, %p102
    %p104 = scmp.ne.s32.totalorder %s93, %s96
    %p105 = scmp.eq.s32.totalorder %s20, 1
    %p106 = por %p104, %p105
    %p107 = scmp.ne.s32.totalorder %s96, %s97
    %p108 = scmp.eq.s32.totalorder %s20, 0
    %p109 = por %p107, %p108
    %p110 = scmp.ne.s32.totalorder %s96, %s97
    %p111 = scmp.eq.s32.totalorder %s21, 1
    %p112 = por %p110, %p111
    %p114 = scmp.ne.s32.totalorder %s97, %s113
    %p115 = scmp.eq.s32.totalorder %s21, 0
    %p116 = por %p114, %p115
    %s118 = sadd.s32 %s117, 1
    %p121 = scmp.eq.s32.totalorder %s15, 1
    %p122 = scmp.ne.s32.totalorder %s117, %s119
    %p123 = scmp.eq.s32.totalorder %s15, 0
    %p124 = por %p122, %p123
    %p125 = scmp.ne.s32.totalorder %s117, %s119
    %p126 = scmp.eq.s32.totalorder %s20, 1
    %p127 = por %p125, %p126
    %p128 = scmp.ne.s32.totalorder %s119, %s120
    %p129 = scmp.eq.s32.totalorder %s20, 0
    %p130 = por %p128, %p129
    %p131 = scmp.ne.s32.totalorder %s119, %s120
    %p132 = scmp.eq.s32.totalorder %s21, 1
    %p133 = por %p131, %p132
    %p135 = scmp.ne.s32.totalorder %s120, %s134
    %p136 = scmp.eq.s32.totalorder %s21, 0
    %p137 = por %p135, %p136
    %s139 = sadd.s32 %s138, 1
    %p142 = scmp.eq.s32.totalorder %s15, 1
    %p143 = scmp.ne.s32.totalorder %s138, %s140
    %p144 = scmp.eq.s32.totalorder %s15, 0
    %p145 = por %p143, %p144
    %p146 = scmp.ne.s32.totalorder %s138, %s140
    %p147 = scmp.eq.s32.totalorder %s20, 1
    %p148 = por %p146, %p147
    %p149 = scmp.ne.s32.totalorder %s140, %s141
    %p150 = scmp.eq.s32.totalorder %s20, 0
    %p151 = por %p149, %p150
    %p152 = scmp.ne.s32.totalorder %s140, %s141
    %p153 = scmp.eq.s32.totalorder %s21, 1
    %p154 = por %p152, %p153
    %p156 = scmp.ne.s32.totalorder %s141, %s155
    %p157 = scmp.eq.s32.totalorder %s21, 0
    %p158 = por %p156, %p157
    %s160 = sadd.s32 %s159, 1
    %p163 = scmp.eq.s32.totalorder %s15, 1
    %p164 = scmp.ne.s32.totalorder %s159, %s161
    %p165 = scmp.eq.s32.totalorder %s15, 0
    %p166 = por %p164, %p165
    %p167 = scmp.ne.s32.totalorder %s159, %s161
    %p168 = scmp.eq.s32.totalorder %s20, 1
    %p169 = por %p167, %p168
    %p170 = scmp.ne.s32.totalorder %s161, %s162
    %p171 = scmp.eq.s32.totalorder %s20, 0
    %p172 = por %p170, %p171
    %p173 = scmp.ne.s32.totalorder %s161, %s162
    %p174 = scmp.eq.s32.totalorder %s21, 1
    %p175 = por %p173, %p174
    %p177 = scmp.ne.s32.totalorder %s162, %s176
    %p178 = scmp.eq.s32.totalorder %s21, 0
    %p179 = por %p177, %p178
    %s181 = sadd.s32 %s180, 1
    %p184 = scmp.eq.s32.totalorder %s15, 1
    %p185 = scmp.ne.s32.totalorder %s180, %s182
    %p186 = scmp.eq.s32.totalorder %s15, 0
    %p187 = por %p185, %p186
    %p188 = scmp.ne.s32.totalorder %s180, %s182
    %p189 = scmp.eq.s32.totalorder %s20, 1
    %p190 = por %p188, %p189
    %p191 = scmp.ne.s32.totalorder %s182, %s183
    %p192 = scmp.eq.s32.totalorder %s20, 0
    %p193 = por %p191, %p192
    %p194 = scmp.ne.s32.totalorder %s182, %s183
    %p195 = scmp.eq.s32.totalorder %s21, 1
    %p196 = por %p194, %p195
    %p198 = scmp.ne.s32.totalorder %s183, %s197
    %p199 = scmp.eq.s32.totalorder %s21, 0
    %p200 = por %p198, %p199
    %s201 = ssub.s32 %s22, %s34
    %s202 = ssub.s32 %s23, %s30
    %s203 = sor.u32 %s201, %s202
    %p204 = scmp.eq.s32.totalorder %s203, 0
    %s206 = sadd.s32 %s205, 1
    %s207 = scalar_select %p204, %s205, %s206
    %p210 = pneg %p204
    %p211 = scmp.eq.s32.totalorder %s15, 1
    %p212 = por %p210, %p211
    %p213 = scmp.ne.s32.totalorder %s205, %s208
    %p214 = scmp.eq.s32.totalorder %s15, 0
    %p215 = por %p213, %p214
    %p216 = scmp.ne.s32.totalorder %s205, %s208
    %p217 = scmp.eq.s32.totalorder %s20, 1
    %p218 = por %p216, %p217
    %p219 = scmp.ne.s32.totalorder %s208, %s209
    %p220 = scmp.eq.s32.totalorder %s20, 0
    %p221 = por %p219, %p220
    %p222 = scmp.ne.s32.totalorder %s208, %s209
    %p223 = scmp.eq.s32.totalorder %s21, 1
    %p224 = por %p222, %p223
    %p226 = scmp.ne.s32.totalorder %s209, %s225
    %p227 = scmp.eq.s32.totalorder %s21, 0
    %p228 = por %p226, %p227
    %s229 = ssub.s32 %s22, %s34
    %s230 = ssub.s32 %s23, %s30
    %s231 = sor.u32 %s229, %s230
    %p232 = scmp.eq.s32.totalorder %s231, 0
    %s234 = sadd.s32 %s233, 1
    %s235 = scalar_select %p232, %s233, %s234
    %p238 = pneg %p232
    %p239 = scmp.eq.s32.totalorder %s15, 1
    %p240 = por %p238, %p239
    %p241 = scmp.ne.s32.totalorder %s233, %s236
    %p242 = scmp.eq.s32.totalorder %s15, 0
    %p243 = por %p241, %p242
    %p244 = scmp.ne.s32.totalorder %s233, %s236
    %p245 = scmp.eq.s32.totalorder %s20, 1
    %p246 = por %p244, %p245
    %p247 = scmp.ne.s32.totalorder %s236, %s237
    %p248 = scmp.eq.s32.totalorder %s20, 0
    %p249 = por %p247, %p248
    %p250 = scmp.ne.s32.totalorder %s236, %s237
    %p251 = scmp.eq.s32.totalorder %s21, 1
    %p252 = por %p250, %p251
    %p254 = scmp.ne.s32.totalorder %s237, %s253
    %p255 = scmp.eq.s32.totalorder %s21, 0
    %p256 = por %p254, %p255
    %p257 = scmp.le.s32.totalorder 1, %s15
    %p258 = scmp.lt.s32.totalorder %s15, 3
    %p259 = pnand %p257, %p258
    %p260 = pneg %p259
    // Predicated region
    $region9: #{decoder1d_forward.12} parent=5 // pred_check
      _
    $region10: #{decoder1d_forward.12} parent=5 // pred_check_branch
      %262 = sbr.rel (%p259) target = $region12
    $region11: #{decoder1d_forward.12} parent=5 // pred_region
      %s263 = ssub.s32 %s15, 1
      // Predicated region
      $region13: #{decoder1d_forward.12} parent=11 // pred_check
        %p264 = pneg %p130
      $region14: #{decoder1d_forward.12} parent=11 // pred_check_branch
        %266 = sbr.rel (%p264) target = $region16
      $region15: #{decoder1d_forward.12} parent=11 // pred_region
        _
      $region16: #{decoder1d_forward.12} parent=11 // pred_fallthru
        _
      // Predicated region
      $region17: #{decoder1d_forward.12} parent=11 // pred_check
        %p267 = pneg %p151
      $region18: #{decoder1d_forward.12} parent=11 // pred_check_branch
        %269 = sbr.rel (%p267) target = $region20
      $region19: #{decoder1d_forward.12} parent=11 // pred_region
        _
      $region20: #{decoder1d_forward.12} parent=11 // pred_fallthru
        _
      // Predicated region
      $region21: #{decoder1d_forward.12} parent=11 // pred_check
        %p270 = pneg %p172
      $region22: #{decoder1d_forward.12} parent=11 // pred_check_branch
        %272 = sbr.rel (%p270) target = $region24
      $region23: #{decoder1d_forward.12} parent=11 // pred_region
        _
      $region24: #{decoder1d_forward.12} parent=11 // pred_fallthru
        _
      // Predicated region
      $region25: #{decoder1d_forward.12} parent=11 // pred_check
        %p273 = pneg %p193
      $region26: #{decoder1d_forward.12} parent=11 // pred_check_branch
        %275 = sbr.rel (%p273) target = $region28
      $region27: #{decoder1d_forward.12} parent=11 // pred_region
        _
      $region28: #{decoder1d_forward.12} parent=11 // pred_fallthru
        _
    $region12: #{decoder1d_forward.12} parent=5 // pred_fallthru
      _
    %p276 = scmp.lt.s32.totalorder %s15, 2
    // Predicated region
    $region29: #{decoder1d_forward.12} parent=5 // pred_check
      %p277 = pneg %p276
    $region30: #{decoder1d_forward.12} parent=5 // pred_check_branch
      %279 = sbr.rel (%p277) target = $region32
    $region31: #{decoder1d_forward.12} parent=5 // pred_region
      // Predicated region
      $region33: #{decoder1d_forward.12} parent=31 // pred_check
        %p280 = pneg %p49
      $region34: #{decoder1d_forward.12} parent=31 // pred_check_branch
        %282 = sbr.rel (%p280) target = $region36
      $region35: #{decoder1d_forward.12} parent=31 // pred_region
        %p283 = scmp.lt.s32.totalorder %s22, 1
        %s284 = scalar_select %p283, %s22, 1
        %p285 = scmp.lt.s32.totalorder %s23, 0
        %s286 = scalar_select %p285, %s23, 0
        %s287 = sadd.s32 %s286, %s284
        %s288 = smul.addr %s287, 4
        %s289 = scalar_lea.vmem %s0, %s288
      $region36: #{decoder1d_forward.12} parent=31 // pred_fallthru
        _
      // Predicated region
      $region37: #{decoder1d_forward.12} parent=31 // pred_check
        %p290 = pneg %p77
      $region38: #{decoder1d_forward.12} parent=31 // pred_check_branch
        %292 = sbr.rel (%p290) target = $region40
      $region39: #{decoder1d_forward.12} parent=31 // pred_region
        %s293 = sadd.s32 %s22, %s23
        %p294 = scmp.lt.s32.totalorder %s293, 1
        %s295 = scalar_select %p294, %s293, 1
        %s296 = smul.addr %s295, 4
        %s297 = scalar_lea.vmem %s1, %s296
        %s298 = sadd.s32 %s22, %s23
      $region40: #{decoder1d_forward.12} parent=31 // pred_fallthru
        _
      // Predicated region
      $region41: #{decoder1d_forward.12} parent=31 // pred_check
        %p299 = pneg %p103
      $region42: #{decoder1d_forward.12} parent=31 // pred_check_branch
        %301 = sbr.rel (%p299) target = $region44
      $region43: #{decoder1d_forward.12} parent=31 // pred_region
        %p302 = scmp.lt.s32.totalorder %s22, 1
        %s303 = scalar_select %p302, %s22, 1
        %s304 = smul.addr %s303, 8
        %s305 = scalar_lea.vmem %s2, %s304
      $region44: #{decoder1d_forward.12} parent=31 // pred_fallthru
        _
    $region32: #{decoder1d_forward.12} parent=5 // pred_fallthru
      _
    %p306 = scmp.le.s32.totalorder 1, %s15
    %p307 = scmp.lt.s32.totalorder %s15, 3
    %p308 = pnand %p306, %p307
    %p309 = pneg %p308
    // Predicated region
    $region45: #{decoder1d_forward.12} parent=5 // pred_check
      _
    $region46: #{decoder1d_forward.12} parent=5 // pred_check_branch
      %311 = sbr.rel (%p308) target = $region48
    $region47: #{decoder1d_forward.12} parent=5 // pred_region
      %s312 = ssub.s32 %s15, 1
      %p313 = scmp.lt.s32.totalorder %s24, 1
      %s314 = scalar_select %p313, %s24, 1
      %p315 = scmp.lt.s32.totalorder %s25, 0
      %s316 = scalar_select %p315, %s25, 0
      %s317 = sadd.s32 %s316, %s314
      %s318 = smul.addr %s317, 4
      %s319 = scalar_lea.vmem %s0, %s318
      %p320 = pneg %p55
      %p321 = pneg %p52
      %s322 = sadd.s32 %s24, %s25
      %p323 = scmp.lt.s32.totalorder %s322, 1
      %s324 = scalar_select %p323, %s322, 1
      %s325 = smul.addr %s324, 4
      %s326 = scalar_lea.vmem %s1, %s325
      %p327 = pneg %p83
      %p328 = pneg %p80
      %p329 = scmp.lt.s32.totalorder %s24, 1
      %s330 = scalar_select %p329, %s24, 1
      %s331 = smul.addr %s330, 8
      %s332 = scalar_lea.vmem %s2, %s331
      %p333 = pneg %p109
      %p334 = pneg %p106
      %p335 = pneg %p130
      %p336 = pneg %p127
      %p337 = pneg %p151
      %p338 = pneg %p148
      %p339 = pneg %p172
      %p340 = pneg %p169
      %p341 = pneg %p193
      %p342 = pneg %p190
      %p343 = pneg %p221
      %p344 = pneg %p218
      %p345 = scmp.lt.s32.totalorder %s24, 1
      %s346 = scalar_select %p345, %s24, 1
      %p347 = scmp.lt.s32.totalorder %s25, 0
      %s348 = scalar_select %p347, %s25, 0
      %s349 = sadd.s32 %s348, %s346
      %s350 = smul.addr %s349, 4
      %s351 = scalar_lea.vmem %s7, %s350
      %p352 = pneg %p249
      %p353 = pneg %p246
      %p354 = scmp.lt.s32.totalorder %s24, 1
      %s355 = scalar_select %p354, %s24, 1
      %p356 = scmp.lt.s32.totalorder %s25, 0
      %s357 = scalar_select %p356, %s25, 0
      %s358 = sadd.s32 %s357, %s355
      %s359 = smul.addr %s358, 4
      %s360 = scalar_lea.vmem %s8, %s359
      %p361 = scmp.lt.s32.totalorder %s24, 1
      %s362 = scalar_select %p361, %s24, 1
      %p363 = scmp.lt.s32.totalorder %s25, 0
      %s364 = scalar_select %p363, %s25, 0
      %s365 = sadd.s32 %s364, %s362
      %s366 = smul.addr %s365, 4
      %s367 = scalar_lea.vmem %s0, %s366
      %s368 = sadd.s32 %s24, %s25
      %p369 = scmp.lt.s32.totalorder %s368, 1
      %s370 = scalar_select %p369, %s368, 1
      %s371 = smul.addr %s370, 4
      %s372 = scalar_lea.vmem %s1, %s371
      %s373 = sadd.s32 %s24, %s25
      %p374 = scmp.lt.s32.totalorder %s24, 1
      %s375 = scalar_select %p374, %s24, 1
      %s376 = smul.addr %s375, 8
      %s377 = scalar_lea.vmem %s2, %s376
      %p378 = scmp.lt.s32.totalorder %s24, 1
      %s379 = scalar_select %p378, %s24, 1
      %p380 = scmp.lt.s32.totalorder %s25, 0
      %s381 = scalar_select %p380, %s25, 0
      %s382 = sadd.s32 %s381, %s379
      %s383 = smul.addr %s382, 4
      %s384 = scalar_lea.vmem %s7, %s383
      %p385 = scmp.lt.s32.totalorder %s24, 1
      %s386 = scalar_select %p385, %s24, 1
      %p387 = scmp.lt.s32.totalorder %s25, 0
      %s388 = scalar_select %p387, %s25, 0
      %s389 = sadd.s32 %s388, %s386
      %s390 = smul.addr %s389, 4
      %s391 = scalar_lea.vmem %s8, %s390
      %v393 = vld [vmem:[%s367] sm:$0xf]
      %v394 = vld [vmem:[%s372] sm:$0xf]
      %v395 = vunpack.c.l.bf16 %v393
      %v396 = vunpack.c.l.bf16 %v394
      %v397 = vld [vmem:[%s377] sm:$0xff]
      %399 = vset.pattern.permute.xlu0 0
      %400 = vperm.xlu0 %399, %v397
      %v401 = vpop.permute.xlu0 %400
      %v403 = vsub.f32 %v395, %v401
      %404 = vset.pattern.permute.xlu0 1
      %405 = vperm.xlu0 %404, %v397
      %v406 = vpop.permute.xlu0 %405
      %v408 = vmul.f32 %v403, %v406
      %v409 = vsub.f32 %v396, %v401
      %v410 = vmul.f32 %v409, %v406
      %v411 = vxor.u32 %v408, 2147483648
      %v412 = vmul.f32 %v411, 1.442695
      %v413 = vpow.pop %v412
      %v414 = vadd.f32 %v413, 1.0
      %v415 = vrcp.pop %v414
      %v416 = vmul.f32 1.0, %v415
      %v417 = vmul.f32 %v408, %v416
      %v418 = vxor.u32 %v410, 2147483648
      %v419 = vmul.f32 %v418, 1.442695
      %v420 = vpow.pop %v419
      %v421 = vadd.f32 %v420, 1.0
      %v422 = vrcp.pop %v421
      %v423 = vmul.f32 1.0, %v422
      %v424 = vmul.f32 %v410, %v423
      %v425 = vpack.c.bf16 %v417, %v417
      %v426 = vpack.c.bf16 %v424, %v424
      %428 = vrot.lane.b32.xlu0 %v425, 1
      %v429 = vpop.permute.xlu0 %428
      %vm430 = vcmask 7168
      %v433 = vsel %vm430, %v426, %v429
      %434 = vrot.lane.b32.xlu0 %v425, 127
      %v435 = vpop.permute.xlu0 %434
      %437 = vrot.lane.b32.xlu0 %v426, 30
      %v438 = vpop.permute.xlu0 %437
      %vm439 = vcmask 252928
      %v442 = vsel %vm439, %v435, %v438
      %v443 = vrot.slane %v425, 4
      %vm444 = vcmask 1043456
      %v446 = vsel %vm444, %v433, %v443
      %v448 = vld [vmem:[%s3] sm:$0xf]
      %v449 = vld [vmem:[%s4] sm:$0xff]
      %451 = vset.pattern.permute.xlu0 0
      %452 = vperm.xlu0 %451, %v449
      %v453 = vpop.permute.xlu0 %452
      %vm455 = vcmask 195584
      %v457 = vsel %vm455, %v448, 0
      %v459 = vsel %vm444, %v442, 0
      %461 = vmatprep.subr.bf16.mxu0 0
      %462 = vmatpush1.bf16.msra.mxu0 %v446
      %463 = vmatprep.subr.bf16.mxu0 0
      %464 = vmatpush1.bf16.msra.mxu0 %v459
      %465 = vmatprep.subr.bf16.mxu0 0
      %466 = vmatpush1.bf16.msra.mxu0 0
      %467 = vmatprep.subr.bf16.mxu0 0
      %468 = vmatpush1.bf16.msra.mxu0 0
      %469 = vmatprep.subr.bf16.mxu0 0
      %470 = vmatpush1.bf16.msra.mxu0 0
      %471 = vmatprep.subr.bf16.mxu0 0
      %472 = vmatpush1.bf16.msra.mxu0 0
      %473 = vmatprep.subr.bf16.mxu0 0
      %474 = vmatpush1.bf16.msra.mxu0 0
      %475 = vmatprep.subr.bf16.mxu0 0
      %476 = vmatpush1.bf16.msra.mxu0 0
      %477 = vmatprep.subr.bf16.mxu0 0
      %478 = vmatpush1.bf16.msra.mxu0 0
      %479 = vmatprep.subr.bf16.mxu0 0
      %480 = vmatpush1.bf16.msra.mxu0 0
      %481 = vmatprep.subr.bf16.mxu0 0
      %482 = vmatpush1.bf16.msra.mxu0 0
      %483 = vmatprep.subr.bf16.mxu0 0
      %484 = vmatpush1.bf16.msra.mxu0 0
      %485 = vmatprep.subr.bf16.mxu0 0
      %486 = vmatpush1.bf16.msra.mxu0 0
      %487 = vmatprep.subr.bf16.mxu0 0
      %488 = vmatpush1.bf16.msra.mxu0 0
      %489 = vmatprep.subr.bf16.mxu0 0
      %490 = vmatpush1.bf16.msra.mxu0 0
      %491 = vmatprep.subr.bf16.mxu0 0
      %492 = vmatpush1.bf16.msra.mxu0 0
      %493 = vmatprep.mubr.bf16.mxu0 0
      %494 = vmatmul.mubr.bf16.gmra.mrb[0].mxu0 %v457
      %v495 = vpop.f32.mrb[0].mxu0
      %v496 = vadd.f32 %v453, %v495
      %v497 = vpop.f32.mrb[0].mxu0
      %v498 = vpop.f32.mrb[0].mxu0
      %v499 = vpop.f32.mrb[0].mxu0
      %500 = vdwg.mxu0
      %v501 = vpack.c.bf16 %v496, %v496
      %vm502 = vcmask 257024
      %503 = vst.msk [vmem:[%s384] sm:$0xf] %vm502, %v501
      %v504 = vld [vmem:[%s5] sm:$0xf]
      %v505 = vld [vmem:[%s6] sm:$0xff]
      %507 = vset.pattern.permute.xlu0 0
      %508 = vperm.xlu0 %507, %v505
      %v509 = vpop.permute.xlu0 %508
      %vm511 = vcmask 64512
      %v513 = vsel %vm511, %v504, 0
      %v516 = vsel %vm444, %v425, 0
      %518 = vmatprep.subr.bf16.mxu0 0
      %519 = vmatpush1.bf16.msra.mxu0 %v516
      %520 = vmatprep.subr.bf16.mxu0 0
      %521 = vmatpush1.bf16.msra.mxu0 0
      %522 = vmatprep.subr.bf16.mxu0 0
      %523 = vmatpush1.bf16.msra.mxu0 0
      %524 = vmatprep.subr.bf16.mxu0 0
      %525 = vmatpush1.bf16.msra.mxu0 0
      %526 = vmatprep.subr.bf16.mxu0 0
      %527 = vmatpush1.bf16.msra.mxu0 0
      %528 = vmatprep.subr.bf16.mxu0 0
      %529 = vmatpush1.bf16.msra.mxu0 0
      %530 = vmatprep.subr.bf16.mxu0 0
      %531 = vmatpush1.bf16.msra.mxu0 0
      %532 = vmatprep.subr.bf16.mxu0 0
      %533 = vmatpush1.bf16.msra.mxu0 0
      %534 = vmatprep.subr.bf16.mxu0 0
      %535 = vmatpush1.bf16.msra.mxu0 0
      %536 = vmatprep.subr.bf16.mxu0 0
      %537 = vmatpush1.bf16.msra.mxu0 0
      %538 = vmatprep.subr.bf16.mxu0 0
      %539 = vmatpush1.bf16.msra.mxu0 0
      %540 = vmatprep.subr.bf16.mxu0 0
      %541 = vmatpush1.bf16.msra.mxu0 0
      %542 = vmatprep.subr.bf16.mxu0 0
      %543 = vmatpush1.bf16.msra.mxu0 0
      %544 = vmatprep.subr.bf16.mxu0 0
      %545 = vmatpush1.bf16.msra.mxu0 0
      %546 = vmatprep.subr.bf16.mxu0 0
      %547 = vmatpush1.bf16.msra.mxu0 0
      %548 = vmatprep.subr.bf16.mxu0 0
      %549 = vmatpush1.bf16.msra.mxu0 0
      %550 = vmatprep.mubr.bf16.mxu0 0
      %551 = vmatmul.mubr.bf16.gmra.mrb[0].mxu0 %v513
      %v552 = vpop.f32.mrb[0].mxu0
      %v553 = vadd.f32 %v509, %v552
      %v554 = vpop.f32.mrb[0].mxu0
      %v555 = vpop.f32.mrb[0].mxu0
      %v556 = vpop.f32.mrb[0].mxu0
      %557 = vdwg.mxu0
      %v558 = vpack.c.bf16 %v553, %v553
      %559 = vst.msk [vmem:[%s391] sm:$0xf] %vm502, %v558
      %p560 = scmp.lt.s32.totalorder %s24, 1
      %s561 = scalar_select %p560, %s24, 1
      %p562 = scmp.lt.s32.totalorder %s25, 0
      %s563 = scalar_select %p562, %s25, 0
      %s564 = sadd.s32 %s563, %s561
      %s565 = smul.addr %s564, 4
      %s566 = scalar_lea.vmem %s7, %s565
      %p567 = scmp.lt.s32.totalorder %s24, 1
      %s568 = scalar_select %p567, %s24, 1
      %p569 = scmp.lt.s32.totalorder %s25, 0
      %s570 = scalar_select %p569, %s25, 0
      %s571 = sadd.s32 %s570, %s568
      %s572 = smul.addr %s571, 4
      %s573 = scalar_lea.vmem %s8, %s572
      // Predicated region
      $region49: #{decoder1d_forward.12} parent=47 // pred_check
        %p574 = pneg %p218
      $region50: #{decoder1d_forward.12} parent=47 // pred_check_branch
        %576 = sbr.rel (%p574) target = $region52
      $region51: #{decoder1d_forward.12} parent=47 // pred_region
        _
      $region52: #{decoder1d_forward.12} parent=47 // pred_fallthru
        _
      // Predicated region
      $region53: #{decoder1d_forward.12} parent=47 // pred_check
        %p577 = pneg %p246
      $region54: #{decoder1d_forward.12} parent=47 // pred_check_branch
        %579 = sbr.rel (%p577) target = $region56
      $region55: #{decoder1d_forward.12} parent=47 // pred_region
        _
      $region56: #{decoder1d_forward.12} parent=47 // pred_fallthru
        _
    $region48: #{decoder1d_forward.12} parent=5 // pred_fallthru
      _
    %p580 = scmp.le.s32.totalorder 2, %s15
    // Predicated region
    $region57: #{decoder1d_forward.12} parent=5 // pred_check
      %p581 = pneg %p580
    $region58: #{decoder1d_forward.12} parent=5 // pred_check_branch
      %583 = sbr.rel (%p581) target = $region60
    $region59: #{decoder1d_forward.12} parent=5 // pred_region
      %s584 = ssub.s32 %s15, 2
      // Predicated region
      $region61: #{decoder1d_forward.12} parent=59 // pred_check
        %p585 = pneg %p224
      $region62: #{decoder1d_forward.12} parent=59 // pred_check_branch
        %587 = sbr.rel (%p585) target = $region64
      $region63: #{decoder1d_forward.12} parent=59 // pred_region
        %p588 = scmp.lt.s32.totalorder %s26, 1
        %s589 = scalar_select %p588, %s26, 1
        %p590 = scmp.lt.s32.totalorder %s27, 0
        %s591 = scalar_select %p590, %s27, 0
        %s592 = sadd.s32 %s591, %s589
        %s593 = smul.addr %s592, 4
        %s594 = scalar_lea.vmem %s7, %s593
      $region64: #{decoder1d_forward.12} parent=59 // pred_fallthru
        _
      // Predicated region
      $region65: #{decoder1d_forward.12} parent=59 // pred_check
        %p595 = pneg %p252
      $region66: #{decoder1d_forward.12} parent=59 // pred_check_branch
        %597 = sbr.rel (%p595) target = $region68
      $region67: #{decoder1d_forward.12} parent=59 // pred_region
        %p598 = scmp.lt.s32.totalorder %s26, 1
        %s599 = scalar_select %p598, %s26, 1
        %p600 = scmp.lt.s32.totalorder %s27, 0
        %s601 = scalar_select %p600, %s27, 0
        %s602 = sadd.s32 %s601, %s599
        %s603 = smul.addr %s602, 4
        %s604 = scalar_lea.vmem %s8, %s603
      $region68: #{decoder1d_forward.12} parent=59 // pred_fallthru
        _
    $region60: #{decoder1d_forward.12} parent=5 // pred_fallthru
      _
  $region6: #{decoder1d_forward.12} parent=0 // loop_footer
    %s19 = sadd.s32 1, %s15
  $region7: #{decoder1d_forward.12} parent=0 // loop_footer_branch
    %14 = sbr.rel target = $region3
  $region8: #{decoder1d_forward.12} parent=0 // loop_exit
    _

// kernel: decoder1d_forward.13
$region0: #{decoder1d_forward.13}
  #allocation0 [shape = 'u32[]', space=smem, size = 0x4, offset = 0x4, fixed_abs, tag = 'smem constant byte address 0x4 - core index']
  #allocation1 [shape = 'u32[144,128]{1,0:T(1,128)}', space=vmem, size = 0x12000, scoped, tag = 'internal scratch']
  %s0 = inlined_call_operand.vmem [shape: bf16[2,8,32], index: 0, kind: input, shape index: {}]
  %s1 = inlined_call_operand.vmem [shape: bf16[2,8,2], index: 1, kind: input, shape index: {}]
  %s2 = inlined_call_operand.vmem [shape: f32[2,8,2], index: 2, kind: input, shape index: {}]
  %s3 = inlined_call_operand.vmem [shape: bf16[8,24], index: 3, kind: input, shape index: {}]
  %s4 = inlined_call_operand.vmem [shape: f32[8,1], index: 4, kind: input, shape index: {}]
  %s5 = inlined_call_operand.vmem [shape: bf16[2,8,32], index: 5, kind: input, shape index: {}]
  %s6 = inlined_call_operand.vmem [shape: bf16[2,8,32], index: 6, kind: output, shape index: {}]
  %s7 = sld [smem:[#allocation0]]
  $region57: #{decoder1d_forward.13} parent=0
    _
  %s9 = ssub.s32 1, %s7
  %s10 = scalar_select 0, %s9, %s7
  loop: start=0, step=1, limit=4
  $region2: #{decoder1d_forward.13} parent=0 // loop_pre_header
    _
  $region3: #{decoder1d_forward.13} parent=0 // loop_header
    %s12 = sphi 0, %s16
    %p13 = scmp.ge.s32.totalorder %s12, 4
    %s19 = sphi 0, %s31
    %s20 = sphi 0, %s27
    %s21 = sphi 0, %s19
    %s22 = sphi 0, %s20
    %s23 = sphi 0, %s21
    %s24 = sphi 0, %s22
    %s36 = sphi 0, %s38
    %s39 = sphi 0, %s36
    %s40 = sphi 0, %s39
    %s56 = sphi 0, %s40
    %s64 = sphi 0, %s66
    %s67 = sphi 0, %s64
    %s68 = sphi 0, %s67
    %s84 = sphi 0, %s68
    %s90 = sphi 0, %s92
    %s93 = sphi 0, %s90
    %s94 = sphi 0, %s93
    %s110 = sphi 0, %s94
    %s114 = sphi 0, %s114
    %s116 = sphi 0, %s114
    %s117 = sphi 0, %s116
    %s131 = sphi 0, %s117
    %s135 = sphi 0, %s135
    %s137 = sphi 0, %s135
    %s138 = sphi 0, %s137
    %s152 = sphi 0, %s138
    %s160 = sphi 0, %s162
    %s163 = sphi 0, %s160
    %s164 = sphi 0, %s163
    %s180 = sphi 0, %s164
    %s188 = sphi 0, %s190
    %s191 = sphi 0, %s188
    %s192 = sphi 0, %s191
    %s208 = sphi 0, %s192
  $region4: #{decoder1d_forward.13} parent=0 // loop_header_branch
    %15 = sbr.rel (%p13) target = $region8
  $region5: #{decoder1d_forward.13} parent=0 // loop_body
    %s17 = ssub.s32 %s12, 1
    %s18 = ssub.s32 %s12, 2
    %s25 = sadd.s32 1, %s20
    %p26 = scmp.ge.s32.totalorder %s25, 1
    %s27 = scalar_select %p26, 0, %s25
    %s28 = sadd.s32 1, %s19
    %s29 = scalar_select %p26, %s28, %s19
    %p30 = scmp.ge.s32.totalorder %s29, 2
    %s31 = scalar_select %p30, 0, %s29
    %s32 = ssub.s32 %s19, %s31
    %s33 = ssub.s32 %s20, %s27
    %s34 = sor.u32 %s32, %s33
    %p35 = scmp.eq.s32.totalorder %s34, 0
    %s37 = sadd.s32 %s36, 1
    %s38 = scalar_select %p35, %s36, %s37
    %p41 = pneg %p35
    %p42 = scmp.eq.s32.totalorder %s12, 1
    %p43 = por %p41, %p42
    %p44 = scmp.ne.s32.totalorder %s36, %s39
    %p45 = scmp.eq.s32.totalorder %s12, 0
    %p46 = por %p44, %p45
    %p47 = scmp.ne.s32.totalorder %s36, %s39
    %p48 = scmp.eq.s32.totalorder %s17, 1
    %p49 = por %p47, %p48
    %p50 = scmp.ne.s32.totalorder %s39, %s40
    %p51 = scmp.eq.s32.totalorder %s17, 0
    %p52 = por %p50, %p51
    %p53 = scmp.ne.s32.totalorder %s39, %s40
    %p54 = scmp.eq.s32.totalorder %s18, 1
    %p55 = por %p53, %p54
    %p57 = scmp.ne.s32.totalorder %s40, %s56
    %p58 = scmp.eq.s32.totalorder %s18, 0
    %p59 = por %p57, %p58
    %s60 = sadd.s32 %s19, %s20
    %s61 = sadd.s32 %s31, %s27
    %s62 = ssub.s32 %s60, %s61
    %p63 = scmp.eq.s32.totalorder %s62, 0
    %s65 = sadd.s32 %s64, 1
    %s66 = scalar_select %p63, %s64, %s65
    %p69 = pneg %p63
    %p70 = scmp.eq.s32.totalorder %s12, 1
    %p71 = por %p69, %p70
    %p72 = scmp.ne.s32.totalorder %s64, %s67
    %p73 = scmp.eq.s32.totalorder %s12, 0
    %p74 = por %p72, %p73
    %p75 = scmp.ne.s32.totalorder %s64, %s67
    %p76 = scmp.eq.s32.totalorder %s17, 1
    %p77 = por %p75, %p76
    %p78 = scmp.ne.s32.totalorder %s67, %s68
    %p79 = scmp.eq.s32.totalorder %s17, 0
    %p80 = por %p78, %p79
    %p81 = scmp.ne.s32.totalorder %s67, %s68
    %p82 = scmp.eq.s32.totalorder %s18, 1
    %p83 = por %p81, %p82
    %p85 = scmp.ne.s32.totalorder %s68, %s84
    %p86 = scmp.eq.s32.totalorder %s18, 0
    %p87 = por %p85, %p86
    %s88 = ssub.s32 %s19, %s31
    %p89 = scmp.eq.s32.totalorder %s88, 0
    %s91 = sadd.s32 %s90, 1
    %s92 = scalar_select %p89, %s90, %s91
    %p95 = pneg %p89
    %p96 = scmp.eq.s32.totalorder %s12, 1
    %p97 = por %p95, %p96
    %p98 = scmp.ne.s32.totalorder %s90, %s93
    %p99 = scmp.eq.s32.totalorder %s12, 0
    %p100 = por %p98, %p99
    %p101 = scmp.ne.s32.totalorder %s90, %s93
    %p102 = scmp.eq.s32.totalorder %s17, 1
    %p103 = por %p101, %p102
    %p104 = scmp.ne.s32.totalorder %s93, %s94
    %p105 = scmp.eq.s32.totalorder %s17, 0
    %p106 = por %p104, %p105
    %p107 = scmp.ne.s32.totalorder %s93, %s94
    %p108 = scmp.eq.s32.totalorder %s18, 1
    %p109 = por %p107, %p108
    %p111 = scmp.ne.s32.totalorder %s94, %s110
    %p112 = scmp.eq.s32.totalorder %s18, 0
    %p113 = por %p111, %p112
    %s115 = sadd.s32 %s114, 1
    %p118 = scmp.eq.s32.totalorder %s12, 1
    %p119 = scmp.ne.s32.totalorder %s114, %s116
    %p120 = scmp.eq.s32.totalorder %s12, 0
    %p121 = por %p119, %p120
    %p122 = scmp.ne.s32.totalorder %s114, %s116
    %p123 = scmp.eq.s32.totalorder %s17, 1
    %p124 = por %p122, %p123
    %p125 = scmp.ne.s32.totalorder %s116, %s117
    %p126 = scmp.eq.s32.totalorder %s17, 0
    %p127 = por %p125, %p126
    %p128 = scmp.ne.s32.totalorder %s116, %s117
    %p129 = scmp.eq.s32.totalorder %s18, 1
    %p130 = por %p128, %p129
    %p132 = scmp.ne.s32.totalorder %s117, %s131
    %p133 = scmp.eq.s32.totalorder %s18, 0
    %p134 = por %p132, %p133
    %s136 = sadd.s32 %s135, 1
    %p139 = scmp.eq.s32.totalorder %s12, 1
    %p140 = scmp.ne.s32.totalorder %s135, %s137
    %p141 = scmp.eq.s32.totalorder %s12, 0
    %p142 = por %p140, %p141
    %p143 = scmp.ne.s32.totalorder %s135, %s137
    %p144 = scmp.eq.s32.totalorder %s17, 1
    %p145 = por %p143, %p144
    %p146 = scmp.ne.s32.totalorder %s137, %s138
    %p147 = scmp.eq.s32.totalorder %s17, 0
    %p148 = por %p146, %p147
    %p149 = scmp.ne.s32.totalorder %s137, %s138
    %p150 = scmp.eq.s32.totalorder %s18, 1
    %p151 = por %p149, %p150
    %p153 = scmp.ne.s32.totalorder %s138, %s152
    %p154 = scmp.eq.s32.totalorder %s18, 0
    %p155 = por %p153, %p154
    %s156 = ssub.s32 %s19, %s31
    %s157 = ssub.s32 %s20, %s27
    %s158 = sor.u32 %s156, %s157
    %p159 = scmp.eq.s32.totalorder %s158, 0
    %s161 = sadd.s32 %s160, 1
    %s162 = scalar_select %p159, %s160, %s161
    %p165 = pneg %p159
    %p166 = scmp.eq.s32.totalorder %s12, 1
    %p167 = por %p165, %p166
    %p168 = scmp.ne.s32.totalorder %s160, %s163
    %p169 = scmp.eq.s32.totalorder %s12, 0
    %p170 = por %p168, %p169
    %p171 = scmp.ne.s32.totalorder %s160, %s163
    %p172 = scmp.eq.s32.totalorder %s17, 1
    %p173 = por %p171, %p172
    %p174 = scmp.ne.s32.totalorder %s163, %s164
    %p175 = scmp.eq.s32.totalorder %s17, 0
    %p176 = por %p174, %p175
    %p177 = scmp.ne.s32.totalorder %s163, %s164
    %p178 = scmp.eq.s32.totalorder %s18, 1
    %p179 = por %p177, %p178
    %p181 = scmp.ne.s32.totalorder %s164, %s180
    %p182 = scmp.eq.s32.totalorder %s18, 0
    %p183 = por %p181, %p182
    %s184 = ssub.s32 %s19, %s31
    %s185 = ssub.s32 %s20, %s27
    %s186 = sor.u32 %s184, %s185
    %p187 = scmp.eq.s32.totalorder %s186, 0
    %s189 = sadd.s32 %s188, 1
    %s190 = scalar_select %p187, %s188, %s189
    %p193 = pneg %p187
    %p194 = scmp.eq.s32.totalorder %s12, 1
    %p195 = por %p193, %p194
    %p196 = scmp.ne.s32.totalorder %s188, %s191
    %p197 = scmp.eq.s32.totalorder %s12, 0
    %p198 = por %p196, %p197
    %p199 = scmp.ne.s32.totalorder %s188, %s191
    %p200 = scmp.eq.s32.totalorder %s17, 1
    %p201 = por %p199, %p200
    %p202 = scmp.ne.s32.totalorder %s191, %s192
    %p203 = scmp.eq.s32.totalorder %s17, 0
    %p204 = por %p202, %p203
    %p205 = scmp.ne.s32.totalorder %s191, %s192
    %p206 = scmp.eq.s32.totalorder %s18, 1
    %p207 = por %p205, %p206
    %p209 = scmp.ne.s32.totalorder %s192, %s208
    %p210 = scmp.eq.s32.totalorder %s18, 0
    %p211 = por %p209, %p210
    %p212 = scmp.le.s32.totalorder 1, %s12
    %p213 = scmp.lt.s32.totalorder %s12, 3
    %p214 = pnand %p212, %p213
    %p215 = pneg %p214
    // Predicated region
    $region9: #{decoder1d_forward.13} parent=5 // pred_check
      _
    $region10: #{decoder1d_forward.13} parent=5 // pred_check_branch
      %217 = sbr.rel (%p214) target = $region12
    $region11: #{decoder1d_forward.13} parent=5 // pred_region
      %s218 = ssub.s32 %s12, 1
      // Predicated region
      $region13: #{decoder1d_forward.13} parent=11 // pred_check
        %p219 = pneg %p127
      $region14: #{decoder1d_forward.13} parent=11 // pred_check_branch
        %221 = sbr.rel (%p219) target = $region16
      $region15: #{decoder1d_forward.13} parent=11 // pred_region
        _
      $region16: #{decoder1d_forward.13} parent=11 // pred_fallthru
        _
      // Predicated region
      $region17: #{decoder1d_forward.13} parent=11 // pred_check
        %p222 = pneg %p148
      $region18: #{decoder1d_forward.13} parent=11 // pred_check_branch
        %224 = sbr.rel (%p222) target = $region20
      $region19: #{decoder1d_forward.13} parent=11 // pred_region
        _
      $region20: #{decoder1d_forward.13} parent=11 // pred_fallthru
        _
    $region12: #{decoder1d_forward.13} parent=5 // pred_fallthru
      _
    %p225 = scmp.lt.s32.totalorder %s12, 2
    // Predicated region
    $region21: #{decoder1d_forward.13} parent=5 // pred_check
      %p226 = pneg %p225
    $region22: #{decoder1d_forward.13} parent=5 // pred_check_branch
      %228 = sbr.rel (%p226) target = $region24
    $region23: #{decoder1d_forward.13} parent=5 // pred_region
      // Predicated region
      $region25: #{decoder1d_forward.13} parent=23 // pred_check
        %p229 = pneg %p46
      $region26: #{decoder1d_forward.13} parent=23 // pred_check_branch
        %231 = sbr.rel (%p229) target = $region28
      $region27: #{decoder1d_forward.13} parent=23 // pred_region
        %p232 = scmp.lt.s32.totalorder %s19, 1
        %s233 = scalar_select %p232, %s19, 1
        %p234 = scmp.lt.s32.totalorder %s20, 0
        %s235 = scalar_select %p234, %s20, 0
        %s236 = sadd.s32 %s235, %s233
        %s237 = smul.addr %s236, 4
        %s238 = scalar_lea.vmem %s0, %s237
      $region28: #{decoder1d_forward.13} parent=23 // pred_fallthru
        _
      // Predicated region
      $region29: #{decoder1d_forward.13} parent=23 // pred_check
        %p239 = pneg %p74
      $region30: #{decoder1d_forward.13} parent=23 // pred_check_branch
        %241 = sbr.rel (%p239) target = $region32
      $region31: #{decoder1d_forward.13} parent=23 // pred_region
        %s242 = sadd.s32 %s19, %s20
        %p243 = scmp.lt.s32.totalorder %s242, 1
        %s244 = scalar_select %p243, %s242, 1
        %s245 = smul.addr %s244, 4
        %s246 = scalar_lea.vmem %s1, %s245
        %s247 = sadd.s32 %s19, %s20
      $region32: #{decoder1d_forward.13} parent=23 // pred_fallthru
        _
      // Predicated region
      $region33: #{decoder1d_forward.13} parent=23 // pred_check
        %p248 = pneg %p100
      $region34: #{decoder1d_forward.13} parent=23 // pred_check_branch
        %250 = sbr.rel (%p248) target = $region36
      $region35: #{decoder1d_forward.13} parent=23 // pred_region
        %p251 = scmp.lt.s32.totalorder %s19, 1
        %s252 = scalar_select %p251, %s19, 1
        %s253 = smul.addr %s252, 8
        %s254 = scalar_lea.vmem %s2, %s253
      $region36: #{decoder1d_forward.13} parent=23 // pred_fallthru
        _
      // Predicated region
      $region37: #{decoder1d_forward.13} parent=23 // pred_check
        %p255 = pneg %p170
      $region38: #{decoder1d_forward.13} parent=23 // pred_check_branch
        %257 = sbr.rel (%p255) target = $region40
      $region39: #{decoder1d_forward.13} parent=23 // pred_region
        %p258 = scmp.lt.s32.totalorder %s19, 1
        %s259 = scalar_select %p258, %s19, 1
        %p260 = scmp.lt.s32.totalorder %s20, 0
        %s261 = scalar_select %p260, %s20, 0
        %s262 = sadd.s32 %s261, %s259
        %s263 = smul.addr %s262, 4
        %s264 = scalar_lea.vmem %s5, %s263
      $region40: #{decoder1d_forward.13} parent=23 // pred_fallthru
        _
    $region24: #{decoder1d_forward.13} parent=5 // pred_fallthru
      _
    %p265 = scmp.le.s32.totalorder 1, %s12
    %p266 = scmp.lt.s32.totalorder %s12, 3
    %p267 = pnand %p265, %p266
    %p268 = pneg %p267
    // Predicated region
    $region41: #{decoder1d_forward.13} parent=5 // pred_check
      _
    $region42: #{decoder1d_forward.13} parent=5 // pred_check_branch
      %270 = sbr.rel (%p267) target = $region44
    $region43: #{decoder1d_forward.13} parent=5 // pred_region
      %s271 = ssub.s32 %s12, 1
      %p272 = scmp.lt.s32.totalorder %s21, 1
      %s273 = scalar_select %p272, %s21, 1
      %p274 = scmp.lt.s32.totalorder %s22, 0
      %s275 = scalar_select %p274, %s22, 0
      %s276 = sadd.s32 %s275, %s273
      %s277 = smul.addr %s276, 4
      %s278 = scalar_lea.vmem %s0, %s277
      %p279 = pneg %p52
      %p280 = pneg %p49
      %s281 = sadd.s32 %s21, %s22
      %p282 = scmp.lt.s32.totalorder %s281, 1
      %s283 = scalar_select %p282, %s281, 1
      %s284 = smul.addr %s283, 4
      %s285 = scalar_lea.vmem %s1, %s284
      %p286 = pneg %p80
      %p287 = pneg %p77
      %p288 = scmp.lt.s32.totalorder %s21, 1
      %s289 = scalar_select %p288, %s21, 1
      %s290 = smul.addr %s289, 8
      %s291 = scalar_lea.vmem %s2, %s290
      %p292 = pneg %p106
      %p293 = pneg %p103
      %p294 = pneg %p127
      %p295 = pneg %p124
      %p296 = pneg %p148
      %p297 = pneg %p145
      %p298 = scmp.lt.s32.totalorder %s21, 1
      %s299 = scalar_select %p298, %s21, 1
      %p300 = scmp.lt.s32.totalorder %s22, 0
      %s301 = scalar_select %p300, %s22, 0
      %s302 = sadd.s32 %s301, %s299
      %s303 = smul.addr %s302, 4
      %s304 = scalar_lea.vmem %s5, %s303
      %p305 = pneg %p176
      %p306 = pneg %p173
      %p307 = pneg %p204
      %p308 = pneg %p201
      %p309 = scmp.lt.s32.totalorder %s21, 1
      %s310 = scalar_select %p309, %s21, 1
      %p311 = scmp.lt.s32.totalorder %s22, 0
      %s312 = scalar_select %p311, %s22, 0
      %s313 = sadd.s32 %s312, %s310
      %s314 = smul.addr %s313, 4
      %s315 = scalar_lea.vmem %s6, %s314
      %p316 = scmp.lt.s32.totalorder %s21, 1
      %s317 = scalar_select %p316, %s21, 1
      %p318 = scmp.lt.s32.totalorder %s22, 0
      %s319 = scalar_select %p318, %s22, 0
      %s320 = sadd.s32 %s319, %s317
      %s321 = smul.addr %s320, 4
      %s322 = scalar_lea.vmem %s0, %s321
      %s323 = sadd.s32 %s21, %s22
      %p324 = scmp.lt.s32.totalorder %s323, 1
      %s325 = scalar_select %p324, %s323, 1
      %s326 = smul.addr %s325, 4
      %s327 = scalar_lea.vmem %s1, %s326
      %s328 = sadd.s32 %s21, %s22
      %p329 = scmp.lt.s32.totalorder %s21, 1
      %s330 = scalar_select %p329, %s21, 1
      %s331 = smul.addr %s330, 8
      %s332 = scalar_lea.vmem %s2, %s331
      %p333 = scmp.lt.s32.totalorder %s21, 1
      %s334 = scalar_select %p333, %s21, 1
      %p335 = scmp.lt.s32.totalorder %s22, 0
      %s336 = scalar_select %p335, %s22, 0
      %s337 = sadd.s32 %s336, %s334
      %s338 = smul.addr %s337, 4
      %s339 = scalar_lea.vmem %s5, %s338
      %p340 = scmp.lt.s32.totalorder %s21, 1
      %s341 = scalar_select %p340, %s21, 1
      %p342 = scmp.lt.s32.totalorder %s22, 0
      %s343 = scalar_select %p342, %s22, 0
      %s344 = sadd.s32 %s343, %s341
      %s345 = smul.addr %s344, 4
      %s346 = scalar_lea.vmem %s6, %s345
      %v348 = vld [vmem:[%s322] sm:$0xf]
      %v349 = vld [vmem:[%s327] sm:$0xf]
      %v350 = vunpack.c.l.bf16 %v348
      %v351 = vunpack.c.l.bf16 %v349
      %v352 = vld [vmem:[%s332] sm:$0xff]
      %354 = vset.pattern.permute.xlu0 0
      %355 = vperm.xlu0 %354, %v352
      %v356 = vpop.permute.xlu0 %355
      %v358 = vsub.f32 %v350, %v356
      %359 = vset.pattern.permute.xlu0 1
      %360 = vperm.xlu0 %359, %v352
      %v361 = vpop.permute.xlu0 %360
      %v363 = vmul.f32 %v358, %v361
      %v364 = vsub.f32 %v351, %v356
      %v365 = vmul.f32 %v364, %v361
      %v366 = vxor.u32 %v363, 2147483648
      %v367 = vmul.f32 %v366, 1.442695
      %v368 = vpow.pop %v367
      %v369 = vadd.f32 %v368, 1.0
      %v370 = vrcp.pop %v369
      %v371 = vmul.f32 1.0, %v370
      %v372 = vmul.f32 %v363, %v371
      %v373 = vxor.u32 %v365, 2147483648
      %v374 = vmul.f32 %v373, 1.442695
      %v375 = vpow.pop %v374
      %v376 = vadd.f32 %v375, 1.0
      %v377 = vrcp.pop %v376
      %v378 = vmul.f32 1.0, %v377
      %v379 = vmul.f32 %v365, %v378
      %v380 = vpack.c.bf16 %v372, %v372
      %v381 = vpack.c.bf16 %v379, %v379
      %383 = vrot.lane.b32.xlu0 %v380, 1
      %v384 = vpop.permute.xlu0 %383
      %vm385 = vcmask 7168
      %v388 = vsel %vm385, %v381, %v384
      %389 = vrot.lane.b32.xlu0 %v380, 127
      %v390 = vpop.permute.xlu0 %389
      %392 = vrot.lane.b32.xlu0 %v381, 30
      %v393 = vpop.permute.xlu0 %392
      %vm394 = vcmask 252928
      %v397 = vsel %vm394, %v390, %v393
      %v398 = vrot.slane %v380, 4
      %vm399 = vcmask 1043456
      %v401 = vsel %vm399, %v388, %v398
      %v403 = vld [vmem:[%s3] sm:$0xf]
      %v404 = vld [vmem:[%s4] sm:$0xff]
      %406 = vset.pattern.permute.xlu0 0
      %407 = vperm.xlu0 %406, %v404
      %v408 = vpop.permute.xlu0 %407
      %vm410 = vcmask 195584
      %v412 = vsel %vm410, %v403, 0
      %v414 = vsel %vm399, %v397, 0
      %416 = vmatprep.subr.bf16.mxu0 0
      %417 = vmatpush1.bf16.msra.mxu0 %v401
      %418 = vmatprep.subr.bf16.mxu0 0
      %419 = vmatpush1.bf16.msra.mxu0 %v414
      %420 = vmatprep.subr.bf16.mxu0 0
      %421 = vmatpush1.bf16.msra.mxu0 0
      %422 = vmatprep.subr.bf16.mxu0 0
      %423 = vmatpush1.bf16.msra.mxu0 0
      %424 = vmatprep.subr.bf16.mxu0 0
      %425 = vmatpush1.bf16.msra.mxu0 0
      %426 = vmatprep.subr.bf16.mxu0 0
      %427 = vmatpush1.bf16.msra.mxu0 0
      %428 = vmatprep.subr.bf16.mxu0 0
      %429 = vmatpush1.bf16.msra.mxu0 0
      %430 = vmatprep.subr.bf16.mxu0 0
      %431 = vmatpush1.bf16.msra.mxu0 0
      %432 = vmatprep.subr.bf16.mxu0 0
      %433 = vmatpush1.bf16.msra.mxu0 0
      %434 = vmatprep.subr.bf16.mxu0 0
      %435 = vmatpush1.bf16.msra.mxu0 0
      %436 = vmatprep.subr.bf16.mxu0 0
      %437 = vmatpush1.bf16.msra.mxu0 0
      %438 = vmatprep.subr.bf16.mxu0 0
      %439 = vmatpush1.bf16.msra.mxu0 0
      %440 = vmatprep.subr.bf16.mxu0 0
      %441 = vmatpush1.bf16.msra.mxu0 0
      %442 = vmatprep.subr.bf16.mxu0 0
      %443 = vmatpush1.bf16.msra.mxu0 0
      %444 = vmatprep.subr.bf16.mxu0 0
      %445 = vmatpush1.bf16.msra.mxu0 0
      %446 = vmatprep.subr.bf16.mxu0 0
      %447 = vmatpush1.bf16.msra.mxu0 0
      %448 = vmatprep.mubr.bf16.mxu0 0
      %449 = vmatmul.mubr.bf16.gmra.mrb[0].mxu0 %v412
      %v450 = vpop.f32.mrb[0].mxu0
      %v451 = vadd.f32 %v408, %v450
      %v452 = vpop.f32.mrb[0].mxu0
      %v453 = vpop.f32.mrb[0].mxu0
      %v454 = vpop.f32.mrb[0].mxu0
      %455 = vdwg.mxu0
      %v456 = vld [vmem:[%s339] sm:$0xf]
      %v457 = vunpack.c.l.bf16 %v456
      %v458 = vadd.f32 %v451, %v457
      %v459 = vpack.c.bf16 %v458, %v458
      %vm460 = vcmask 257024
      %461 = vst.msk [vmem:[%s346] sm:$0xf] %vm460, %v459
      %p462 = scmp.lt.s32.totalorder %s21, 1
      %s463 = scalar_select %p462, %s21, 1
      %p464 = scmp.lt.s32.totalorder %s22, 0
      %s465 = scalar_select %p464, %s22, 0
      %s466 = sadd.s32 %s465, %s463
      %s467 = smul.addr %s466, 4
      %s468 = scalar_lea.vmem %s6, %s467
      // Predicated region
      $region45: #{decoder1d_forward.13} parent=43 // pred_check
        %p469 = pneg %p201
      $region46: #{decoder1d_forward.13} parent=43 // pred_check_branch
        %471 = sbr.rel (%p469) target = $region48
      $region47: #{decoder1d_forward.13} parent=43 // pred_region
        _
      $region48: #{decoder1d_forward.13} parent=43 // pred_fallthru
        _
    $region44: #{decoder1d_forward.13} parent=5 // pred_fallthru
      _
    %p472 = scmp.le.s32.totalorder 2, %s12
    // Predicated region
    $region49: #{decoder1d_forward.13} parent=5 // pred_check
      %p473 = pneg %p472
    $region50: #{decoder1d_forward.13} parent=5 // pred_check_branch
      %475 = sbr.rel (%p473) target = $region52
    $region51: #{decoder1d_forward.13} parent=5 // pred_region
      %s476 = ssub.s32 %s12, 2
      // Predicated region
      $region53: #{decoder1d_forward.13} parent=51 // pred_check
        %p477 = pneg %p207
      $region54: #{decoder1d_forward.13} parent=51 // pred_check_branch
        %479 = sbr.rel (%p477) target = $region56
      $region55: #{decoder1d_forward.13} parent=51 // pred_region
        %p480 = scmp.lt.s32.totalorder %s23, 1
        %s481 = scalar_select %p480, %s23, 1
        %p482 = scmp.lt.s32.totalorder %s24, 0
        %s483 = scalar_select %p482, %s24, 0
        %s484 = sadd.s32 %s483, %s481
        %s485 = smul.addr %s484, 4
        %s486 = scalar_lea.vmem %s6, %s485
      $region56: #{decoder1d_forward.13} parent=51 // pred_fallthru
        _
    $region52: #{decoder1d_forward.13} parent=5 // pred_fallthru
      _
  $region6: #{decoder1d_forward.13} parent=0 // loop_footer
    %s16 = sadd.s32 1, %s12
  $region7: #{decoder1d_forward.13} parent=0 // loop_footer_branch
    %11 = sbr.rel target = $region3
  $region8: #{decoder1d_forward.13} parent=0 // loop_exit
    _

// kernel: decoder1d_forward.14
$region0: #{decoder1d_forward.14}
  #allocation0 [shape = 'u32[]', space=smem, size = 0x4, offset = 0x4, fixed_abs, tag = 'smem constant byte address 0x4 - core index']
  #allocation1 [shape = 'u32[144,128]{1,0:T(1,128)}', space=vmem, size = 0x12000, scoped, tag = 'internal scratch']
  %s0 = inlined_call_operand.vmem [shape: bf16[2,8,32], index: 0, kind: input, shape index: {}]
  %s1 = inlined_call_operand.vmem [shape: bf16[16,8], index: 1, kind: input, shape index: {}]
  %s2 = inlined_call_operand.vmem [shape: f32[16,1], index: 2, kind: input, shape index: {}]
  %s3 = inlined_call_operand.vmem [shape: bf16[2,16,32], index: 3, kind: output, shape index: {}]
  %s4 = sld [smem:[#allocation0]]
  $region45: #{decoder1d_forward.14} parent=0
    _
  %s6 = ssub.s32 1, %s4
  %s7 = scalar_select 0, %s6, %s4
  loop: start=0, step=1, limit=4
  $region2: #{decoder1d_forward.14} parent=0 // loop_pre_header
    _
  $region3: #{decoder1d_forward.14} parent=0 // loop_header
    %s9 = sphi 0, %s13
    %p10 = scmp.ge.s32.totalorder %s9, 4
    %s16 = sphi 0, %s28
    %s17 = sphi 0, %s24
    %s18 = sphi 0, %s16
    %s19 = sphi 0, %s17
    %s20 = sphi 0, %s18
    %s21 = sphi 0, %s19
    %s33 = sphi 0, %s35
    %s36 = sphi 0, %s33
    %s37 = sphi 0, %s36
    %s53 = sphi 0, %s37
    %s57 = sphi 0, %s57
    %s59 = sphi 0, %s57
    %s60 = sphi 0, %s59
    %s74 = sphi 0, %s60
    %s78 = sphi 0, %s78
    %s80 = sphi 0, %s78
    %s81 = sphi 0, %s80
    %s95 = sphi 0, %s81
    %s103 = sphi 0, %s105
    %s106 = sphi 0, %s103
    %s107 = sphi 0, %s106
    %s123 = sphi 0, %s107
  $region4: #{decoder1d_forward.14} parent=0 // loop_header_branch
    %12 = sbr.rel (%p10) target = $region8
  $region5: #{decoder1d_forward.14} parent=0 // loop_body
    %s14 = ssub.s32 %s9, 1
    %s15 = ssub.s32 %s9, 2
    %s22 = sadd.s32 1, %s17
    %p23 = scmp.ge.s32.totalorder %s22, 1
    %s24 = scalar_select %p23, 0, %s22
    %s25 = sadd.s32 1, %s16
    %s26 = scalar_select %p23, %s25, %s16
    %p27 = scmp.ge.s32.totalorder %s26, 2
    %s28 = scalar_select %p27, 0, %s26
    %s29 = ssub.s32 %s16, %s28
    %s30 = ssub.s32 %s17, %s24
    %s31 = sor.u32 %s29, %s30
    %p32 = scmp.eq.s32.totalorder %s31, 0
    %s34 = sadd.s32 %s33, 1
    %s35 = scalar_select %p32, %s33, %s34
    %p38 = pneg %p32
    %p39 = scmp.eq.s32.totalorder %s9, 1
    %p40 = por %p38, %p39
    %p41 = scmp.ne.s32.totalorder %s33, %s36
    %p42 = scmp.eq.s32.totalorder %s9, 0
    %p43 = por %p41, %p42
    %p44 = scmp.ne.s32.totalorder %s33, %s36
    %p45 = scmp.eq.s32.totalorder %s14, 1
    %p46 = por %p44, %p45
    %p47 = scmp.ne.s32.totalorder %s36, %s37
    %p48 = scmp.eq.s32.totalorder %s14, 0
    %p49 = por %p47, %p48
    %p50 = scmp.ne.s32.totalorder %s36, %s37
    %p51 = scmp.eq.s32.totalorder %s15, 1
    %p52 = por %p50, %p51
    %p54 = scmp.ne.s32.totalorder %s37, %s53
    %p55 = scmp.eq.s32.totalorder %s15, 0
    %p56 = por %p54, %p55
    %s58 = sadd.s32 %s57, 1
    %p61 = scmp.eq.s32.totalorder %s9, 1
    %p62 = scmp.ne.s32.totalorder %s57, %s59
    %p63 = scmp.eq.s32.totalorder %s9, 0
    %p64 = por %p62, %p63
    %p65 = scmp.ne.s32.totalorder %s57, %s59
    %p66 = scmp.eq.s32.totalorder %s14, 1
    %p67 = por %p65, %p66
    %p68 = scmp.ne.s32.totalorder %s59, %s60
    %p69 = scmp.eq.s32.totalorder %s14, 0
    %p70 = por %p68, %p69
    %p71 = scmp.ne.s32.totalorder %s59, %s60
    %p72 = scmp.eq.s32.totalorder %s15, 1
    %p73 = por %p71, %p72
    %p75 = scmp.ne.s32.totalorder %s60, %s74
    %p76 = scmp.eq.s32.totalorder %s15, 0
    %p77 = por %p75, %p76
    %s79 = sadd.s32 %s78, 1
    %p82 = scmp.eq.s32.totalorder %s9, 1
    %p83 = scmp.ne.s32.totalorder %s78, %s80
    %p84 = scmp.eq.s32.totalorder %s9, 0
    %p85 = por %p83, %p84
    %p86 = scmp.ne.s32.totalorder %s78, %s80
    %p87 = scmp.eq.s32.totalorder %s14, 1
    %p88 = por %p86, %p87
    %p89 = scmp.ne.s32.totalorder %s80, %s81
    %p90 = scmp.eq.s32.totalorder %s14, 0
    %p91 = por %p89, %p90
    %p92 = scmp.ne.s32.totalorder %s80, %s81
    %p93 = scmp.eq.s32.totalorder %s15, 1
    %p94 = por %p92, %p93
    %p96 = scmp.ne.s32.totalorder %s81, %s95
    %p97 = scmp.eq.s32.totalorder %s15, 0
    %p98 = por %p96, %p97
    %s99 = ssub.s32 %s16, %s28
    %s100 = ssub.s32 %s17, %s24
    %s101 = sor.u32 %s99, %s100
    %p102 = scmp.eq.s32.totalorder %s101, 0
    %s104 = sadd.s32 %s103, 1
    %s105 = scalar_select %p102, %s103, %s104
    %p108 = pneg %p102
    %p109 = scmp.eq.s32.totalorder %s9, 1
    %p110 = por %p108, %p109
    %p111 = scmp.ne.s32.totalorder %s103, %s106
    %p112 = scmp.eq.s32.totalorder %s9, 0
    %p113 = por %p111, %p112
    %p114 = scmp.ne.s32.totalorder %s103, %s106
    %p115 = scmp.eq.s32.totalorder %s14, 1
    %p116 = por %p114, %p115
    %p117 = scmp.ne.s32.totalorder %s106, %s107
    %p118 = scmp.eq.s32.totalorder %s14, 0
    %p119 = por %p117, %p118
    %p120 = scmp.ne.s32.totalorder %s106, %s107
    %p121 = scmp.eq.s32.totalorder %s15, 1
    %p122 = por %p120, %p121
    %p124 = scmp.ne.s32.totalorder %s107, %s123
    %p125 = scmp.eq.s32.totalorder %s15, 0
    %p126 = por %p124, %p125
    %p127 = scmp.le.s32.totalorder 1, %s9
    %p128 = scmp.lt.s32.totalorder %s9, 3
    %p129 = pnand %p127, %p128
    %p130 = pneg %p129
    // Predicated region
    $region9: #{decoder1d_forward.14} parent=5 // pred_check
      _
    $region10: #{decoder1d_forward.14} parent=5 // pred_check_branch
      %132 = sbr.rel (%p129) target = $region12
    $region11: #{decoder1d_forward.14} parent=5 // pred_region
      %s133 = ssub.s32 %s9, 1
      // Predicated region
      $region13: #{decoder1d_forward.14} parent=11 // pred_check
        %p134 = pneg %p70
      $region14: #{decoder1d_forward.14} parent=11 // pred_check_branch
        %136 = sbr.rel (%p134) target = $region16
      $region15: #{decoder1d_forward.14} parent=11 // pred_region
        _
      $region16: #{decoder1d_forward.14} parent=11 // pred_fallthru
        _
      // Predicated region
      $region17: #{decoder1d_forward.14} parent=11 // pred_check
        %p137 = pneg %p91
      $region18: #{decoder1d_forward.14} parent=11 // pred_check_branch
        %139 = sbr.rel (%p137) target = $region20
      $region19: #{decoder1d_forward.14} parent=11 // pred_region
        _
      $region20: #{decoder1d_forward.14} parent=11 // pred_fallthru
        _
    $region12: #{decoder1d_forward.14} parent=5 // pred_fallthru
      _
    %p140 = scmp.lt.s32.totalorder %s9, 2
    // Predicated region
    $region21: #{decoder1d_forward.14} parent=5 // pred_check
      %p141 = pneg %p140
    $region22: #{decoder1d_forward.14} parent=5 // pred_check_branch
      %143 = sbr.rel (%p141) target = $region24
    $region23: #{decoder1d_forward.14} parent=5 // pred_region
      // Predicated region
      $region25: #{decoder1d_forward.14} parent=23 // pred_check
        %p144 = pneg %p43
      $region26: #{decoder1d_forward.14} parent=23 // pred_check_branch
        %146 = sbr.rel (%p144) target = $region28
      $region27: #{decoder1d_forward.14} parent=23 // pred_region
        %p147 = scmp.lt.s32.totalorder %s16, 1
        %s148 = scalar_select %p147, %s16, 1
        %p149 = scmp.lt.s32.totalorder %s17, 0
        %s150 = scalar_select %p149, %s17, 0
        %s151 = sadd.s32 %s150, %s148
        %s152 = smul.addr %s151, 4
        %s153 = scalar_lea.vmem %s0, %s152
      $region28: #{decoder1d_forward.14} parent=23 // pred_fallthru
        _
    $region24: #{decoder1d_forward.14} parent=5 // pred_fallthru
      _
    %p154 = scmp.le.s32.totalorder 1, %s9
    %p155 = scmp.lt.s32.totalorder %s9, 3
    %p156 = pnand %p154, %p155
    %p157 = pneg %p156
    // Predicated region
    $region29: #{decoder1d_forward.14} parent=5 // pred_check
      _
    $region30: #{decoder1d_forward.14} parent=5 // pred_check_branch
      %159 = sbr.rel (%p156) target = $region32
    $region31: #{decoder1d_forward.14} parent=5 // pred_region
      %s160 = ssub.s32 %s9, 1
      %p161 = scmp.lt.s32.totalorder %s18, 1
      %s162 = scalar_select %p161, %s18, 1
      %p163 = scmp.lt.s32.totalorder %s19, 0
      %s164 = scalar_select %p163, %s19, 0
      %s165 = sadd.s32 %s164, %s162
      %s166 = smul.addr %s165, 4
      %s167 = scalar_lea.vmem %s0, %s166
      %p168 = pneg %p49
      %p169 = pneg %p46
      %p170 = pneg %p70
      %p171 = pneg %p67
      %p172 = pneg %p91
      %p173 = pneg %p88
      %p174 = pneg %p119
      %p175 = pneg %p116
      %p176 = scmp.lt.s32.totalorder %s18, 1
      %s177 = scalar_select %p176, %s18, 1
      %p178 = scmp.lt.s32.totalorder %s19, 0
      %s179 = scalar_select %p178, %s19, 0
      %s180 = smul.addr %s177, 2
      %s181 = sadd.s32 %s179, %s180
      %s182 = smul.addr %s181, 4
      %s183 = scalar_lea.vmem %s3, %s182
      %p184 = scmp.lt.s32.totalorder %s18, 1
      %s185 = scalar_select %p184, %s18, 1
      %p186 = scmp.lt.s32.totalorder %s19, 0
      %s187 = scalar_select %p186, %s19, 0
      %s188 = sadd.s32 %s187, %s185
      %s189 = smul.addr %s188, 4
      %s190 = scalar_lea.vmem %s0, %s189
      %p191 = scmp.lt.s32.totalorder %s18, 1
      %s192 = scalar_select %p191, %s18, 1
      %p193 = scmp.lt.s32.totalorder %s19, 0
      %s194 = scalar_select %p193, %s19, 0
      %s195 = smul.addr %s192, 2
      %s196 = sadd.s32 %s194, %s195
      %s197 = smul.addr %s196, 4
      %s198 = scalar_lea.vmem %s3, %s197
      %v200 = vld [vmem:[%s1] sm:$0xf]
      %v201 = vld [vmem:[%s1 + $0x4] sm:$0xf]
      %v202 = vld [vmem:[%s190] sm:$0xf]
      %v203 = vld [vmem:[%s2] sm:$0xff]
      %v204 = vld [vmem:[%s2 + $0x8] sm:$0xff]
      %206 = vset.pattern.permute.xlu0 0
      %207 = vperm.xlu0 %206, %v203
      %v208 = vpop.permute.xlu0 %207
      %211 = vset.pattern.permute.xlu0 0
      %212 = vperm.xlu0 %211, %v204
      %v213 = vpop.permute.xlu0 %212
      %v217 = vunpack.c.l.b16 %v200
      %v218 = vunpack.c.l.b16 %v201
      %v219 = vpack.c.b16 %v218, %v217
      %vm220 = vcmask 64512
      %v222 = vsel %vm220, %v219, 0
      %vm224 = vcmask 1043456
      %v226 = vsel %vm224, %v202, 0
      %228 = vmatprep.subr.bf16.mxu0 0
      %229 = vmatpush1.bf16.msra.mxu0 %v226
      %230 = vmatprep.subr.bf16.mxu0 0
      %231 = vmatpush1.bf16.msra.mxu0 0
      %232 = vmatprep.subr.bf16.mxu0 0
      %233 = vmatpush1.bf16.msra.mxu0 0
      %234 = vmatprep.subr.bf16.mxu0 0
      %235 = vmatpush1.bf16.msra.mxu0 0
      %236 = vmatprep.subr.bf16.mxu0 0
      %237 = vmatpush1.bf16.msra.mxu0 0
      %238 = vmatprep.subr.bf16.mxu0 0
      %239 = vmatpush1.bf16.msra.mxu0 0
      %240 = vmatprep.subr.bf16.mxu0 0
      %241 = vmatpush1.bf16.msra.mxu0 0
      %242 = vmatprep.subr.bf16.mxu0 0
      %243 = vmatpush1.bf16.msra.mxu0 0
      %244 = vmatprep.subr.bf16.mxu0 0
      %245 = vmatpush1.bf16.msra.mxu0 0
      %246 = vmatprep.subr.bf16.mxu0 0
      %247 = vmatpush1.bf16.msra.mxu0 0
      %248 = vmatprep.subr.bf16.mxu0 0
      %249 = vmatpush1.bf16.msra.mxu0 0
      %250 = vmatprep.subr.bf16.mxu0 0
      %251 = vmatpush1.bf16.msra.mxu0 0
      %252 = vmatprep.subr.bf16.mxu0 0
      %253 = vmatpush1.bf16.msra.mxu0 0
      %254 = vmatprep.subr.bf16.mxu0 0
      %255 = vmatpush1.bf16.msra.mxu0 0
      %256 = vmatprep.subr.bf16.mxu0 0
      %257 = vmatpush1.bf16.msra.mxu0 0
      %258 = vmatprep.subr.bf16.mxu0 0
      %259 = vmatpush1.bf16.msra.mxu0 0
      %260 = vmatprep.mubr.bf16.mxu0 0
      %261 = vmatmul.mubr.bf16.gmra.mrb[0].mxu0 %v222
      %v262 = vpop.f32.mrb[0].mxu0
      %v263 = vadd.f32 %v208, %v262
      %v264 = vpop.f32.mrb[0].mxu0
      %v265 = vpop.f32.mrb[0].mxu0
      %v266 = vadd.f32 %v213, %v265
      %v267 = vpop.f32.mrb[0].mxu0
      %268 = vdwg.mxu0
      %v269 = vpack.c.bf16 %v266, %v263
      %v271 = vunpack.c.l.b16 %v269
      %v272 = vunpack.c.h.b16 %v269
      %v273 = vpack.c.b16 %v271, %v271
      %v274 = vpack.c.b16 %v272, %v272
      %vm277 = vcmask 257024
      %278 = vst.msk [vmem:[%s198] sm:$0xf] %vm277, %v273
      %279 = vst.msk [vmem:[%s198 + $0x4] sm:$0xf] %vm277, %v274
      %p280 = scmp.lt.s32.totalorder %s18, 1
      %s281 = scalar_select %p280, %s18, 1
      %p282 = scmp.lt.s32.totalorder %s19, 0
      %s283 = scalar_select %p282, %s19, 0
      %s284 = smul.addr %s281, 2
      %s285 = sadd.s32 %s283, %s284
      %s286 = smul.addr %s285, 4
      %s287 = scalar_lea.vmem %s3, %s286
      // Predicated region
      $region33: #{decoder1d_forward.14} parent=31 // pred_check
        %p288 = pneg %p116
      $region34: #{decoder1d_forward.14} parent=31 // pred_check_branch
        %290 = sbr.rel (%p288) target = $region36
      $region35: #{decoder1d_forward.14} parent=31 // pred_region
        _
      $region36: #{decoder1d_forward.14} parent=31 // pred_fallthru
        _
    $region32: #{decoder1d_forward.14} parent=5 // pred_fallthru
      _
    %p291 = scmp.le.s32.totalorder 2, %s9
    // Predicated region
    $region37: #{decoder1d_forward.14} parent=5 // pred_check
      %p292 = pneg %p291
    $region38: #{decoder1d_forward.14} parent=5 // pred_check_branch
      %294 = sbr.rel (%p292) target = $region40
    $region39: #{decoder1d_forward.14} parent=5 // pred_region
      %s295 = ssub.s32 %s9, 2
      // Predicated region
      $region41: #{decoder1d_forward.14} parent=39 // pred_check
        %p296 = pneg %p122
      $region42: #{decoder1d_forward.14} parent=39 // pred_check_branch
        %298 = sbr.rel (%p296) target = $region44
      $region43: #{decoder1d_forward.14} parent=39 // pred_region
        %p299 = scmp.lt.s32.totalorder %s20, 1
        %s300 = scalar_select %p299, %s20, 1
        %p301 = scmp.lt.s32.totalorder %s21, 0
        %s302 = scalar_select %p301, %s21, 0
        %s303 = smul.addr %s300, 2
        %s304 = sadd.s32 %s302, %s303
        %s305 = smul.addr %s304, 4
        %s306 = scalar_lea.vmem %s3, %s305
      $region44: #{decoder1d_forward.14} parent=39 // pred_fallthru
        _
    $region40: #{decoder1d_forward.14} parent=5 // pred_fallthru
      _
  $region6: #{decoder1d_forward.14} parent=0 // loop_footer
    %s13 = sadd.s32 1, %s9
  $region7: #{decoder1d_forward.14} parent=0 // loop_footer_branch
    %8 = sbr.rel target = $region3
  $region8: #{decoder1d_forward.14} parent=0 // loop_exit
    _

// kernel: decoder1d_forward.16
$region0: #{decoder1d_forward.16}
  #allocation0 [shape = 'u32[]', space=smem, size = 0x4, offset = 0x4, fixed_abs, tag = 'smem constant byte address 0x4 - core index']
  #allocation1 [shape = 'u32[144,128]{1,0:T(1,128)}', space=vmem, size = 0x12000, scoped, tag = 'internal scratch']
  %s0 = inlined_call_operand.vmem [shape: bf16[2,4,128], index: 0, kind: input, shape index: {}]
  %s1 = inlined_call_operand.vmem [shape: bf16[2,4,2], index: 1, kind: input, shape index: {}]
  %s2 = inlined_call_operand.vmem [shape: f32[2,4,2], index: 2, kind: input, shape index: {}]
  %s3 = inlined_call_operand.vmem [shape: bf16[4,12], index: 3, kind: input, shape index: {}]
  %s4 = inlined_call_operand.vmem [shape: f32[4,1], index: 4, kind: input, shape index: {}]
  %s5 = inlined_call_operand.vmem [shape: bf16[2,4,128], index: 5, kind: input, shape index: {}]
  %s6 = inlined_call_operand.vmem [shape: bf16[2,4,128], index: 6, kind: output, shape index: {}]
  %s7 = sld [smem:[#allocation0]]
  $region57: #{decoder1d_forward.16} parent=0
    _
  %s9 = ssub.s32 1, %s7
  %s10 = scalar_select 0, %s9, %s7
  loop: start=0, step=1, limit=4
  $region2: #{decoder1d_forward.16} parent=0 // loop_pre_header
    _
  $region3: #{decoder1d_forward.16} parent=0 // loop_header
    %s12 = sphi 0, %s16
    %p13 = scmp.ge.s32.totalorder %s12, 4
    %s19 = sphi 0, %s31
    %s20 = sphi 0, %s27
    %s21 = sphi 0, %s19
    %s22 = sphi 0, %s20
    %s23 = sphi 0, %s21
    %s24 = sphi 0, %s22
    %s36 = sphi 0, %s38
    %s39 = sphi 0, %s36
    %s40 = sphi 0, %s39
    %s56 = sphi 0, %s40
    %s64 = sphi 0, %s66
    %s67 = sphi 0, %s64
    %s68 = sphi 0, %s67
    %s84 = sphi 0, %s68
    %s90 = sphi 0, %s92
    %s93 = sphi 0, %s90
    %s94 = sphi 0, %s93
    %s110 = sphi 0, %s94
    %s114 = sphi 0, %s114
    %s116 = sphi 0, %s114
    %s117 = sphi 0, %s116
    %s131 = sphi 0, %s117
    %s135 = sphi 0, %s135
    %s137 = sphi 0, %s135
    %s138 = sphi 0, %s137
    %s152 = sphi 0, %s138
    %s160 = sphi 0, %s162
    %s163 = sphi 0, %s160
    %s164 = sphi 0, %s163
    %s180 = sphi 0, %s164
    %s188 = sphi 0, %s190
    %s191 = sphi 0, %s188
    %s192 = sphi 0, %s191
    %s208 = sphi 0, %s192
  $region4: #{decoder1d_forward.16} parent=0 // loop_header_branch
    %15 = sbr.rel (%p13) target = $region8
  $region5: #{decoder1d_forward.16} parent=0 // loop_body
    %s17 = ssub.s32 %s12, 1
    %s18 = ssub.s32 %s12, 2
    %s25 = sadd.s32 1, %s20
    %p26 = scmp.ge.s32.totalorder %s25, 1
    %s27 = scalar_select %p26, 0, %s25
    %s28 = sadd.s32 1, %s19
    %s29 = scalar_select %p26, %s28, %s19
    %p30 = scmp.ge.s32.totalorder %s29, 2
    %s31 = scalar_select %p30, 0, %s29
    %s32 = ssub.s32 %s19, %s31
    %s33 = ssub.s32 %s20, %s27
    %s34 = sor.u32 %s32, %s33
    %p35 = scmp.eq.s32.totalorder %s34, 0
    %s37 = sadd.s32 %s36, 1
    %s38 = scalar_select %p35, %s36, %s37
    %p41 = pneg %p35
    %p42 = scmp.eq.s32.totalorder %s12, 1
    %p43 = por %p41, %p42
    %p44 = scmp.ne.s32.totalorder %s36, %s39
    %p45 = scmp.eq.s32.totalorder %s12, 0
    %p46 = por %p44, %p45
    %p47 = scmp.ne.s32.totalorder %s36, %s39
    %p48 = scmp.eq.s32.totalorder %s17, 1
    %p49 = por %p47, %p48
    %p50 = scmp.ne.s32.totalorder %s39, %s40
    %p51 = scmp.eq.s32.totalorder %s17, 0
    %p52 = por %p50, %p51
    %p53 = scmp.ne.s32.totalorder %s39, %s40
    %p54 = scmp.eq.s32.totalorder %s18, 1
    %p55 = por %p53, %p54
    %p57 = scmp.ne.s32.totalorder %s40, %s56
    %p58 = scmp.eq.s32.totalorder %s18, 0
    %p59 = por %p57, %p58
    %s60 = sadd.s32 %s19, %s20
    %s61 = sadd.s32 %s31, %s27
    %s62 = ssub.s32 %s60, %s61
    %p63 = scmp.eq.s32.totalorder %s62, 0
    %s65 = sadd.s32 %s64, 1
    %s66 = scalar_select %p63, %s64, %s65
    %p69 = pneg %p63
    %p70 = scmp.eq.s32.totalorder %s12, 1
    %p71 = por %p69, %p70
    %p72 = scmp.ne.s32.totalorder %s64, %s67
    %p73 = scmp.eq.s32.totalorder %s12, 0
    %p74 = por %p72, %p73
    %p75 = scmp.ne.s32.totalorder %s64, %s67
    %p76 = scmp.eq.s32.totalorder %s17, 1
    %p77 = por %p75, %p76
    %p78 = scmp.ne.s32.totalorder %s67, %s68
    %p79 = scmp.eq.s32.totalorder %s17, 0
    %p80 = por %p78, %p79
    %p81 = scmp.ne.s32.totalorder %s67, %s68
    %p82 = scmp.eq.s32.totalorder %s18, 1
    %p83 = por %p81, %p82
    %p85 = scmp.ne.s32.totalorder %s68, %s84
    %p86 = scmp.eq.s32.totalorder %s18, 0
    %p87 = por %p85, %p86
    %s88 = ssub.s32 %s19, %s31
    %p89 = scmp.eq.s32.totalorder %s88, 0
    %s91 = sadd.s32 %s90, 1
    %s92 = scalar_select %p89, %s90, %s91
    %p95 = pneg %p89
    %p96 = scmp.eq.s32.totalorder %s12, 1
    %p97 = por %p95, %p96
    %p98 = scmp.ne.s32.totalorder %s90, %s93
    %p99 = scmp.eq.s32.totalorder %s12, 0
    %p100 = por %p98, %p99
    %p101 = scmp.ne.s32.totalorder %s90, %s93
    %p102 = scmp.eq.s32.totalorder %s17, 1
    %p103 = por %p101, %p102
    %p104 = scmp.ne.s32.totalorder %s93, %s94
    %p105 = scmp.eq.s32.totalorder %s17, 0
    %p106 = por %p104, %p105
    %p107 = scmp.ne.s32.totalorder %s93, %s94
    %p108 = scmp.eq.s32.totalorder %s18, 1
    %p109 = por %p107, %p108
    %p111 = scmp.ne.s32.totalorder %s94, %s110
    %p112 = scmp.eq.s32.totalorder %s18, 0
    %p113 = por %p111, %p112
    %s115 = sadd.s32 %s114, 1
    %p118 = scmp.eq.s32.totalorder %s12, 1
    %p119 = scmp.ne.s32.totalorder %s114, %s116
    %p120 = scmp.eq.s32.totalorder %s12, 0
    %p121 = por %p119, %p120
    %p122 = scmp.ne.s32.totalorder %s114, %s116
    %p123 = scmp.eq.s32.totalorder %s17, 1
    %p124 = por %p122, %p123
    %p125 = scmp.ne.s32.totalorder %s116, %s117
    %p126 = scmp.eq.s32.totalorder %s17, 0
    %p127 = por %p125, %p126
    %p128 = scmp.ne.s32.totalorder %s116, %s117
    %p129 = scmp.eq.s32.totalorder %s18, 1
    %p130 = por %p128, %p129
    %p132 = scmp.ne.s32.totalorder %s117, %s131
    %p133 = scmp.eq.s32.totalorder %s18, 0
    %p134 = por %p132, %p133
    %s136 = sadd.s32 %s135, 1
    %p139 = scmp.eq.s32.totalorder %s12, 1
    %p140 = scmp.ne.s32.totalorder %s135, %s137
    %p141 = scmp.eq.s32.totalorder %s12, 0
    %p142 = por %p140, %p141
    %p143 = scmp.ne.s32.totalorder %s135, %s137
    %p144 = scmp.eq.s32.totalorder %s17, 1
    %p145 = por %p143, %p144
    %p146 = scmp.ne.s32.totalorder %s137, %s138
    %p147 = scmp.eq.s32.totalorder %s17, 0
    %p148 = por %p146, %p147
    %p149 = scmp.ne.s32.totalorder %s137, %s138
    %p150 = scmp.eq.s32.totalorder %s18, 1
    %p151 = por %p149, %p150
    %p153 = scmp.ne.s32.totalorder %s138, %s152
    %p154 = scmp.eq.s32.totalorder %s18, 0
    %p155 = por %p153, %p154
    %s156 = ssub.s32 %s19, %s31
    %s157 = ssub.s32 %s20, %s27
    %s158 = sor.u32 %s156, %s157
    %p159 = scmp.eq.s32.totalorder %s158, 0
    %s161 = sadd.s32 %s160, 1
    %s162 = scalar_select %p159, %s160, %s161
    %p165 = pneg %p159
    %p166 = scmp.eq.s32.totalorder %s12, 1
    %p167 = por %p165, %p166
    %p168 = scmp.ne.s32.totalorder %s160, %s163
    %p169 = scmp.eq.s32.totalorder %s12, 0
    %p170 = por %p168, %p169
    %p171 = scmp.ne.s32.totalorder %s160, %s163
    %p172 = scmp.eq.s32.totalorder %s17, 1
    %p173 = por %p171, %p172
    %p174 = scmp.ne.s32.totalorder %s163, %s164
    %p175 = scmp.eq.s32.totalorder %s17, 0
    %p176 = por %p174, %p175
    %p177 = scmp.ne.s32.totalorder %s163, %s164
    %p178 = scmp.eq.s32.totalorder %s18, 1
    %p179 = por %p177, %p178
    %p181 = scmp.ne.s32.totalorder %s164, %s180
    %p182 = scmp.eq.s32.totalorder %s18, 0
    %p183 = por %p181, %p182
    %s184 = ssub.s32 %s19, %s31
    %s185 = ssub.s32 %s20, %s27
    %s186 = sor.u32 %s184, %s185
    %p187 = scmp.eq.s32.totalorder %s186, 0
    %s189 = sadd.s32 %s188, 1
    %s190 = scalar_select %p187, %s188, %s189
    %p193 = pneg %p187
    %p194 = scmp.eq.s32.totalorder %s12, 1
    %p195 = por %p193, %p194
    %p196 = scmp.ne.s32.totalorder %s188, %s191
    %p197 = scmp.eq.s32.totalorder %s12, 0
    %p198 = por %p196, %p197
    %p199 = scmp.ne.s32.totalorder %s188, %s191
    %p200 = scmp.eq.s32.totalorder %s17, 1
    %p201 = por %p199, %p200
    %p202 = scmp.ne.s32.totalorder %s191, %s192
    %p203 = scmp.eq.s32.totalorder %s17, 0
    %p204 = por %p202, %p203
    %p205 = scmp.ne.s32.totalorder %s191, %s192
    %p206 = scmp.eq.s32.totalorder %s18, 1
    %p207 = por %p205, %p206
    %p209 = scmp.ne.s32.totalorder %s192, %s208
    %p210 = scmp.eq.s32.totalorder %s18, 0
    %p211 = por %p209, %p210
    %p212 = scmp.le.s32.totalorder 1, %s12
    %p213 = scmp.lt.s32.totalorder %s12, 3
    %p214 = pnand %p212, %p213
    %p215 = pneg %p214
    // Predicated region
    $region9: #{decoder1d_forward.16} parent=5 // pred_check
      _
    $region10: #{decoder1d_forward.16} parent=5 // pred_check_branch
      %217 = sbr.rel (%p214) target = $region12
    $region11: #{decoder1d_forward.16} parent=5 // pred_region
      %s218 = ssub.s32 %s12, 1
      // Predicated region
      $region13: #{decoder1d_forward.16} parent=11 // pred_check
        %p219 = pneg %p127
      $region14: #{decoder1d_forward.16} parent=11 // pred_check_branch
        %221 = sbr.rel (%p219) target = $region16
      $region15: #{decoder1d_forward.16} parent=11 // pred_region
        _
      $region16: #{decoder1d_forward.16} parent=11 // pred_fallthru
        _
      // Predicated region
      $region17: #{decoder1d_forward.16} parent=11 // pred_check
        %p222 = pneg %p148
      $region18: #{decoder1d_forward.16} parent=11 // pred_check_branch
        %224 = sbr.rel (%p222) target = $region20
      $region19: #{decoder1d_forward.16} parent=11 // pred_region
        _
      $region20: #{decoder1d_forward.16} parent=11 // pred_fallthru
        _
    $region12: #{decoder1d_forward.16} parent=5 // pred_fallthru
      _
    %p225 = scmp.lt.s32.totalorder %s12, 2
    // Predicated region
    $region21: #{decoder1d_forward.16} parent=5 // pred_check
      %p226 = pneg %p225
    $region22: #{decoder1d_forward.16} parent=5 // pred_check_branch
      %228 = sbr.rel (%p226) target = $region24
    $region23: #{decoder1d_forward.16} parent=5 // pred_region
      // Predicated region
      $region25: #{decoder1d_forward.16} parent=23 // pred_check
        %p229 = pneg %p46
      $region26: #{decoder1d_forward.16} parent=23 // pred_check_branch
        %231 = sbr.rel (%p229) target = $region28
      $region27: #{decoder1d_forward.16} parent=23 // pred_region
        %p232 = scmp.lt.s32.totalorder %s19, 1
        %s233 = scalar_select %p232, %s19, 1
        %p234 = scmp.lt.s32.totalorder %s20, 0
        %s235 = scalar_select %p234, %s20, 0
        %s236 = sadd.s32 %s235, %s233
        %s237 = smul.addr %s236, 2
        %s238 = scalar_lea.vmem %s0, %s237
      $region28: #{decoder1d_forward.16} parent=23 // pred_fallthru
        _
      // Predicated region
      $region29: #{decoder1d_forward.16} parent=23 // pred_check
        %p239 = pneg %p74
      $region30: #{decoder1d_forward.16} parent=23 // pred_check_branch
        %241 = sbr.rel (%p239) target = $region32
      $region31: #{decoder1d_forward.16} parent=23 // pred_region
        %s242 = sadd.s32 %s19, %s20
        %p243 = scmp.lt.s32.totalorder %s242, 1
        %s244 = scalar_select %p243, %s242, 1
        %s245 = smul.addr %s244, 2
        %s246 = scalar_lea.vmem %s1, %s245
        %s247 = sadd.s32 %s19, %s20
      $region32: #{decoder1d_forward.16} parent=23 // pred_fallthru
        _
      // Predicated region
      $region33: #{decoder1d_forward.16} parent=23 // pred_check
        %p248 = pneg %p100
      $region34: #{decoder1d_forward.16} parent=23 // pred_check_branch
        %250 = sbr.rel (%p248) target = $region36
      $region35: #{decoder1d_forward.16} parent=23 // pred_region
        %p251 = scmp.lt.s32.totalorder %s19, 1
        %s252 = scalar_select %p251, %s19, 1
        %s253 = smul.addr %s252, 4
        %s254 = scalar_lea.vmem %s2, %s253
      $region36: #{decoder1d_forward.16} parent=23 // pred_fallthru
        _
      // Predicated region
      $region37: #{decoder1d_forward.16} parent=23 // pred_check
        %p255 = pneg %p170
      $region38: #{decoder1d_forward.16} parent=23 // pred_check_branch
        %257 = sbr.rel (%p255) target = $region40
      $region39: #{decoder1d_forward.16} parent=23 // pred_region
        %p258 = scmp.lt.s32.totalorder %s19, 1
        %s259 = scalar_select %p258, %s19, 1
        %p260 = scmp.lt.s32.totalorder %s20, 0
        %s261 = scalar_select %p260, %s20, 0
        %s262 = sadd.s32 %s261, %s259
        %s263 = smul.addr %s262, 2
        %s264 = scalar_lea.vmem %s5, %s263
      $region40: #{decoder1d_forward.16} parent=23 // pred_fallthru
        _
    $region24: #{decoder1d_forward.16} parent=5 // pred_fallthru
      _
    %p265 = scmp.le.s32.totalorder 1, %s12
    %p266 = scmp.lt.s32.totalorder %s12, 3
    %p267 = pnand %p265, %p266
    %p268 = pneg %p267
    // Predicated region
    $region41: #{decoder1d_forward.16} parent=5 // pred_check
      _
    $region42: #{decoder1d_forward.16} parent=5 // pred_check_branch
      %270 = sbr.rel (%p267) target = $region44
    $region43: #{decoder1d_forward.16} parent=5 // pred_region
      %s271 = ssub.s32 %s12, 1
      %p272 = scmp.lt.s32.totalorder %s21, 1
      %s273 = scalar_select %p272, %s21, 1
      %p274 = scmp.lt.s32.totalorder %s22, 0
      %s275 = scalar_select %p274, %s22, 0
      %s276 = sadd.s32 %s275, %s273
      %s277 = smul.addr %s276, 2
      %s278 = scalar_lea.vmem %s0, %s277
      %p279 = pneg %p52
      %p280 = pneg %p49
      %s281 = sadd.s32 %s21, %s22
      %p282 = scmp.lt.s32.totalorder %s281, 1
      %s283 = scalar_select %p282, %s281, 1
      %s284 = smul.addr %s283, 2
      %s285 = scalar_lea.vmem %s1, %s284
      %p286 = pneg %p80
      %p287 = pneg %p77
      %p288 = scmp.lt.s32.totalorder %s21, 1
      %s289 = scalar_select %p288, %s21, 1
      %s290 = smul.addr %s289, 4
      %s291 = scalar_lea.vmem %s2, %s290
      %p292 = pneg %p106
      %p293 = pneg %p103
      %p294 = pneg %p127
      %p295 = pneg %p124
      %p296 = pneg %p148
      %p297 = pneg %p145
      %p298 = scmp.lt.s32.totalorder %s21, 1
      %s299 = scalar_select %p298, %s21, 1
      %p300 = scmp.lt.s32.totalorder %s22, 0
      %s301 = scalar_select %p300, %s22, 0
      %s302 = sadd.s32 %s301, %s299
      %s303 = smul.addr %s302, 2
      %s304 = scalar_lea.vmem %s5, %s303
      %p305 = pneg %p176
      %p306 = pneg %p173
      %p307 = pneg %p204
      %p308 = pneg %p201
      %p309 = scmp.lt.s32.totalorder %s21, 1
      %s310 = scalar_select %p309, %s21, 1
      %p311 = scmp.lt.s32.totalorder %s22, 0
      %s312 = scalar_select %p311, %s22, 0
      %s313 = sadd.s32 %s312, %s310
      %s314 = smul.addr %s313, 2
      %s315 = scalar_lea.vmem %s6, %s314
      %p316 = scmp.lt.s32.totalorder %s21, 1
      %s317 = scalar_select %p316, %s21, 1
      %p318 = scmp.lt.s32.totalorder %s22, 0
      %s319 = scalar_select %p318, %s22, 0
      %s320 = sadd.s32 %s319, %s317
      %s321 = smul.addr %s320, 2
      %s322 = scalar_lea.vmem %s0, %s321
      %s323 = sadd.s32 %s21, %s22
      %p324 = scmp.lt.s32.totalorder %s323, 1
      %s325 = scalar_select %p324, %s323, 1
      %s326 = smul.addr %s325, 2
      %s327 = scalar_lea.vmem %s1, %s326
      %s328 = sadd.s32 %s21, %s22
      %p329 = scmp.lt.s32.totalorder %s21, 1
      %s330 = scalar_select %p329, %s21, 1
      %s331 = smul.addr %s330, 4
      %s332 = scalar_lea.vmem %s2, %s331
      %p333 = scmp.lt.s32.totalorder %s21, 1
      %s334 = scalar_select %p333, %s21, 1
      %p335 = scmp.lt.s32.totalorder %s22, 0
      %s336 = scalar_select %p335, %s22, 0
      %s337 = sadd.s32 %s336, %s334
      %s338 = smul.addr %s337, 2
      %s339 = scalar_lea.vmem %s5, %s338
      %p340 = scmp.lt.s32.totalorder %s21, 1
      %s341 = scalar_select %p340, %s21, 1
      %p342 = scmp.lt.s32.totalorder %s22, 0
      %s343 = scalar_select %p342, %s22, 0
      %s344 = sadd.s32 %s343, %s341
      %s345 = smul.addr %s344, 2
      %s346 = scalar_lea.vmem %s6, %s345
      %v348 = vld [vmem:[%s322] sm:$0x3]
      %v349 = vld [vmem:[%s327] sm:$0x3]
      %v350 = vunpack.c.l.bf16 %v348
      %v351 = vunpack.c.l.bf16 %v349
      %v352 = vld [vmem:[%s332] sm:$0xf]
      %354 = vset.pattern.permute.xlu0 0
      %355 = vperm.xlu0 %354, %v352
      %v356 = vpop.permute.xlu0 %355
      %v358 = vsub.f32 %v350, %v356
      %359 = vset.pattern.permute.xlu0 1
      %360 = vperm.xlu0 %359, %v352
      %v361 = vpop.permute.xlu0 %360
      %v363 = vmul.f32 %v358, %v361
      %v364 = vsub.f32 %v351, %v356
      %v365 = vmul.f32 %v364, %v361
      %v366 = vxor.u32 %v363, 2147483648
      %v367 = vmul.f32 %v366, 1.442695
      %v368 = vpow.pop %v367
      %v369 = vadd.f32 %v368, 1.0
      %v370 = vrcp.pop %v369
      %v371 = vmul.f32 1.0, %v370
      %v372 = vmul.f32 %v363, %v371
      %v373 = vxor.u32 %v365, 2147483648
      %v374 = vmul.f32 %v373, 1.442695
      %v375 = vpow.pop %v374
      %v376 = vadd.f32 %v375, 1.0
      %v377 = vrcp.pop %v376
      %v378 = vmul.f32 1.0, %v377
      %v379 = vmul.f32 %v365, %v378
      %v380 = vpack.c.bf16 %v372, %v372
      %v381 = vpack.c.bf16 %v379, %v379
      %383 = vrot.lane.b32.xlu0 %v380, 1
      %v384 = vpop.permute.xlu0 %383
      %vm385 = vcmask 7168
      %v388 = vsel %vm385, %v381, %v384
      %389 = vrot.lane.b32.xlu0 %v380, 127
      %v390 = vpop.permute.xlu0 %389
      %392 = vrot.lane.b32.xlu0 %v381, 126
      %v393 = vpop.permute.xlu0 %392
      %vm394 = vcmask 1039360
      %v397 = vsel %vm394, %v390, %v393
      %v398 = vrot.slane %v380, 6
      %v400 = vrot.slane %v397, 4
      %vm401 = vcmask 1041408
      %v403 = vsel %vm401, %v388, %v398
      %vm404 = vcmask 1043456
      %v406 = vsel %vm404, %v403, %v400
      %v407 = vld [vmem:[%s3] sm:$0x3]
      %v408 = vld [vmem:[%s4] sm:$0xf]
      %410 = vset.pattern.permute.xlu0 0
      %411 = vperm.xlu0 %410, %v408
      %v412 = vpop.permute.xlu0 %411
      %vm414 = vcmask 97280
      %v416 = vsel %vm414, %v407, 0
      %vm418 = vcmask 1045504
      %v419 = vsel %vm418, %v406, 0
      %421 = vmatprep.subr.bf16.mxu0 0
      %422 = vmatpush1.bf16.msra.mxu0 %v419
      %423 = vmatprep.subr.bf16.mxu0 0
      %424 = vmatpush1.bf16.msra.mxu0 0
      %425 = vmatprep.subr.bf16.mxu0 0
      %426 = vmatpush1.bf16.msra.mxu0 0
      %427 = vmatprep.subr.bf16.mxu0 0
      %428 = vmatpush1.bf16.msra.mxu0 0
      %429 = vmatprep.subr.bf16.mxu0 0
      %430 = vmatpush1.bf16.msra.mxu0 0
      %431 = vmatprep.subr.bf16.mxu0 0
      %432 = vmatpush1.bf16.msra.mxu0 0
      %433 = vmatprep.subr.bf16.mxu0 0
      %434 = vmatpush1.bf16.msra.mxu0 0
      %435 = vmatprep.subr.bf16.mxu0 0
      %436 = vmatpush1.bf16.msra.mxu0 0
      %437 = vmatprep.subr.bf16.mxu0 0
      %438 = vmatpush1.bf16.msra.mxu0 0
      %439 = vmatprep.subr.bf16.mxu0 0
      %440 = vmatpush1.bf16.msra.mxu0 0
      %441 = vmatprep.subr.bf16.mxu0 0
      %442 = vmatpush1.bf16.msra.mxu0 0
      %443 = vmatprep.subr.bf16.mxu0 0
      %444 = vmatpush1.bf16.msra.mxu0 0
      %445 = vmatprep.subr.bf16.mxu0 0
      %446 = vmatpush1.bf16.msra.mxu0 0
      %447 = vmatprep.subr.bf16.mxu0 0
      %448 = vmatpush1.bf16.msra.mxu0 0
      %449 = vmatprep.subr.bf16.mxu0 0
      %450 = vmatpush1.bf16.msra.mxu0 0
      %451 = vmatprep.subr.bf16.mxu0 0
      %452 = vmatpush1.bf16.msra.mxu0 0
      %453 = vmatprep.mubr.bf16.mxu0 0
      %454 = vmatmul.mubr.bf16.gmra.mrb[0].mxu0 %v416
      %v455 = vpop.f32.mrb[0].mxu0
      %v456 = vadd.f32 %v412, %v455
      %v457 = vpop.f32.mrb[0].mxu0
      %v458 = vpop.f32.mrb[0].mxu0
      %v459 = vpop.f32.mrb[0].mxu0
      %460 = vdwg.mxu0
      %v461 = vld [vmem:[%s339] sm:$0x3]
      %v462 = vunpack.c.l.bf16 %v461
      %v463 = vadd.f32 %v456, %v462
      %v464 = vpack.c.bf16 %v463, %v463
      %465 = vst [vmem:[%s346] sm:$0x3] %v464
      %p466 = scmp.lt.s32.totalorder %s21, 1
      %s467 = scalar_select %p466, %s21, 1
      %p468 = scmp.lt.s32.totalorder %s22, 0
      %s469 = scalar_select %p468, %s22, 0
      %s470 = sadd.s32 %s469, %s467
      %s471 = smul.addr %s470, 2
      %s472 = scalar_lea.vmem %s6, %s471
      // Predicated region
      $region45: #{decoder1d_forward.16} parent=43 // pred_check
        %p473 = pneg %p201
      $region46: #{decoder1d_forward.16} parent=43 // pred_check_branch
        %475 = sbr.rel (%p473) target = $region48
      $region47: #{decoder1d_forward.16} parent=43 // pred_region
        _
      $region48: #{decoder1d_forward.16} parent=43 // pred_fallthru
        _
    $region44: #{decoder1d_forward.16} parent=5 // pred_fallthru
      _
    %p476 = scmp.le.s32.totalorder 2, %s12
    // Predicated region
    $region49: #{decoder1d_forward.16} parent=5 // pred_check
      %p477 = pneg %p476
    $region50: #{decoder1d_forward.16} parent=5 // pred_check_branch
      %479 = sbr.rel (%p477) target = $region52
    $region51: #{decoder1d_forward.16} parent=5 // pred_region
      %s480 = ssub.s32 %s12, 2
      // Predicated region
      $region53: #{decoder1d_forward.16} parent=51 // pred_check
        %p481 = pneg %p207
      $region54: #{decoder1d_forward.16} parent=51 // pred_check_branch
        %483 = sbr.rel (%p481) target = $region56
      $region55: #{decoder1d_forward.16} parent=51 // pred_region
        %p484 = scmp.lt.s32.totalorder %s23, 1
        %s485 = scalar_select %p484, %s23, 1
        %p486 = scmp.lt.s32.totalorder %s24, 0
        %s487 = scalar_select %p486, %s24, 0
        %s488 = sadd.s32 %s487, %s485
        %s489 = smul.addr %s488, 2
        %s490 = scalar_lea.vmem %s6, %s489
      $region56: #{decoder1d_forward.16} parent=51 // pred_fallthru
        _
    $region52: #{decoder1d_forward.16} parent=5 // pred_fallthru
      _
  $region6: #{decoder1d_forward.16} parent=0 // loop_footer
    %s16 = sadd.s32 1, %s12
  $region7: #{decoder1d_forward.16} parent=0 // loop_footer_branch
    %11 = sbr.rel target = $region3
  $region8: #{decoder1d_forward.16} parent=0 // loop_exit
    _

// kernel: decoder1d_forward.17
$region0: #{decoder1d_forward.17}
  #allocation0 [shape = 'u32[]', space=smem, size = 0x4, offset = 0x4, fixed_abs, tag = 'smem constant byte address 0x4 - core index']
  #allocation1 [shape = 'u32[144,128]{1,0:T(1,128)}', space=vmem, size = 0x12000, scoped, tag = 'internal scratch']
  %s0 = inlined_call_operand.vmem [shape: bf16[2,4,128], index: 0, kind: input, shape index: {}]
  %s1 = inlined_call_operand.vmem [shape: bf16[2,4,2], index: 1, kind: input, shape index: {}]
  %s2 = inlined_call_operand.vmem [shape: f32[2,4,2], index: 2, kind: input, shape index: {}]
  %s3 = inlined_call_operand.vmem [shape: bf16[2,12], index: 3, kind: input, shape index: {}]
  %s4 = inlined_call_operand.vmem [shape: f32[2,1], index: 4, kind: input, shape index: {}]
  %s5 = inlined_call_operand.hbm [shape: f32[2,2,128], index: 5, kind: output, shape index: {}]
  %s6 = sld [smem:[#allocation0]]
  $region53: #{decoder1d_forward.17} parent=0
    _
  %s8 = ssub.s32 1, %s6
  %s9 = scalar_select 0, %s8, %s6
  $region1: #{decoder1d_forward.17} parent=0
    #allocation2 [shape = 'u8[2048]{0}', space=vmem, size = 0x800, scoped, tag = 'output window, operand 0']
    #allocation3 [shape = 's32[2]{0}', space=sflag, size = 0x8, scoped, tag = 'scoped memory for decoder1d_forward.17']
    %10 = vsyncpa [#allocation3], 0
    %s11 = scalar_lea.sflag [#allocation3], 1
    %12 = vsyncpa %s11, 0
    loop: start=0, step=1, limit=4
    $region2: #{decoder1d_forward.17} parent=1 // loop_pre_header
      _
    $region3: #{decoder1d_forward.17} parent=1 // loop_header
      %s14 = sphi 0, %s18
      %p15 = scmp.ge.s32.totalorder %s14, 4
      %s21 = sphi 0, %s33
      %s22 = sphi 0, %s29
      %s23 = sphi 0, %s21
      %s24 = sphi 0, %s22
      %s25 = sphi 0, %s23
      %s26 = sphi 0, %s24
      %s38 = sphi 0, %s40
      %s41 = sphi 0, %s38
      %s42 = sphi 0, %s41
      %s58 = sphi 0, %s42
      %s66 = sphi 0, %s68
      %s69 = sphi 0, %s66
      %s70 = sphi 0, %s69
      %s86 = sphi 0, %s70
      %s92 = sphi 0, %s94
      %s95 = sphi 0, %s92
      %s96 = sphi 0, %s95
      %s112 = sphi 0, %s96
      %s116 = sphi 0, %s116
      %s118 = sphi 0, %s116
      %s119 = sphi 0, %s118
      %s133 = sphi 0, %s119
      %s137 = sphi 0, %s137
      %s139 = sphi 0, %s137
      %s140 = sphi 0, %s139
      %s154 = sphi 0, %s140
      %s162 = sphi 0, %s164
      %s165 = sphi 0, %s162
      %s166 = sphi 0, %s165
      %s182 = sphi 0, %s166
    $region4: #{decoder1d_forward.17} parent=1 // loop_header_branch
      %17 = sbr.rel (%p15) target = $region8
    $region5: #{decoder1d_forward.17} parent=1 // loop_body
      %s19 = ssub.s32 %s14, 1
      %s20 = ssub.s32 %s14, 2
      %s27 = sadd.s32 1, %s22
      %p28 = scmp.ge.s32.totalorder %s27, 1
      %s29 = scalar_select %p28, 0, %s27
      %s30 = sadd.s32 1, %s21
      %s31 = scalar_select %p28, %s30, %s21
      %p32 = scmp.ge.s32.totalorder %s31, 2
      %s33 = scalar_select %p32, 0, %s31
      %s34 = ssub.s32 %s21, %s33
      %s35 = ssub.s32 %s22, %s29
      %s36 = sor.u32 %s34, %s35
      %p37 = scmp.eq.s32.totalorder %s36, 0
      %s39 = sadd.s32 %s38, 1
      %s40 = scalar_select %p37, %s38, %s39
      %p43 = pneg %p37
      %p44 = scmp.eq.s32.totalorder %s14, 1
      %p45 = por %p43, %p44
      %p46 = scmp.ne.s32.totalorder %s38, %s41
      %p47 = scmp.eq.s32.totalorder %s14, 0
      %p48 = por %p46, %p47
      %p49 = scmp.ne.s32.totalorder %s38, %s41
      %p50 = scmp.eq.s32.totalorder %s19, 1
      %p51 = por %p49, %p50
      %p52 = scmp.ne.s32.totalorder %s41, %s42
      %p53 = scmp.eq.s32.totalorder %s19, 0
      %p54 = por %p52, %p53
      %p55 = scmp.ne.s32.totalorder %s41, %s42
      %p56 = scmp.eq.s32.totalorder %s20, 1
      %p57 = por %p55, %p56
      %p59 = scmp.ne.s32.totalorder %s42, %s58
      %p60 = scmp.eq.s32.totalorder %s20, 0
      %p61 = por %p59, %p60
      %s62 = sadd.s32 %s21, %s22
      %s63 = sadd.s32 %s33, %s29
      %s64 = ssub.s32 %s62, %s63
      %p65 = scmp.eq.s32.totalorder %s64, 0
      %s67 = sadd.s32 %s66, 1
      %s68 = scalar_select %p65, %s66, %s67
      %p71 = pneg %p65
      %p72 = scmp.eq.s32.totalorder %s14, 1
      %p73 = por %p71, %p72
      %p74 = scmp.ne.s32.totalorder %s66, %s69
      %p75 = scmp.eq.s32.totalorder %s14, 0
      %p76 = por %p74, %p75
      %p77 = scmp.ne.s32.totalorder %s66, %s69
      %p78 = scmp.eq.s32.totalorder %s19, 1
      %p79 = por %p77, %p78
      %p80 = scmp.ne.s32.totalorder %s69, %s70
      %p81 = scmp.eq.s32.totalorder %s19, 0
      %p82 = por %p80, %p81
      %p83 = scmp.ne.s32.totalorder %s69, %s70
      %p84 = scmp.eq.s32.totalorder %s20, 1
      %p85 = por %p83, %p84
      %p87 = scmp.ne.s32.totalorder %s70, %s86
      %p88 = scmp.eq.s32.totalorder %s20, 0
      %p89 = por %p87, %p88
      %s90 = ssub.s32 %s21, %s33
      %p91 = scmp.eq.s32.totalorder %s90, 0
      %s93 = sadd.s32 %s92, 1
      %s94 = scalar_select %p91, %s92, %s93
      %p97 = pneg %p91
      %p98 = scmp.eq.s32.totalorder %s14, 1
      %p99 = por %p97, %p98
      %p100 = scmp.ne.s32.totalorder %s92, %s95
      %p101 = scmp.eq.s32.totalorder %s14, 0
      %p102 = por %p100, %p101
      %p103 = scmp.ne.s32.totalorder %s92, %s95
      %p104 = scmp.eq.s32.totalorder %s19, 1
      %p105 = por %p103, %p104
      %p106 = scmp.ne.s32.totalorder %s95, %s96
      %p107 = scmp.eq.s32.totalorder %s19, 0
      %p108 = por %p106, %p107
      %p109 = scmp.ne.s32.totalorder %s95, %s96
      %p110 = scmp.eq.s32.totalorder %s20, 1
      %p111 = por %p109, %p110
      %p113 = scmp.ne.s32.totalorder %s96, %s112
      %p114 = scmp.eq.s32.totalorder %s20, 0
      %p115 = por %p113, %p114
      %s117 = sadd.s32 %s116, 1
      %p120 = scmp.eq.s32.totalorder %s14, 1
      %p121 = scmp.ne.s32.totalorder %s116, %s118
      %p122 = scmp.eq.s32.totalorder %s14, 0
      %p123 = por %p121, %p122
      %p124 = scmp.ne.s32.totalorder %s116, %s118
      %p125 = scmp.eq.s32.totalorder %s19, 1
      %p126 = por %p124, %p125
      %p127 = scmp.ne.s32.totalorder %s118, %s119
      %p128 = scmp.eq.s32.totalorder %s19, 0
      %p129 = por %p127, %p128
      %p130 = scmp.ne.s32.totalorder %s118, %s119
      %p131 = scmp.eq.s32.totalorder %s20, 1
      %p132 = por %p130, %p131
      %p134 = scmp.ne.s32.totalorder %s119, %s133
      %p135 = scmp.eq.s32.totalorder %s20, 0
      %p136 = por %p134, %p135
      %s138 = sadd.s32 %s137, 1
      %p141 = scmp.eq.s32.totalorder %s14, 1
      %p142 = scmp.ne.s32.totalorder %s137, %s139
      %p143 = scmp.eq.s32.totalorder %s14, 0
      %p144 = por %p142, %p143
      %p145 = scmp.ne.s32.totalorder %s137, %s139
      %p146 = scmp.eq.s32.totalorder %s19, 1
      %p147 = por %p145, %p146
      %p148 = scmp.ne.s32.totalorder %s139, %s140
      %p149 = scmp.eq.s32.totalorder %s19, 0
      %p150 = por %p148, %p149
      %p151 = scmp.ne.s32.totalorder %s139, %s140
      %p152 = scmp.eq.s32.totalorder %s20, 1
      %p153 = por %p151, %p152
      %p155 = scmp.ne.s32.totalorder %s140, %s154
      %p156 = scmp.eq.s32.totalorder %s20, 0
      %p157 = por %p155, %p156
      %s158 = ssub.s32 %s21, %s33
      %s159 = ssub.s32 %s22, %s29
      %s160 = sor.u32 %s158, %s159
      %p161 = scmp.eq.s32.totalorder %s160, 0
      %s163 = sadd.s32 %s162, 1
      %s164 = scalar_select %p161, %s162, %s163
      %p167 = pneg %p161
      %p168 = scmp.eq.s32.totalorder %s14, 1
      %p169 = por %p167, %p168
      %p170 = scmp.ne.s32.totalorder %s162, %s165
      %p171 = scmp.eq.s32.totalorder %s14, 0
      %p172 = por %p170, %p171
      %p173 = scmp.ne.s32.totalorder %s162, %s165
      %p174 = scmp.eq.s32.totalorder %s19, 1
      %p175 = por %p173, %p174
      %p176 = scmp.ne.s32.totalorder %s165, %s166
      %p177 = scmp.eq.s32.totalorder %s19, 0
      %p178 = por %p176, %p177
      %p179 = scmp.ne.s32.totalorder %s165, %s166
      %p180 = scmp.eq.s32.totalorder %s20, 1
      %p181 = por %p179, %p180
      %p183 = scmp.ne.s32.totalorder %s166, %s182
      %p184 = scmp.eq.s32.totalorder %s20, 0
      %p185 = por %p183, %p184
      %p186 = scmp.le.s32.totalorder 1, %s14
      %p187 = scmp.lt.s32.totalorder %s14, 3
      %p188 = pnand %p186, %p187
      %p189 = pneg %p188
      // Predicated region
      $region9: #{decoder1d_forward.17} parent=5 // pred_check
        _
      $region10: #{decoder1d_forward.17} parent=5 // pred_check_branch
        %191 = sbr.rel (%p188) target = $region12
      $region11: #{decoder1d_forward.17} parent=5 // pred_region
        %s192 = ssub.s32 %s14, 1
        // Predicated region
        $region13: #{decoder1d_forward.17} parent=11 // pred_check
          %p193 = pneg %p129
        $region14: #{decoder1d_forward.17} parent=11 // pred_check_branch
          %195 = sbr.rel (%p193) target = $region16
        $region15: #{decoder1d_forward.17} parent=11 // pred_region
          _
        $region16: #{decoder1d_forward.17} parent=11 // pred_fallthru
          _
        // Predicated region
        $region17: #{decoder1d_forward.17} parent=11 // pred_check
          %p196 = pneg %p150
        $region18: #{decoder1d_forward.17} parent=11 // pred_check_branch
          %198 = sbr.rel (%p196) target = $region20
        $region19: #{decoder1d_forward.17} parent=11 // pred_region
          _
        $region20: #{decoder1d_forward.17} parent=11 // pred_fallthru
          _
      $region12: #{decoder1d_forward.17} parent=5 // pred_fallthru
        _
      %p199 = scmp.lt.s32.totalorder %s14, 2
      // Predicated region
      $region21: #{decoder1d_forward.17} parent=5 // pred_check
        %p200 = pneg %p199
      $region22: #{decoder1d_forward.17} parent=5 // pred_check_branch
        %202 = sbr.rel (%p200) target = $region24
      $region23: #{decoder1d_forward.17} parent=5 // pred_region
        // Predicated region
        $region25: #{decoder1d_forward.17} parent=23 // pred_check
          %p203 = pneg %p48
        $region26: #{decoder1d_forward.17} parent=23 // pred_check_branch
          %205 = sbr.rel (%p203) target = $region28
        $region27: #{decoder1d_forward.17} parent=23 // pred_region
          %p206 = scmp.lt.s32.totalorder %s21, 1
          %s207 = scalar_select %p206, %s21, 1
          %p208 = scmp.lt.s32.totalorder %s22, 0
          %s209 = scalar_select %p208, %s22, 0
          %s210 = sadd.s32 %s209, %s207
          %s211 = smul.addr %s210, 2
          %s212 = scalar_lea.vmem %s0, %s211
        $region28: #{decoder1d_forward.17} parent=23 // pred_fallthru
          _
        // Predicated region
        $region29: #{decoder1d_forward.17} parent=23 // pred_check
          %p213 = pneg %p76
        $region30: #{decoder1d_forward.17} parent=23 // pred_check_branch
          %215 = sbr.rel (%p213) target = $region32
        $region31: #{decoder1d_forward.17} parent=23 // pred_region
          %s216 = sadd.s32 %s21, %s22
          %p217 = scmp.lt.s32.totalorder %s216, 1
          %s218 = scalar_select %p217, %s216, 1
          %s219 = smul.addr %s218, 2
          %s220 = scalar_lea.vmem %s1, %s219
          %s221 = sadd.s32 %s21, %s22
        $region32: #{decoder1d_forward.17} parent=23 // pred_fallthru
          _
        // Predicated region
        $region33: #{decoder1d_forward.17} parent=23 // pred_check
          %p222 = pneg %p102
        $region34: #{decoder1d_forward.17} parent=23 // pred_check_branch
          %224 = sbr.rel (%p222) target = $region36
        $region35: #{decoder1d_forward.17} parent=23 // pred_region
          %p225 = scmp.lt.s32.totalorder %s21, 1
          %s226 = scalar_select %p225, %s21, 1
          %s227 = smul.addr %s226, 4
          %s228 = scalar_lea.vmem %s2, %s227
        $region36: #{decoder1d_forward.17} parent=23 // pred_fallthru
          _
      $region24: #{decoder1d_forward.17} parent=5 // pred_fallthru
        _
      %p229 = scmp.le.s32.totalorder 1, %s14
      %p230 = scmp.lt.s32.totalorder %s14, 3
      %p231 = pnand %p229, %p230
      %p232 = pneg %p231
      // Predicated region
      $region37: #{decoder1d_forward.17} parent=5 // pred_check
        _
      $region38: #{decoder1d_forward.17} parent=5 // pred_check_branch
        %234 = sbr.rel (%p231) target = $region40
      $region39: #{decoder1d_forward.17} parent=5 // pred_region
        %s235 = ssub.s32 %s14, 1
        %p236 = scmp.lt.s32.totalorder %s23, 1
        %s237 = scalar_select %p236, %s23, 1
        %p238 = scmp.lt.s32.totalorder %s24, 0
        %s239 = scalar_select %p238, %s24, 0
        %s240 = sadd.s32 %s239, %s237
        %s241 = smul.addr %s240, 2
        %s242 = scalar_lea.vmem %s0, %s241
        %p243 = pneg %p54
        %p244 = pneg %p51
        %s245 = sadd.s32 %s23, %s24
        %p246 = scmp.lt.s32.totalorder %s245, 1
        %s247 = scalar_select %p246, %s245, 1
        %s248 = smul.addr %s247, 2
        %s249 = scalar_lea.vmem %s1, %s248
        %p250 = pneg %p82
        %p251 = pneg %p79
        %p252 = scmp.lt.s32.totalorder %s23, 1
        %s253 = scalar_select %p252, %s23, 1
        %s254 = smul.addr %s253, 4
        %s255 = scalar_lea.vmem %s2, %s254
        %p256 = pneg %p108
        %p257 = pneg %p105
        %p258 = pneg %p129
        %p259 = pneg %p126
        %p260 = pneg %p150
        %p261 = pneg %p147
        %p262 = pneg %p178
        %p263 = pneg %p175
        %s264 = sand.u32 %s165, 1
        %s265 = scalar_lea.sflag [#allocation3], %s264
        %s266 = sand.u32 %s165, 1
        %s267 = smul.addr %s266, 2
        %s268 = scalar_lea.vmem [#allocation2], %s267
        %p269 = scmp.lt.s32.totalorder %s23, 1
        %s270 = scalar_select %p269, %s23, 1
        %p271 = scmp.lt.s32.totalorder %s24, 0
        %s272 = scalar_select %p271, %s24, 0
        %s273 = sadd.s32 %s272, %s270
        %s274 = smul.addr %s273, 2
        %s275 = scalar_lea.vmem %s0, %s274
        %s276 = sadd.s32 %s23, %s24
        %p277 = scmp.lt.s32.totalorder %s276, 1
        %s278 = scalar_select %p277, %s276, 1
        %s279 = smul.addr %s278, 2
        %s280 = scalar_lea.vmem %s1, %s279
        %s281 = sadd.s32 %s23, %s24
        %p282 = scmp.lt.s32.totalorder %s23, 1
        %s283 = scalar_select %p282, %s23, 1
        %s284 = smul.addr %s283, 4
        %s285 = scalar_lea.vmem %s2, %s284
        %v287 = vld [vmem:[%s275] sm:$0x3]
        %v288 = vld [vmem:[%s280] sm:$0x3]
        %v289 = vunpack.c.l.bf16 %v287
        %v290 = vunpack.c.l.bf16 %v288
        %v291 = vld [vmem:[%s285] sm:$0xf]
        %293 = vset.pattern.permute.xlu0 0
        %294 = vperm.xlu0 %293, %v291
        %v295 = vpop.permute.xlu0 %294
        %v297 = vsub.f32 %v289, %v295
        %298 = vset.pattern.permute.xlu0 1
        %299 = vperm.xlu0 %298, %v291
        %v300 = vpop.permute.xlu0 %299
        %v302 = vmul.f32 %v297, %v300
        %v303 = vsub.f32 %v290, %v295
        %v304 = vmul.f32 %v303, %v300
        %v305 = vtanh.pop %v302
        %v306 = vtanh.pop %v304
        %v307 = vpack.c.bf16 %v305, %v305
        %v308 = vpack.c.bf16 %v306, %v306
        %310 = vrot.lane.b32.xlu0 %v307, 1
        %v311 = vpop.permute.xlu0 %310
        %vm312 = vcmask 7168
        %v315 = vsel %vm312, %v308, %v311
        %316 = vrot.lane.b32.xlu0 %v307, 127
        %v317 = vpop.permute.xlu0 %316
        %319 = vrot.lane.b32.xlu0 %v308, 126
        %v320 = vpop.permute.xlu0 %319
        %vm321 = vcmask 1039360
        %v324 = vsel %vm321, %v317, %v320
        %v325 = vrot.slane %v307, 6
        %v327 = vrot.slane %v324, 4
        %vm328 = vcmask 1041408
        %v330 = vsel %vm328, %v315, %v325
        %vm331 = vcmask 1043456
        %v333 = vsel %vm331, %v330, %v327
        %v334 = vld [vmem:[%s3] sm:$0x1]
        %v335 = vld [vmem:[%s4] sm:$0x3]
        %337 = vset.pattern.permute.xlu0 0
        %338 = vperm.xlu0 %337, %v335
        %v339 = vpop.permute.xlu0 %338
        %vm341 = vcmask 97280
        %v343 = vsel %vm341, %v334, 0
        %vm345 = vcmask 1045504
        %v346 = vsel %vm345, %v333, 0
        %348 = vmatprep.subr.bf16.mxu0 0
        %349 = vmatpush1.bf16.msra.mxu0 %v346
        %350 = vmatprep.subr.bf16.mxu0 0
        %351 = vmatpush1.bf16.msra.mxu0 0
        %352 = vmatprep.subr.bf16.mxu0 0
        %353 = vmatpush1.bf16.msra.mxu0 0
        %354 = vmatprep.subr.bf16.mxu0 0
        %355 = vmatpush1.bf16.msra.mxu0 0
        %356 = vmatprep.subr.bf16.mxu0 0
        %357 = vmatpush1.bf16.msra.mxu0 0
        %358 = vmatprep.subr.bf16.mxu0 0
        %359 = vmatpush1.bf16.msra.mxu0 0
        %360 = vmatprep.subr.bf16.mxu0 0
        %361 = vmatpush1.bf16.msra.mxu0 0
        %362 = vmatprep.subr.bf16.mxu0 0
        %363 = vmatpush1.bf16.msra.mxu0 0
        %364 = vmatprep.subr.bf16.mxu0 0
        %365 = vmatpush1.bf16.msra.mxu0 0
        %366 = vmatprep.subr.bf16.mxu0 0
        %367 = vmatpush1.bf16.msra.mxu0 0
        %368 = vmatprep.subr.bf16.mxu0 0
        %369 = vmatpush1.bf16.msra.mxu0 0
        %370 = vmatprep.subr.bf16.mxu0 0
        %371 = vmatpush1.bf16.msra.mxu0 0
        %372 = vmatprep.subr.bf16.mxu0 0
        %373 = vmatpush1.bf16.msra.mxu0 0
        %374 = vmatprep.subr.bf16.mxu0 0
        %375 = vmatpush1.bf16.msra.mxu0 0
        %376 = vmatprep.subr.bf16.mxu0 0
        %377 = vmatpush1.bf16.msra.mxu0 0
        %378 = vmatprep.subr.bf16.mxu0 0
        %379 = vmatpush1.bf16.msra.mxu0 0
        %380 = vmatprep.mubr.bf16.mxu0 0
        %381 = vmatmul.mubr.bf16.gmra.mrb[0].mxu0 %v343
        %v382 = vpop.f32.mrb[0].mxu0
        %v383 = vadd.f32 %v339, %v382
        %v384 = vpop.f32.mrb[0].mxu0
        %v385 = vpop.f32.mrb[0].mxu0
        %v386 = vpop.f32.mrb[0].mxu0
        %387 = vdwg.mxu0
        %388 = vst [vmem:[%s268] sm:$0x3] %v383
        %s389 = sand.u32 %s165, 1
        %s390 = scalar_lea.sflag [#allocation3], %s389
        %s391 = sand.u32 %s165, 1
        %s392 = smul.addr %s391, 2
        %s393 = scalar_lea.vmem [#allocation2], %s392
        // Predicated region
        $region41: #{decoder1d_forward.17} parent=39 // pred_check
          %p394 = pneg %p175
        $region42: #{decoder1d_forward.17} parent=39 // pred_check_branch
          %396 = sbr.rel (%p394) target = $region44
        $region43: #{decoder1d_forward.17} parent=39 // pred_region
          %s398 = ssub.s32 32, 32
          %399 = vsyncadd %s390, %s398
          %s400 = sadd.s32 %s24, %s23
          %s401 = smul.addr %s400, 32
          %s402 = scalar_lea.hbm %s5, %s401
          %s404 = sshll.u32 %s393, 4
          %s405 = int_to_ptr.vmem [resolvable:$true] %s404
          %407 = dma.vmem_to_hbm [thread:$0]  %s405, 32, %s402, %s390
        $region44: #{decoder1d_forward.17} parent=39 // pred_fallthru
          _
      $region40: #{decoder1d_forward.17} parent=5 // pred_fallthru
        _
      %p408 = scmp.le.s32.totalorder 2, %s14
      // Predicated region
      $region45: #{decoder1d_forward.17} parent=5 // pred_check
        %p409 = pneg %p408
      $region46: #{decoder1d_forward.17} parent=5 // pred_check_branch
        %411 = sbr.rel (%p409) target = $region48
      $region47: #{decoder1d_forward.17} parent=5 // pred_region
        %s412 = ssub.s32 %s14, 2
        // Predicated region
        $region49: #{decoder1d_forward.17} parent=47 // pred_check
          %p413 = pneg %p181
        $region50: #{decoder1d_forward.17} parent=47 // pred_check_branch
          %415 = sbr.rel (%p413) target = $region52
        $region51: #{decoder1d_forward.17} parent=47 // pred_region
          %s416 = sand.u32 %s166, 1
          %s417 = scalar_lea.sflag [#allocation3], %s416
          %s418 = sand.u32 %s166, 1
          %s419 = smul.addr %s418, 2
          %s420 = scalar_lea.vmem [#allocation2], %s419
          %421 = dma.done %s417, 32
        $region52: #{decoder1d_forward.17} parent=47 // pred_fallthru
          _
      $region48: #{decoder1d_forward.17} parent=5 // pred_fallthru
        _
    $region6: #{decoder1d_forward.17} parent=1 // loop_footer
      %s18 = sadd.s32 1, %s14
    $region7: #{decoder1d_forward.17} parent=1 // loop_footer_branch
      %13 = sbr.rel target = $region3
    $region8: #{decoder1d_forward.17} parent=1 // loop_exit
      _
    %422 = vsyncpa [#allocation3], 1
    %s423 = scalar_lea.sflag [#allocation3], 1
    %424 = vsyncpa %s423, 1

// kernel: decoder1d_forward.15
$region0: #{decoder1d_forward.15}
  #allocation0 [shape = 'u32[]', space=smem, size = 0x4, offset = 0x4, fixed_abs, tag = 'smem constant byte address 0x4 - core index']
  #allocation1 [shape = 'u32[144,128]{1,0:T(1,128)}', space=vmem, size = 0x12000, scoped, tag = 'internal scratch']
  %s0 = inlined_call_operand.vmem [shape: bf16[2,4,128], index: 0, kind: input, shape index: {}]
  %s1 = inlined_call_operand.vmem [shape: bf16[2,4,2], index: 1, kind: input, shape index: {}]
  %s2 = inlined_call_operand.vmem [shape: f32[2,4,2], index: 2, kind: input, shape index: {}]
  %s3 = inlined_call_operand.vmem [shape: bf16[4,12], index: 3, kind: input, shape index: {}]
  %s4 = inlined_call_operand.vmem [shape: f32[4,1], index: 4, kind: input, shape index: {}]
  %s5 = inlined_call_operand.vmem [shape: bf16[4,4], index: 5, kind: input, shape index: {}]
  %s6 = inlined_call_operand.vmem [shape: f32[4,1], index: 6, kind: input, shape index: {}]
  %s7 = inlined_call_operand.vmem [shape: bf16[2,4,128], index: 7, kind: output, shape index: {0}]
  %s8 = inlined_call_operand.vmem [shape: bf16[2,4,128], index: 8, kind: output, shape index: {1}]
  %9 = xla_tuple %s7, %s8
  %s10 = sld [smem:[#allocation0]]
  $region69: #{decoder1d_forward.15} parent=0
    _
  %s12 = ssub.s32 1, %s10
  %s13 = scalar_select 0, %s12, %s10
  loop: start=0, step=1, limit=4
  $region2: #{decoder1d_forward.15} parent=0 // loop_pre_header
    _
  $region3: #{decoder1d_forward.15} parent=0 // loop_header
    %s15 = sphi 0, %s19
    %p16 = scmp.ge.s32.totalorder %s15, 4
    %s22 = sphi 0, %s34
    %s23 = sphi 0, %s30
    %s24 = sphi 0, %s22
    %s25 = sphi 0, %s23
    %s26 = sphi 0, %s24
    %s27 = sphi 0, %s25
    %s39 = sphi 0, %s41
    %s42 = sphi 0, %s39
    %s43 = sphi 0, %s42
    %s59 = sphi 0, %s43
    %s67 = sphi 0, %s69
    %s70 = sphi 0, %s67
    %s71 = sphi 0, %s70
    %s87 = sphi 0, %s71
    %s93 = sphi 0, %s95
    %s96 = sphi 0, %s93
    %s97 = sphi 0, %s96
    %s113 = sphi 0, %s97
    %s117 = sphi 0, %s117
    %s119 = sphi 0, %s117
    %s120 = sphi 0, %s119
    %s134 = sphi 0, %s120
    %s138 = sphi 0, %s138
    %s140 = sphi 0, %s138
    %s141 = sphi 0, %s140
    %s155 = sphi 0, %s141
    %s159 = sphi 0, %s159
    %s161 = sphi 0, %s159
    %s162 = sphi 0, %s161
    %s176 = sphi 0, %s162
    %s180 = sphi 0, %s180
    %s182 = sphi 0, %s180
    %s183 = sphi 0, %s182
    %s197 = sphi 0, %s183
    %s205 = sphi 0, %s207
    %s208 = sphi 0, %s205
    %s209 = sphi 0, %s208
    %s225 = sphi 0, %s209
    %s233 = sphi 0, %s235
    %s236 = sphi 0, %s233
    %s237 = sphi 0, %s236
    %s253 = sphi 0, %s237
  $region4: #{decoder1d_forward.15} parent=0 // loop_header_branch
    %18 = sbr.rel (%p16) target = $region8
  $region5: #{decoder1d_forward.15} parent=0 // loop_body
    %s20 = ssub.s32 %s15, 1
    %s21 = ssub.s32 %s15, 2
    %s28 = sadd.s32 1, %s23
    %p29 = scmp.ge.s32.totalorder %s28, 1
    %s30 = scalar_select %p29, 0, %s28
    %s31 = sadd.s32 1, %s22
    %s32 = scalar_select %p29, %s31, %s22
    %p33 = scmp.ge.s32.totalorder %s32, 2
    %s34 = scalar_select %p33, 0, %s32
    %s35 = ssub.s32 %s22, %s34
    %s36 = ssub.s32 %s23, %s30
    %s37 = sor.u32 %s35, %s36
    %p38 = scmp.eq.s32.totalorder %s37, 0
    %s40 = sadd.s32 %s39, 1
    %s41 = scalar_select %p38, %s39, %s40
    %p44 = pneg %p38
    %p45 = scmp.eq.s32.totalorder %s15, 1
    %p46 = por %p44, %p45
    %p47 = scmp.ne.s32.totalorder %s39, %s42
    %p48 = scmp.eq.s32.totalorder %s15, 0
    %p49 = por %p47, %p48
    %p50 = scmp.ne.s32.totalorder %s39, %s42
    %p51 = scmp.eq.s32.totalorder %s20, 1
    %p52 = por %p50, %p51
    %p53 = scmp.ne.s32.totalorder %s42, %s43
    %p54 = scmp.eq.s32.totalorder %s20, 0
    %p55 = por %p53, %p54
    %p56 = scmp.ne.s32.totalorder %s42, %s43
    %p57 = scmp.eq.s32.totalorder %s21, 1
    %p58 = por %p56, %p57
    %p60 = scmp.ne.s32.totalorder %s43, %s59
    %p61 = scmp.eq.s32.totalorder %s21, 0
    %p62 = por %p60, %p61
    %s63 = sadd.s32 %s22, %s23
    %s64 = sadd.s32 %s34, %s30
    %s65 = ssub.s32 %s63, %s64
    %p66 = scmp.eq.s32.totalorder %s65, 0
    %s68 = sadd.s32 %s67, 1
    %s69 = scalar_select %p66, %s67, %s68
    %p72 = pneg %p66
    %p73 = scmp.eq.s32.totalorder %s15, 1
    %p74 = por %p72, %p73
    %p75 = scmp.ne.s32.totalorder %s67, %s70
    %p76 = scmp.eq.s32.totalorder %s15, 0
    %p77 = por %p75, %p76
    %p78 = scmp.ne.s32.totalorder %s67, %s70
    %p79 = scmp.eq.s32.totalorder %s20, 1
    %p80 = por %p78, %p79
    %p81 = scmp.ne.s32.totalorder %s70, %s71
    %p82 = scmp.eq.s32.totalorder %s20, 0
    %p83 = por %p81, %p82
    %p84 = scmp.ne.s32.totalorder %s70, %s71
    %p85 = scmp.eq.s32.totalorder %s21, 1
    %p86 = por %p84, %p85
    %p88 = scmp.ne.s32.totalorder %s71, %s87
    %p89 = scmp.eq.s32.totalorder %s21, 0
    %p90 = por %p88, %p89
    %s91 = ssub.s32 %s22, %s34
    %p92 = scmp.eq.s32.totalorder %s91, 0
    %s94 = sadd.s32 %s93, 1
    %s95 = scalar_select %p92, %s93, %s94
    %p98 = pneg %p92
    %p99 = scmp.eq.s32.totalorder %s15, 1
    %p100 = por %p98, %p99
    %p101 = scmp.ne.s32.totalorder %s93, %s96
    %p102 = scmp.eq.s32.totalorder %s15, 0
    %p103 = por %p101, %p102
    %p104 = scmp.ne.s32.totalorder %s93, %s96
    %p105 = scmp.eq.s32.totalorder %s20, 1
    %p106 = por %p104, %p105
    %p107 = scmp.ne.s32.totalorder %s96, %s97
    %p108 = scmp.eq.s32.totalorder %s20, 0
    %p109 = por %p107, %p108
    %p110 = scmp.ne.s32.totalorder %s96, %s97
    %p111 = scmp.eq.s32.totalorder %s21, 1
    %p112 = por %p110, %p111
    %p114 = scmp.ne.s32.totalorder %s97, %s113
    %p115 = scmp.eq.s32.totalorder %s21, 0
    %p116 = por %p114, %p115
    %s118 = sadd.s32 %s117, 1
    %p121 = scmp.eq.s32.totalorder %s15, 1
    %p122 = scmp.ne.s32.totalorder %s117, %s119
    %p123 = scmp.eq.s32.totalorder %s15, 0
    %p124 = por %p122, %p123
    %p125 = scmp.ne.s32.totalorder %s117, %s119
    %p126 = scmp.eq.s32.totalorder %s20, 1
    %p127 = por %p125, %p126
    %p128 = scmp.ne.s32.totalorder %s119, %s120
    %p129 = scmp.eq.s32.totalorder %s20, 0
    %p130 = por %p128, %p129
    %p131 = scmp.ne.s32.totalorder %s119, %s120
    %p132 = scmp.eq.s32.totalorder %s21, 1
    %p133 = por %p131, %p132
    %p135 = scmp.ne.s32.totalorder %s120, %s134
    %p136 = scmp.eq.s32.totalorder %s21, 0
    %p137 = por %p135, %p136
    %s139 = sadd.s32 %s138, 1
    %p142 = scmp.eq.s32.totalorder %s15, 1
    %p143 = scmp.ne.s32.totalorder %s138, %s140
    %p144 = scmp.eq.s32.totalorder %s15, 0
    %p145 = por %p143, %p144
    %p146 = scmp.ne.s32.totalorder %s138, %s140
    %p147 = scmp.eq.s32.totalorder %s20, 1
    %p148 = por %p146, %p147
    %p149 = scmp.ne.s32.totalorder %s140, %s141
    %p150 = scmp.eq.s32.totalorder %s20, 0
    %p151 = por %p149, %p150
    %p152 = scmp.ne.s32.totalorder %s140, %s141
    %p153 = scmp.eq.s32.totalorder %s21, 1
    %p154 = por %p152, %p153
    %p156 = scmp.ne.s32.totalorder %s141, %s155
    %p157 = scmp.eq.s32.totalorder %s21, 0
    %p158 = por %p156, %p157
    %s160 = sadd.s32 %s159, 1
    %p163 = scmp.eq.s32.totalorder %s15, 1
    %p164 = scmp.ne.s32.totalorder %s159, %s161
    %p165 = scmp.eq.s32.totalorder %s15, 0
    %p166 = por %p164, %p165
    %p167 = scmp.ne.s32.totalorder %s159, %s161
    %p168 = scmp.eq.s32.totalorder %s20, 1
    %p169 = por %p167, %p168
    %p170 = scmp.ne.s32.totalorder %s161, %s162
    %p171 = scmp.eq.s32.totalorder %s20, 0
    %p172 = por %p170, %p171
    %p173 = scmp.ne.s32.totalorder %s161, %s162
    %p174 = scmp.eq.s32.totalorder %s21, 1
    %p175 = por %p173, %p174
    %p177 = scmp.ne.s32.totalorder %s162, %s176
    %p178 = scmp.eq.s32.totalorder %s21, 0
    %p179 = por %p177, %p178
    %s181 = sadd.s32 %s180, 1
    %p184 = scmp.eq.s32.totalorder %s15, 1
    %p185 = scmp.ne.s32.totalorder %s180, %s182
    %p186 = scmp.eq.s32.totalorder %s15, 0
    %p187 = por %p185, %p186
    %p188 = scmp.ne.s32.totalorder %s180, %s182
    %p189 = scmp.eq.s32.totalorder %s20, 1
    %p190 = por %p188, %p189
    %p191 = scmp.ne.s32.totalorder %s182, %s183
    %p192 = scmp.eq.s32.totalorder %s20, 0
    %p193 = por %p191, %p192
    %p194 = scmp.ne.s32.totalorder %s182, %s183
    %p195 = scmp.eq.s32.totalorder %s21, 1
    %p196 = por %p194, %p195
    %p198 = scmp.ne.s32.totalorder %s183, %s197
    %p199 = scmp.eq.s32.totalorder %s21, 0
    %p200 = por %p198, %p199
    %s201 = ssub.s32 %s22, %s34
    %s202 = ssub.s32 %s23, %s30
    %s203 = sor.u32 %s201, %s202
    %p204 = scmp.eq.s32.totalorder %s203, 0
    %s206 = sadd.s32 %s205, 1
    %s207 = scalar_select %p204, %s205, %s206
    %p210 = pneg %p204
    %p211 = scmp.eq.s32.totalorder %s15, 1
    %p212 = por %p210, %p211
    %p213 = scmp.ne.s32.totalorder %s205, %s208
    %p214 = scmp.eq.s32.totalorder %s15, 0
    %p215 = por %p213, %p214
    %p216 = scmp.ne.s32.totalorder %s205, %s208
    %p217 = scmp.eq.s32.totalorder %s20, 1
    %p218 = por %p216, %p217
    %p219 = scmp.ne.s32.totalorder %s208, %s209
    %p220 = scmp.eq.s32.totalorder %s20, 0
    %p221 = por %p219, %p220
    %p222 = scmp.ne.s32.totalorder %s208, %s209
    %p223 = scmp.eq.s32.totalorder %s21, 1
    %p224 = por %p222, %p223
    %p226 = scmp.ne.s32.totalorder %s209, %s225
    %p227 = scmp.eq.s32.totalorder %s21, 0
    %p228 = por %p226, %p227
    %s229 = ssub.s32 %s22, %s34
    %s230 = ssub.s32 %s23, %s30
    %s231 = sor.u32 %s229, %s230
    %p232 = scmp.eq.s32.totalorder %s231, 0
    %s234 = sadd.s32 %s233, 1
    %s235 = scalar_select %p232, %s233, %s234
    %p238 = pneg %p232
    %p239 = scmp.eq.s32.totalorder %s15, 1
    %p240 = por %p238, %p239
    %p241 = scmp.ne.s32.totalorder %s233, %s236
    %p242 = scmp.eq.s32.totalorder %s15, 0
    %p243 = por %p241, %p242
    %p244 = scmp.ne.s32.totalorder %s233, %s236
    %p245 = scmp.eq.s32.totalorder %s20, 1
    %p246 = por %p244, %p245
    %p247 = scmp.ne.s32.totalorder %s236, %s237
    %p248 = scmp.eq.s32.totalorder %s20, 0
    %p249 = por %p247, %p248
    %p250 = scmp.ne.s32.totalorder %s236, %s237
    %p251 = scmp.eq.s32.totalorder %s21, 1
    %p252 = por %p250, %p251
    %p254 = scmp.ne.s32.totalorder %s237, %s253
    %p255 = scmp.eq.s32.totalorder %s21, 0
    %p256 = por %p254, %p255
    %p257 = scmp.le.s32.totalorder 1, %s15
    %p258 = scmp.lt.s32.totalorder %s15, 3
    %p259 = pnand %p257, %p258
    %p260 = pneg %p259
    // Predicated region
    $region9: #{decoder1d_forward.15} parent=5 // pred_check
      _
    $region10: #{decoder1d_forward.15} parent=5 // pred_check_branch
      %262 = sbr.rel (%p259) target = $region12
    $region11: #{decoder1d_forward.15} parent=5 // pred_region
      %s263 = ssub.s32 %s15, 1
      // Predicated region
      $region13: #{decoder1d_forward.15} parent=11 // pred_check
        %p264 = pneg %p130
      $region14: #{decoder1d_forward.15} parent=11 // pred_check_branch
        %266 = sbr.rel (%p264) target = $region16
      $region15: #{decoder1d_forward.15} parent=11 // pred_region
        _
      $region16: #{decoder1d_forward.15} parent=11 // pred_fallthru
        _
      // Predicated region
      $region17: #{decoder1d_forward.15} parent=11 // pred_check
        %p267 = pneg %p151
      $region18: #{decoder1d_forward.15} parent=11 // pred_check_branch
        %269 = sbr.rel (%p267) target = $region20
      $region19: #{decoder1d_forward.15} parent=11 // pred_region
        _
      $region20: #{decoder1d_forward.15} parent=11 // pred_fallthru
        _
      // Predicated region
      $region21: #{decoder1d_forward.15} parent=11 // pred_check
        %p270 = pneg %p172
      $region22: #{decoder1d_forward.15} parent=11 // pred_check_branch
        %272 = sbr.rel (%p270) target = $region24
      $region23: #{decoder1d_forward.15} parent=11 // pred_region
        _
      $region24: #{decoder1d_forward.15} parent=11 // pred_fallthru
        _
      // Predicated region
      $region25: #{decoder1d_forward.15} parent=11 // pred_check
        %p273 = pneg %p193
      $region26: #{decoder1d_forward.15} parent=11 // pred_check_branch
        %275 = sbr.rel (%p273) target = $region28
      $region27: #{decoder1d_forward.15} parent=11 // pred_region
        _
      $region28: #{decoder1d_forward.15} parent=11 // pred_fallthru
        _
    $region12: #{decoder1d_forward.15} parent=5 // pred_fallthru
      _
    %p276 = scmp.lt.s32.totalorder %s15, 2
    // Predicated region
    $region29: #{decoder1d_forward.15} parent=5 // pred_check
      %p277 = pneg %p276
    $region30: #{decoder1d_forward.15} parent=5 // pred_check_branch
      %279 = sbr.rel (%p277) target = $region32
    $region31: #{decoder1d_forward.15} parent=5 // pred_region
      // Predicated region
      $region33: #{decoder1d_forward.15} parent=31 // pred_check
        %p280 = pneg %p49
      $region34: #{decoder1d_forward.15} parent=31 // pred_check_branch
        %282 = sbr.rel (%p280) target = $region36
      $region35: #{decoder1d_forward.15} parent=31 // pred_region
        %p283 = scmp.lt.s32.totalorder %s22, 1
        %s284 = scalar_select %p283, %s22, 1
        %p285 = scmp.lt.s32.totalorder %s23, 0
        %s286 = scalar_select %p285, %s23, 0
        %s287 = sadd.s32 %s286, %s284
        %s288 = smul.addr %s287, 2
        %s289 = scalar_lea.vmem %s0, %s288
      $region36: #{decoder1d_forward.15} parent=31 // pred_fallthru
        _
      // Predicated region
      $region37: #{decoder1d_forward.15} parent=31 // pred_check
        %p290 = pneg %p77
      $region38: #{decoder1d_forward.15} parent=31 // pred_check_branch
        %292 = sbr.rel (%p290) target = $region40
      $region39: #{decoder1d_forward.15} parent=31 // pred_region
        %s293 = sadd.s32 %s22, %s23
        %p294 = scmp.lt.s32.totalorder %s293, 1
        %s295 = scalar_select %p294, %s293, 1
        %s296 = smul.addr %s295, 2
        %s297 = scalar_lea.vmem %s1, %s296
        %s298 = sadd.s32 %s22, %s23
      $region40: #{decoder1d_forward.15} parent=31 // pred_fallthru
        _
      // Predicated region
      $region41: #{decoder1d_forward.15} parent=31 // pred_check
        %p299 = pneg %p103
      $region42: #{decoder1d_forward.15} parent=31 // pred_check_branch
        %301 = sbr.rel (%p299) target = $region44
      $region43: #{decoder1d_forward.15} parent=31 // pred_region
        %p302 = scmp.lt.s32.totalorder %s22, 1
        %s303 = scalar_select %p302, %s22, 1
        %s304 = smul.addr %s303, 4
        %s305 = scalar_lea.vmem %s2, %s304
      $region44: #{decoder1d_forward.15} parent=31 // pred_fallthru
        _
    $region32: #{decoder1d_forward.15} parent=5 // pred_fallthru
      _
    %p306 = scmp.le.s32.totalorder 1, %s15
    %p307 = scmp.lt.s32.totalorder %s15, 3
    %p308 = pnand %p306, %p307
    %p309 = pneg %p308
    // Predicated region
    $region45: #{decoder1d_forward.15} parent=5 // pred_check
      _
    $region46: #{decoder1d_forward.15} parent=5 // pred_check_branch
      %311 = sbr.rel (%p308) target = $region48
    $region47: #{decoder1d_forward.15} parent=5 // pred_region
      %s312 = ssub.s32 %s15, 1
      %p313 = scmp.lt.s32.totalorder %s24, 1
      %s314 = scalar_select %p313, %s24, 1
      %p315 = scmp.lt.s32.totalorder %s25, 0
      %s316 = scalar_select %p315, %s25, 0
      %s317 = sadd.s32 %s316, %s314
      %s318 = smul.addr %s317, 2
      %s319 = scalar_lea.vmem %s0, %s318
      %p320 = pneg %p55
      %p321 = pneg %p52
      %s322 = sadd.s32 %s24, %s25
      %p323 = scmp.lt.s32.totalorder %s322, 1
      %s324 = scalar_select %p323, %s322, 1
      %s325 = smul.addr %s324, 2
      %s326 = scalar_lea.vmem %s1, %s325
      %p327 = pneg %p83
      %p328 = pneg %p80
      %p329 = scmp.lt.s32.totalorder %s24, 1
      %s330 = scalar_select %p329, %s24, 1
      %s331 = smul.addr %s330, 4
      %s332 = scalar_lea.vmem %s2, %s331
      %p333 = pneg %p109
      %p334 = pneg %p106
      %p335 = pneg %p130
      %p336 = pneg %p127
      %p337 = pneg %p151
      %p338 = pneg %p148
      %p339 = pneg %p172
      %p340 = pneg %p169
      %p341 = pneg %p193
      %p342 = pneg %p190
      %p343 = pneg %p221
      %p344 = pneg %p218
      %p345 = scmp.lt.s32.totalorder %s24, 1
      %s346 = scalar_select %p345, %s24, 1
      %p347 = scmp.lt.s32.totalorder %s25, 0
      %s348 = scalar_select %p347, %s25, 0
      %s349 = sadd.s32 %s348, %s346
      %s350 = smul.addr %s349, 2
      %s351 = scalar_lea.vmem %s7, %s350
      %p352 = pneg %p249
      %p353 = pneg %p246
      %p354 = scmp.lt.s32.totalorder %s24, 1
      %s355 = scalar_select %p354, %s24, 1
      %p356 = scmp.lt.s32.totalorder %s25, 0
      %s357 = scalar_select %p356, %s25, 0
      %s358 = sadd.s32 %s357, %s355
      %s359 = smul.addr %s358, 2
      %s360 = scalar_lea.vmem %s8, %s359
      %p361 = scmp.lt.s32.totalorder %s24, 1
      %s362 = scalar_select %p361, %s24, 1
      %p363 = scmp.lt.s32.totalorder %s25, 0
      %s364 = scalar_select %p363, %s25, 0
      %s365 = sadd.s32 %s364, %s362
      %s366 = smul.addr %s365, 2
      %s367 = scalar_lea.vmem %s0, %s366
      %s368 = sadd.s32 %s24, %s25
      %p369 = scmp.lt.s32.totalorder %s368, 1
      %s370 = scalar_select %p369, %s368, 1
      %s371 = smul.addr %s370, 2
      %s372 = scalar_lea.vmem %s1, %s371
      %s373 = sadd.s32 %s24, %s25
      %p374 = scmp.lt.s32.totalorder %s24, 1
      %s375 = scalar_select %p374, %s24, 1
      %s376 = smul.addr %s375, 4
      %s377 = scalar_lea.vmem %s2, %s376
      %p378 = scmp.lt.s32.totalorder %s24, 1
      %s379 = scalar_select %p378, %s24, 1
      %p380 = scmp.lt.s32.totalorder %s25, 0
      %s381 = scalar_select %p380, %s25, 0
      %s382 = sadd.s32 %s381, %s379
      %s383 = smul.addr %s382, 2
      %s384 = scalar_lea.vmem %s7, %s383
      %p385 = scmp.lt.s32.totalorder %s24, 1
      %s386 = scalar_select %p385, %s24, 1
      %p387 = scmp.lt.s32.totalorder %s25, 0
      %s388 = scalar_select %p387, %s25, 0
      %s389 = sadd.s32 %s388, %s386
      %s390 = smul.addr %s389, 2
      %s391 = scalar_lea.vmem %s8, %s390
      %v393 = vld [vmem:[%s367] sm:$0x3]
      %v394 = vld [vmem:[%s372] sm:$0x3]
      %v395 = vunpack.c.l.bf16 %v393
      %v396 = vunpack.c.l.bf16 %v394
      %v397 = vld [vmem:[%s377] sm:$0xf]
      %399 = vset.pattern.permute.xlu0 0
      %400 = vperm.xlu0 %399, %v397
      %v401 = vpop.permute.xlu0 %400
      %v403 = vsub.f32 %v395, %v401
      %404 = vset.pattern.permute.xlu0 1
      %405 = vperm.xlu0 %404, %v397
      %v406 = vpop.permute.xlu0 %405
      %v408 = vmul.f32 %v403, %v406
      %v409 = vsub.f32 %v396, %v401
      %v410 = vmul.f32 %v409, %v406
      %v411 = vxor.u32 %v408, 2147483648
      %v412 = vmul.f32 %v411, 1.442695
      %v413 = vpow.pop %v412
      %v414 = vadd.f32 %v413, 1.0
      %v415 = vrcp.pop %v414
      %v416 = vmul.f32 1.0, %v415
      %v417 = vmul.f32 %v408, %v416
      %v418 = vxor.u32 %v410, 2147483648
      %v419 = vmul.f32 %v418, 1.442695
      %v420 = vpow.pop %v419
      %v421 = vadd.f32 %v420, 1.0
      %v422 = vrcp.pop %v421
      %v423 = vmul.f32 1.0, %v422
      %v424 = vmul.f32 %v410, %v423
      %v425 = vpack.c.bf16 %v417, %v417
      %v426 = vpack.c.bf16 %v424, %v424
      %428 = vrot.lane.b32.xlu0 %v425, 1
      %v429 = vpop.permute.xlu0 %428
      %vm430 = vcmask 7168
      %v433 = vsel %vm430, %v426, %v429
      %434 = vrot.lane.b32.xlu0 %v425, 127
      %v435 = vpop.permute.xlu0 %434
      %437 = vrot.lane.b32.xlu0 %v426, 126
      %v438 = vpop.permute.xlu0 %437
      %vm439 = vcmask 1039360
      %v442 = vsel %vm439, %v435, %v438
      %v443 = vrot.slane %v425, 6
      %v445 = vrot.slane %v442, 4
      %vm446 = vcmask 1041408
      %v448 = vsel %vm446, %v433, %v443
      %vm449 = vcmask 1043456
      %v451 = vsel %vm449, %v448, %v445
      %v452 = vld [vmem:[%s3] sm:$0x3]
      %v453 = vld [vmem:[%s4] sm:$0xf]
      %455 = vset.pattern.permute.xlu0 0
      %456 = vperm.xlu0 %455, %v453
      %v457 = vpop.permute.xlu0 %456
      %vm459 = vcmask 97280
      %v461 = vsel %vm459, %v452, 0
      %vm463 = vcmask 1045504
      %v464 = vsel %vm463, %v451, 0
      %466 = vmatprep.subr.bf16.mxu0 0
      %467 = vmatpush1.bf16.msra.mxu0 %v464
      %468 = vmatprep.subr.bf16.mxu0 0
      %469 = vmatpush1.bf16.msra.mxu0 0
      %470 = vmatprep.subr.bf16.mxu0 0
      %471 = vmatpush1.bf16.msra.mxu0 0
      %472 = vmatprep.subr.bf16.mxu0 0
      %473 = vmatpush1.bf16.msra.mxu0 0
      %474 = vmatprep.subr.bf16.mxu0 0
      %475 = vmatpush1.bf16.msra.mxu0 0
      %476 = vmatprep.subr.bf16.mxu0 0
      %477 = vmatpush1.bf16.msra.mxu0 0
      %478 = vmatprep.subr.bf16.mxu0 0
      %479 = vmatpush1.bf16.msra.mxu0 0
      %480 = vmatprep.subr.bf16.mxu0 0
      %481 = vmatpush1.bf16.msra.mxu0 0
      %482 = vmatprep.subr.bf16.mxu0 0
      %483 = vmatpush1.bf16.msra.mxu0 0
      %484 = vmatprep.subr.bf16.mxu0 0
      %485 = vmatpush1.bf16.msra.mxu0 0
      %486 = vmatprep.subr.bf16.mxu0 0
      %487 = vmatpush1.bf16.msra.mxu0 0
      %488 = vmatprep.subr.bf16.mxu0 0
      %489 = vmatpush1.bf16.msra.mxu0 0
      %490 = vmatprep.subr.bf16.mxu0 0
      %491 = vmatpush1.bf16.msra.mxu0 0
      %492 = vmatprep.subr.bf16.mxu0 0
      %493 = vmatpush1.bf16.msra.mxu0 0
      %494 = vmatprep.subr.bf16.mxu0 0
      %495 = vmatpush1.bf16.msra.mxu0 0
      %496 = vmatprep.subr.bf16.mxu0 0
      %497 = vmatpush1.bf16.msra.mxu0 0
      %498 = vmatprep.mubr.bf16.mxu0 0
      %499 = vmatmul.mubr.bf16.gmra.mrb[0].mxu0 %v461
      %v500 = vpop.f32.mrb[0].mxu0
      %v501 = vadd.f32 %v457, %v500
      %v502 = vpop.f32.mrb[0].mxu0
      %v503 = vpop.f32.mrb[0].mxu0
      %v504 = vpop.f32.mrb[0].mxu0
      %505 = vdwg.mxu0
      %v506 = vpack.c.bf16 %v501, %v501
      %507 = vst [vmem:[%s384] sm:$0x3] %v506
      %v508 = vld [vmem:[%s5] sm:$0x3]
      %v509 = vld [vmem:[%s6] sm:$0xf]
      %511 = vset.pattern.permute.xlu0 0
      %512 = vperm.xlu0 %511, %v509
      %v513 = vpop.permute.xlu0 %512
      %vm515 = vcmask 31744
      %v517 = vsel %vm515, %v508, 0
      %v520 = vsel %vm446, %v425, 0
      %522 = vmatprep.subr.bf16.mxu0 0
      %523 = vmatpush1.bf16.msra.mxu0 %v520
      %524 = vmatprep.subr.bf16.mxu0 0
      %525 = vmatpush1.bf16.msra.mxu0 0
      %526 = vmatprep.subr.bf16.mxu0 0
      %527 = vmatpush1.bf16.msra.mxu0 0
      %528 = vmatprep.subr.bf16.mxu0 0
      %529 = vmatpush1.bf16.msra.mxu0 0
      %530 = vmatprep.subr.bf16.mxu0 0
      %531 = vmatpush1.bf16.msra.mxu0 0
      %532 = vmatprep.subr.bf16.mxu0 0
      %533 = vmatpush1.bf16.msra.mxu0 0
      %534 = vmatprep.subr.bf16.mxu0 0
      %535 = vmatpush1.bf16.msra.mxu0 0
      %536 = vmatprep.subr.bf16.mxu0 0
      %537 = vmatpush1.bf16.msra.mxu0 0
      %538 = vmatprep.subr.bf16.mxu0 0
      %539 = vmatpush1.bf16.msra.mxu0 0
      %540 = vmatprep.subr.bf16.mxu0 0
      %541 = vmatpush1.bf16.msra.mxu0 0
      %542 = vmatprep.subr.bf16.mxu0 0
      %543 = vmatpush1.bf16.msra.mxu0 0
      %544 = vmatprep.subr.bf16.mxu0 0
      %545 = vmatpush1.bf16.msra.mxu0 0
      %546 = vmatprep.subr.bf16.mxu0 0
      %547 = vmatpush1.bf16.msra.mxu0 0
      %548 = vmatprep.subr.bf16.mxu0 0
      %549 = vmatpush1.bf16.msra.mxu0 0
      %550 = vmatprep.subr.bf16.mxu0 0
      %551 = vmatpush1.bf16.msra.mxu0 0
      %552 = vmatprep.subr.bf16.mxu0 0
      %553 = vmatpush1.bf16.msra.mxu0 0
      %554 = vmatprep.mubr.bf16.mxu0 0
      %555 = vmatmul.mubr.bf16.gmra.mrb[0].mxu0 %v517
      %v556 = vpop.f32.mrb[0].mxu0
      %v557 = vadd.f32 %v513, %v556
      %v558 = vpop.f32.mrb[0].mxu0
      %v559 = vpop.f32.mrb[0].mxu0
      %v560 = vpop.f32.mrb[0].mxu0
      %561 = vdwg.mxu0
      %v562 = vpack.c.bf16 %v557, %v557
      %563 = vst [vmem:[%s391] sm:$0x3] %v562
      %p564 = scmp.lt.s32.totalorder %s24, 1
      %s565 = scalar_select %p564, %s24, 1
      %p566 = scmp.lt.s32.totalorder %s25, 0
      %s567 = scalar_select %p566, %s25, 0
      %s568 = sadd.s32 %s567, %s565
      %s569 = smul.addr %s568, 2
      %s570 = scalar_lea.vmem %s7, %s569
      %p571 = scmp.lt.s32.totalorder %s24, 1
      %s572 = scalar_select %p571, %s24, 1
      %p573 = scmp.lt.s32.totalorder %s25, 0
      %s574 = scalar_select %p573, %s25, 0
      %s575 = sadd.s32 %s574, %s572
      %s576 = smul.addr %s575, 2
      %s577 = scalar_lea.vmem %s8, %s576
      // Predicated region
      $region49: #{decoder1d_forward.15} parent=47 // pred_check
        %p578 = pneg %p218
      $region50: #{decoder1d_forward.15} parent=47 // pred_check_branch
        %580 = sbr.rel (%p578) target = $region52
      $region51: #{decoder1d_forward.15} parent=47 // pred_region
        _
      $region52: #{decoder1d_forward.15} parent=47 // pred_fallthru
        _
      // Predicated region
      $region53: #{decoder1d_forward.15} parent=47 // pred_check
        %p581 = pneg %p246
      $region54: #{decoder1d_forward.15} parent=47 // pred_check_branch
        %583 = sbr.rel (%p581) target = $region56
      $region55: #{decoder1d_forward.15} parent=47 // pred_region
        _
      $region56: #{decoder1d_forward.15} parent=47 // pred_fallthru
        _
    $region48: #{decoder1d_forward.15} parent=5 // pred_fallthru
      _
    %p584 = scmp.le.s32.totalorder 2, %s15
    // Predicated region
    $region57: #{decoder1d_forward.15} parent=5 // pred_check
      %p585 = pneg %p584
    $region58: #{decoder1d_forward.15} parent=5 // pred_check_branch
      %587 = sbr.rel (%p585) target = $region60
    $region59: #{decoder1d_forward.15} parent=5 // pred_region
      %s588 = ssub.s32 %s15, 2
      // Predicated region
      $region61: #{decoder1d_forward.15} parent=59 // pred_check
        %p589 = pneg %p224
      $region62: #{decoder1d_forward.15} parent=59 // pred_check_branch
        %591 = sbr.rel (%p589) target = $region64
      $region63: #{decoder1d_forward.15} parent=59 // pred_region
        %p592 = scmp.lt.s32.totalorder %s26, 1
        %s593 = scalar_select %p592, %s26, 1
        %p594 = scmp.lt.s32.totalorder %s27, 0
        %s595 = scalar_select %p594, %s27, 0
        %s596 = sadd.s32 %s595, %s593
        %s597 = smul.addr %s596, 2
        %s598 = scalar_lea.vmem %s7, %s597
      $region64: #{decoder1d_forward.15} parent=59 // pred_fallthru
        _
      // Predicated region
      $region65: #{decoder1d_forward.15} parent=59 // pred_check
        %p599 = pneg %p252
      $region66: #{decoder1d_forward.15} parent=59 // pred_check_branch
        %601 = sbr.rel (%p599) target = $region68
      $region67: #{decoder1d_forward.15} parent=59 // pred_region
        %p602 = scmp.lt.s32.totalorder %s26, 1
        %s603 = scalar_select %p602, %s26, 1
        %p604 = scmp.lt.s32.totalorder %s27, 0
        %s605 = scalar_select %p604, %s27, 0
        %s606 = sadd.s32 %s605, %s603
        %s607 = smul.addr %s606, 2
        %s608 = scalar_lea.vmem %s8, %s607
      $region68: #{decoder1d_forward.15} parent=59 // pred_fallthru
        _
    $region60: #{decoder1d_forward.15} parent=5 // pred_fallthru
      _
  $region6: #{decoder1d_forward.15} parent=0 // loop_footer
    %s19 = sadd.s32 1, %s15
  $region7: #{decoder1d_forward.15} parent=0 // loop_footer_branch
    %14 = sbr.rel target = $region3
  $region8: #{decoder1d_forward.15} parent=0 // loop_exit
    _

</llo_original>
